<compile_context>
chip_gen: v7x
topology: tpu7x:2x2x1
jax: 0.10.0
libtpu: 0.0.40
codegen_flags: <defaults>
</compile_context>

<pallas_src>
import functools

import jax
import jax.numpy as jnp
from jax.experimental import pallas as pl
from jax.experimental.pallas import tpu as pltpu

IMG_FLAT = 32 * 32   # 1024
HIDDEN = 512
BN_EPS = 1e-5
NEG_SLOPE = 0.2
K_TILE = 256         # w1 streamed in 1024 / 256 = 4 chunks, overlapped w/ MXU


def _leaky_relu(x):
    # max(x, 0.2*x) == LeakyReLU(0.2) for 0 <= slope < 1 (mul + max on VPU).
    return jnp.maximum(x, NEG_SLOPE * x)


def _head_pad(code_size):
    return max(128, pl.cdiv(2 * code_size, 128) * 128)


def encoder_kernel(x_ref, w1_ref, b1_ref, w2_ref, b2_ref,
                   bn_g_ref, bn_b_ref, wh_ref, bh_ref,
                   head_ref, acc_ref, *, code_size):
    k = pl.program_id(0)

    @pl.when(k == 0)
    def _():
        acc_ref[...] = jnp.zeros_like(acc_ref)

    # Linear(1024, 512), K-tiled: bf16 x bf16 -> f32 MXU accumulation, while
    # the next w1 / x chunk is DMA'd in the background by the pipeline.
    acc_ref[...] += jnp.dot(x_ref[...].astype(jnp.bfloat16), w1_ref[...],
                            preferred_element_type=jnp.float32)

    @pl.when(k == pl.num_programs(0) - 1)
    def _():
        h = _leaky_relu(acc_ref[...] + b1_ref[...])                 # [B, 512] f32

        # Linear(512, 512)
        h = jnp.dot(h.astype(jnp.bfloat16), w2_ref[...],
                    preferred_element_type=jnp.float32) + b2_ref[...]

        # BatchNorm1d(512): training-mode semantics -> batch statistics,
        # biased variance, eps=1e-5, affine (gamma, beta). All f32 on the VPU.
        mean = jnp.mean(h, axis=0, keepdims=True)                   # [1, 512]
        hc = h - mean                                               # centered once
        var = jnp.mean(hc * hc, axis=0, keepdims=True)
        h = hc * jax.lax.rsqrt(var + BN_EPS) * bn_g_ref[...] + bn_b_ref[...]
        h = _leaky_relu(h)

        # Fused heads: one lane-dense matmul.  Lanes [0, C) = mu,
        # lanes [C, 2C) = logvar, lanes >= 2C are zero padding.
        head = jnp.dot(h.astype(jnp.bfloat16), wh_ref[...],
                       preferred_element_type=jnp.float32) + bh_ref[...]

        # exp() only on the logvar lanes so the slab already holds (mu|scale).
        lane = jax.lax.broadcasted_iota(jnp.int32, head.shape, dimension=1)
        is_logvar = (lane >= code_size) & (lane < 2 * code_size)
        head_ref[...] = jnp.where(is_logvar, jnp.exp(head), head)   # lane-dense


@functools.partial(jax.jit, static_argnames=("code_size",))
def encoder_forward(img, params, *, code_size):
    """Returns the padded head slab [B, head_pad]:
       lanes [0, C) = mu, lanes [C, 2C) = scale = exp(logvar), rest zero-ish.
       No per-call weight prep, no post-kernel slices."""
    B = img.shape[0]
    x = img.reshape(B, -1)                                          # [B, 1024] f32
    head_pad = _head_pad(code_size)
    k_tiles = IMG_FLAT // K_TILE

    grid_spec = pltpu.PrefetchScalarGridSpec(
        num_scalar_prefetch=0,
        grid=(k_tiles,),
        in_specs=[
            pl.BlockSpec((B, K_TILE), lambda k: (0, k)),            # x streamed
            pl.BlockSpec((K_TILE, HIDDEN), lambda k: (k, 0)),       # w1 streamed
            pl.BlockSpec((1, HIDDEN), lambda k: (0, 0)),            # b1 (once)
            pl.BlockSpec((HIDDEN, HIDDEN), lambda k: (0, 0)),       # w2 (once)
            pl.BlockSpec((1, HIDDEN), lambda k: (0, 0)),            # b2
            pl.BlockSpec((1, HIDDEN), lambda k: (0, 0)),            # bn gamma
            pl.BlockSpec((1, HIDDEN), lambda k: (0, 0)),            # bn beta
            pl.BlockSpec((HIDDEN, head_pad), lambda k: (0, 0)),     # fused head W
            pl.BlockSpec((1, head_pad), lambda k: (0, 0)),          # fused head b
        ],
        out_specs=pl.BlockSpec((B, head_pad), lambda k: (0, 0)),
        scratch_shapes=[pltpu.VMEM((B, HIDDEN), jnp.float32)],      # GEMM-1 acc
    )

    head = pl.pallas_call(
        functools.partial(encoder_kernel, code_size=code_size),
        out_shape=jax.ShapeDtypeStruct((B, head_pad), jnp.float32),
        grid_spec=grid_spec,
        compiler_params=pltpu.CompilerParams(
            dimension_semantics=("arbitrary",),    # K is a reduction axis
            vmem_limit_bytes=16 << 20,             # actual use ~2.5 MiB; v7x-safe
        ),
    )(
        x,
        params["w1"], params["b1"],
        params["w2"], params["b2"],
        params["bn_g"], params["bn_b"],
        params["wh"], params["bh"],
    )
    return head


def split_head(head, code_size):
    # Validation/consumer helper — NOT part of the per-call hot path.
    return head[:, :code_size], head[:, code_size:2 * code_size]


def init_params(key, code_size):
    """One-time param prep: weights in [in, out] layout, big ones bf16, and the
    mu/logvar heads already fused + lane-padded + cast (hoisted out of the
    forward pass per perf review)."""
    ks = jax.random.split(key, 4)
    s = 0.02
    head_pad = _head_pad(code_size)

    wmu = jax.random.normal(ks[2], (HIDDEN, code_size), jnp.float32) * s
    wlv = jax.random.normal(ks[3], (HIDDEN, code_size), jnp.float32) * s
    wh = jnp.concatenate([wmu, wlv], axis=1)
    wh = jnp.pad(wh, ((0, 0), (0, head_pad - 2 * code_size))).astype(jnp.bfloat16)
    bh = jnp.zeros((1, head_pad), jnp.float32)

    params = {
        "w1": (jax.random.normal(ks[0], (IMG_FLAT, HIDDEN), jnp.float32) * s
               ).astype(jnp.bfloat16),
        "b1": jnp.zeros((1, HIDDEN), jnp.float32),
        "w2": (jax.random.normal(ks[1], (HIDDEN, HIDDEN), jnp.float32) * s
               ).astype(jnp.bfloat16),
        "b2": jnp.zeros((1, HIDDEN), jnp.float32),
        "bn_g": jnp.ones((1, HIDDEN), jnp.float32),
        "bn_b": jnp.zeros((1, HIDDEN), jnp.float32),
        "wh": wh,   # fused (mu | logvar | pad) weight, bf16, [512, head_pad]
        "bh": bh,   # fused bias, f32, [1, head_pad]
    }
    return jax.device_put(params)


if __name__ == "__main__":
    key = jax.random.PRNGKey(0)
    k_img, k_par = jax.random.split(key)

    # B=128 fills the 128-wide v5e MXU; weight DMA cost is batch-independent.
    # (On v6e/v7x, B=256 or two parallel 128-groups would fill the chip —
    #  kept at 128 here to preserve whole-batch BatchNorm semantics + small demo.)
    B = 128
    code_size = 16

    img = jax.random.normal(k_img, (B, 1, 32, 32), jnp.float32)   # NCHW
    params = init_params(k_par, code_size)

    head = encoder_forward(img, params, code_size=code_size)
    jax.block_until_ready(head)

    # One-time validation slicing (outside the hot path).
    mu, scale = split_head(head, code_size)
    assert mu.shape == (B, code_size) and scale.shape == (B, code_size)
    assert bool(jnp.all(scale > 0))     # Normal scale must be positive
    assert bool(jnp.all(jnp.isfinite(mu))) and bool(jnp.all(jnp.isfinite(scale)))
    print("KERNEL_OK")
</pallas_src>

<mosaic_0001>
module attributes {stable_mosaic.version = 11 : i64} {
  func.func @encoder_kernel(%arg0: i32, %arg1: memref<128x256xf32, #tpu.memory_space<vmem>>, %arg2: memref<256x512xbf16, #tpu.memory_space<vmem>>, %arg3: memref<1x512xf32, #tpu.memory_space<vmem>>, %arg4: memref<512x512xbf16, #tpu.memory_space<vmem>>, %arg5: memref<1x512xf32, #tpu.memory_space<vmem>>, %arg6: memref<1x512xf32, #tpu.memory_space<vmem>>, %arg7: memref<1x512xf32, #tpu.memory_space<vmem>>, %arg8: memref<512x128xbf16, #tpu.memory_space<vmem>>, %arg9: memref<1x128xf32, #tpu.memory_space<vmem>>, %arg10: memref<128x128xf32, #tpu.memory_space<vmem>>, %arg11: memref<128x512xf32, #tpu.memory_space<vmem>>) attributes {dimension_semantics = [#tpu.dimension_semantics<arbitrary>], iteration_bounds = array<i64: 4>, scalar_prefetch = 0 : i64, scratch_operands = 1 : i64, tpu.core_type = #tpu.core_type<tc>, window_params = [{transform_indices = @transform_0, window_bounds = array<i64: 128, 256>}, {transform_indices = @transform_1, window_bounds = array<i64: 256, 512>}, {pipeline_mode = #tpu.pipeline_mode<synchronous>, transform_indices = @transform_2, window_bounds = array<i64: 1, 512>}, {pipeline_mode = #tpu.pipeline_mode<synchronous>, transform_indices = @transform_3, window_bounds = array<i64: 512, 512>}, {pipeline_mode = #tpu.pipeline_mode<synchronous>, transform_indices = @transform_4, window_bounds = array<i64: 1, 512>}, {pipeline_mode = #tpu.pipeline_mode<synchronous>, transform_indices = @transform_5, window_bounds = array<i64: 1, 512>}, {pipeline_mode = #tpu.pipeline_mode<synchronous>, transform_indices = @transform_6, window_bounds = array<i64: 1, 512>}, {pipeline_mode = #tpu.pipeline_mode<synchronous>, transform_indices = @transform_7, window_bounds = array<i64: 512, 128>}, {pipeline_mode = #tpu.pipeline_mode<synchronous>, transform_indices = @transform_8, window_bounds = array<i64: 1, 128>}, {pipeline_mode = #tpu.pipeline_mode<synchronous>, transform_indices = @transform_9, window_bounds = array<i64: 128, 128>}]} {
    %c0_i32 = arith.constant 0 : i32
    %0 = arith.cmpi eq, %arg0, %c0_i32 : i32
    %1 = arith.extui %0 : i1 to i32
    %c0_i32_0 = arith.constant 0 : i32
    %2 = arith.cmpi ne, %1, %c0_i32_0 : i32
    scf.if %2 {
      %cst_9 = arith.constant 0.000000e+00 : f32
      %13 = vector.broadcast %cst_9 : f32 to vector<128x512xf32>
      %c0_10 = arith.constant 0 : index
      %c0_11 = arith.constant 0 : index
      %14 = vector.load %arg11[%c0_10, %c0_11] : memref<128x512xf32, #tpu.memory_space<vmem>>, vector<128x512xf32>
      tpu.vector_store %arg11[%c0_10, %c0_11], %13 {strides = array<i32>} : memref<128x512xf32, #tpu.memory_space<vmem>>, vector<128x512xf32>,
    } else {
    }
    %c0 = arith.constant 0 : index
    %c0_1 = arith.constant 0 : index
    %3 = vector.load %arg11[%c0, %c0_1] : memref<128x512xf32, #tpu.memory_space<vmem>>, vector<128x512xf32>
    %c0_2 = arith.constant 0 : index
    %c0_3 = arith.constant 0 : index
    %4 = vector.load %arg1[%c0_2, %c0_3] : memref<128x256xf32, #tpu.memory_space<vmem>>, vector<128x256xf32>
    %5 = arith.truncf %4 : vector<128x256xf32> to vector<128x256xbf16>
    %c0_4 = arith.constant 0 : index
    %c0_5 = arith.constant 0 : index
    %6 = vector.load %arg2[%c0_4, %c0_5] : memref<256x512xbf16, #tpu.memory_space<vmem>>, vector<256x512xbf16>
    %cst = arith.constant dense<0.000000e+00> : vector<128x512xf32>
    %7 = tpu.matmul %5, %6, %cst {dimension_numbers = #tpu.dot_dimension_numbers<[1], [0], [0], [1], [0, 0, 1, 1], [], []>} : vector<128x256xbf16>, vector<256x512xbf16>, vector<128x512xf32> -> vector<128x512xf32>
    %8 = arith.addf %3, %7 : vector<128x512xf32>
    %c0_6 = arith.constant 0 : index
    %c0_7 = arith.constant 0 : index
    %9 = vector.load %arg11[%c0_6, %c0_7] : memref<128x512xf32, #tpu.memory_space<vmem>>, vector<128x512xf32>
    tpu.vector_store %arg11[%c0_6, %c0_7], %8 {strides = array<i32>} : memref<128x512xf32, #tpu.memory_space<vmem>>, vector<128x512xf32>,
    %c3_i32 = arith.constant 3 : i32
    %10 = arith.cmpi eq, %arg0, %c3_i32 : i32
    %11 = arith.extui %10 : i1 to i32
    %c0_i32_8 = arith.constant 0 : i32
    %12 = arith.cmpi ne, %11, %c0_i32_8 : i32
    scf.if %12 {
      %c0_9 = arith.constant 0 : index
      %c0_10 = arith.constant 0 : index
      %13 = vector.load %arg11[%c0_9, %c0_10] : memref<128x512xf32, #tpu.memory_space<vmem>>, vector<128x512xf32>
      %c0_11 = arith.constant 0 : index
      %c0_12 = arith.constant 0 : index
      %14 = vector.load %arg3[%c0_11, %c0_12] : memref<1x512xf32, #tpu.memory_space<vmem>>, vector<1x512xf32>
      %15 = vector.broadcast %14 : vector<1x512xf32> to vector<128x512xf32>
      %16 = arith.addf %13, %15 : vector<128x512xf32>
      %cst_13 = arith.constant 2.000000e-01 : f32
      %17 = vector.broadcast %cst_13 : f32 to vector<128x512xf32>
      %18 = arith.mulf %17, %16 : vector<128x512xf32>
      %19 = arith.maximumf %16, %18 : vector<128x512xf32>
      %20 = arith.truncf %19 : vector<128x512xf32> to vector<128x512xbf16>
      %c0_14 = arith.constant 0 : index
      %c0_15 = arith.constant 0 : index
      %21 = vector.load %arg4[%c0_14, %c0_15] : memref<512x512xbf16, #tpu.memory_space<vmem>>, vector<512x512xbf16>
      %cst_16 = arith.constant dense<0.000000e+00> : vector<128x512xf32>
      %22 = tpu.matmul %20, %21, %cst_16 {dimension_numbers = #tpu.dot_dimension_numbers<[1], [0], [0], [1], [0, 0, 1, 1], [], []>} : vector<128x512xbf16>, vector<512x512xbf16>, vector<128x512xf32> -> vector<128x512xf32>
      %c0_17 = arith.constant 0 : index
      %c0_18 = arith.constant 0 : index
      %23 = vector.load %arg5[%c0_17, %c0_18] : memref<1x512xf32, #tpu.memory_space<vmem>>, vector<1x512xf32>
      %24 = vector.broadcast %23 : vector<1x512xf32> to vector<128x512xf32>
      %25 = arith.addf %22, %24 : vector<128x512xf32>
      %cst_19 = arith.constant dense<0.000000e+00> : vector<512xf32>
      %26 = vector.multi_reduction <add>, %25, %cst_19 [0] : vector<128x512xf32> to vector<512xf32>
      %27 = vector.shape_cast %26 : vector<512xf32> to vector<1x512xf32>
      %cst_20 = arith.constant 1.280000e+02 : f32
      %28 = vector.broadcast %cst_20 : f32 to vector<1x512xf32>
      %29 = arith.divf %27, %28 : vector<1x512xf32>
      %30 = vector.broadcast %29 : vector<1x512xf32> to vector<128x512xf32>
      %31 = arith.subf %25, %30 : vector<128x512xf32>
      %32 = arith.mulf %31, %31 : vector<128x512xf32>
      %cst_21 = arith.constant dense<0.000000e+00> : vector<512xf32>
      %33 = vector.multi_reduction <add>, %32, %cst_21 [0] : vector<128x512xf32> to vector<512xf32>
      %34 = vector.shape_cast %33 : vector<512xf32> to vector<1x512xf32>
      %cst_22 = arith.constant 1.280000e+02 : f32
      %35 = vector.broadcast %cst_22 : f32 to vector<1x512xf32>
      %36 = arith.divf %34, %35 : vector<1x512xf32>
      %cst_23 = arith.constant 9.99999974E-6 : f32
      %37 = vector.broadcast %cst_23 : f32 to vector<1x512xf32>
      %38 = arith.addf %36, %37 : vector<1x512xf32>
      %39 = math.rsqrt %38 : vector<1x512xf32>
      %40 = vector.broadcast %39 : vector<1x512xf32> to vector<128x512xf32>
      %41 = arith.mulf %31, %40 : vector<128x512xf32>
      %c0_24 = arith.constant 0 : index
      %c0_25 = arith.constant 0 : index
      %42 = vector.load %arg6[%c0_24, %c0_25] : memref<1x512xf32, #tpu.memory_space<vmem>>, vector<1x512xf32>
      %43 = vector.broadcast %42 : vector<1x512xf32> to vector<128x512xf32>
      %44 = arith.mulf %41, %43 : vector<128x512xf32>
      %c0_26 = arith.constant 0 : index
      %c0_27 = arith.constant 0 : index
      %45 = vector.load %arg7[%c0_26, %c0_27] : memref<1x512xf32, #tpu.memory_space<vmem>>, vector<1x512xf32>
      %46 = vector.broadcast %45 : vector<1x512xf32> to vector<128x512xf32>
      %47 = arith.addf %44, %46 : vector<128x512xf32>
      %cst_28 = arith.constant 2.000000e-01 : f32
      %48 = vector.broadcast %cst_28 : f32 to vector<128x512xf32>
      %49 = arith.mulf %48, %47 : vector<128x512xf32>
      %50 = arith.maximumf %47, %49 : vector<128x512xf32>
      %51 = arith.truncf %50 : vector<128x512xf32> to vector<128x512xbf16>
      %c0_29 = arith.constant 0 : index
      %c0_30 = arith.constant 0 : index
      %52 = vector.load %arg8[%c0_29, %c0_30] : memref<512x128xbf16, #tpu.memory_space<vmem>>, vector<512x128xbf16>
      %cst_31 = arith.constant dense<0.000000e+00> : vector<128x128xf32>
      %53 = tpu.matmul %51, %52, %cst_31 {dimension_numbers = #tpu.dot_dimension_numbers<[1], [0], [0], [1], [0, 0, 1, 1], [], []>} : vector<128x512xbf16>, vector<512x128xbf16>, vector<128x128xf32> -> vector<128x128xf32>
      %c0_32 = arith.constant 0 : index
      %c0_33 = arith.constant 0 : index
      %54 = vector.load %arg9[%c0_32, %c0_33] : memref<1x128xf32, #tpu.memory_space<vmem>>, vector<1x128xf32>
      %55 = vector.broadcast %54 : vector<1x128xf32> to vector<128x128xf32>
      %56 = arith.addf %53, %55 : vector<128x128xf32>
      %57 = tpu.iota {dimensions = array<i32: 1>} : vector<128x128xi32>
      %c16_i32 = arith.constant 16 : i32
      %58 = vector.broadcast %c16_i32 : i32 to vector<128x128xi32>
      %59 = arith.cmpi sge, %57, %58 : vector<128x128xi32>
      %c32_i32 = arith.constant 32 : i32
      %60 = vector.broadcast %c32_i32 : i32 to vector<128x128xi32>
      %61 = arith.cmpi slt, %57, %60 : vector<128x128xi32>
      %62 = arith.andi %59, %61 : vector<128x128xi1>
      %63 = math.exp %56 : vector<128x128xf32>
      %64 = arith.select %62, %63, %56 : vector<128x128xi1>, vector<128x128xf32>
      %c0_34 = arith.constant 0 : index
      %c0_35 = arith.constant 0 : index
      %65 = vector.load %arg10[%c0_34, %c0_35] : memref<128x128xf32, #tpu.memory_space<vmem>>, vector<128x128xf32>
      tpu.vector_store %arg10[%c0_34, %c0_35], %64 {strides = array<i32>} : memref<128x128xf32, #tpu.memory_space<vmem>>, vector<128x128xf32>,
    } else {
    }
    return
  }
  func.func @transform_0(%arg0: i32) -> (i32, i32) {
    %c0_i32 = arith.constant 0 : i32
    %c0_i32_0 = arith.constant 0 : i32
    return %c0_i32, %arg0 : i32, i32
  }
  func.func @transform_1(%arg0: i32) -> (i32, i32) {
    %c0_i32 = arith.constant 0 : i32
    %c0_i32_0 = arith.constant 0 : i32
    return %arg0, %c0_i32 : i32, i32
  }
  func.func @transform_2(%arg0: i32) -> (i32, i32) {
    %c0_i32 = arith.constant 0 : i32
    %c0_i32_0 = arith.constant 0 : i32
    %c0_i32_1 = arith.constant 0 : i32
    return %c0_i32, %c0_i32_0 : i32, i32
  }
  func.func @transform_3(%arg0: i32) -> (i32, i32) {
    %c0_i32 = arith.constant 0 : i32
    %c0_i32_0 = arith.constant 0 : i32
    %c0_i32_1 = arith.constant 0 : i32
    return %c0_i32, %c0_i32_0 : i32, i32
  }
  func.func @transform_4(%arg0: i32) -> (i32, i32) {
    %c0_i32 = arith.constant 0 : i32
    %c0_i32_0 = arith.constant 0 : i32
    %c0_i32_1 = arith.constant 0 : i32
    return %c0_i32, %c0_i32_0 : i32, i32
  }
  func.func @transform_5(%arg0: i32) -> (i32, i32) {
    %c0_i32 = arith.constant 0 : i32
    %c0_i32_0 = arith.constant 0 : i32
    %c0_i32_1 = arith.constant 0 : i32
    return %c0_i32, %c0_i32_0 : i32, i32
  }
  func.func @transform_6(%arg0: i32) -> (i32, i32) {
    %c0_i32 = arith.constant 0 : i32
    %c0_i32_0 = arith.constant 0 : i32
    %c0_i32_1 = arith.constant 0 : i32
    return %c0_i32, %c0_i32_0 : i32, i32
  }
  func.func @transform_7(%arg0: i32) -> (i32, i32) {
    %c0_i32 = arith.constant 0 : i32
    %c0_i32_0 = arith.constant 0 : i32
    %c0_i32_1 = arith.constant 0 : i32
    return %c0_i32, %c0_i32_0 : i32, i32
  }
  func.func @transform_8(%arg0: i32) -> (i32, i32) {
    %c0_i32 = arith.constant 0 : i32
    %c0_i32_0 = arith.constant 0 : i32
    %c0_i32_1 = arith.constant 0 : i32
    return %c0_i32, %c0_i32_0 : i32, i32
  }
  func.func @transform_9(%arg0: i32) -> (i32, i32) {
    %c0_i32 = arith.constant 0 : i32
    %c0_i32_0 = arith.constant 0 : i32
    %c0_i32_1 = arith.constant 0 : i32
    return %c0_i32, %c0_i32_0 : i32, i32
  }
}

</mosaic_0001>

<llo_original>
// kernel: encoder_forward.1
$region0: #{encoder_forward.1}
  #allocation0 [shape = 'u32[]', space=smem, size = 0x4, offset = 0x4, fixed_abs, tag = 'smem constant byte address 0x4 - core index']
  #allocation1 [shape = 'u32[144,128]{1,0:T(1,128)}', space=vmem, size = 0x12000, scoped, tag = 'internal scratch']
  #allocation2 [shape = 'f32[128,512]{1,0:T(8,128)}', space=vmem, size = 0x40000, scoped, tag = 'scratch operand']
  %s0 = inlined_call_operand.vmem [shape: f32[128,1024], index: 0, kind: input, shape index: {}]
  %s1 = inlined_call_operand.vmem [shape: bf16[1024,512], index: 1, kind: input, shape index: {}]
  %s2 = inlined_call_operand.vmem [shape: f32[1,512], index: 2, kind: input, shape index: {}]
  %s3 = inlined_call_operand.hbm [shape: bf16[512,512], index: 3, kind: input, shape index: {}]
  %s4 = inlined_call_operand.vmem [shape: f32[1,512], index: 4, kind: input, shape index: {}]
  %s5 = inlined_call_operand.vmem [shape: f32[1,512], index: 5, kind: input, shape index: {}]
  %s6 = inlined_call_operand.vmem [shape: f32[1,512], index: 6, kind: input, shape index: {}]
  %s7 = inlined_call_operand.hbm [shape: bf16[512,128], index: 7, kind: input, shape index: {}]
  %s8 = inlined_call_operand.vmem [shape: f32[1,128], index: 8, kind: input, shape index: {}]
  %s9 = inlined_call_operand.hbm [shape: f32[128,128], index: 9, kind: output, shape index: {}]
  %s10 = sld [smem:[#allocation0]]
  $region108: #{encoder_forward.1} parent=0
    _
  %s12 = ssub.s32 1, %s10
  %s13 = scalar_select 0, %s12, %s10
  $region1: #{encoder_forward.1} parent=0
    #allocation3 [shape = 'u8[262144]{0}', space=vmem, size = 0x40000, scoped, tag = 'input window, operand 0']
    #allocation4 [shape = 'u8[524288]{0}', space=vmem, size = 0x80000, scoped, tag = 'input window, operand 3, single buffered']
    #allocation5 [shape = 's32[2]{0}', space=sflag, size = 0x8, scoped, tag = 'scoped memory for encoder_forward.1']
    #allocation6 [shape = 's32[2]{0}', space=sflag, size = 0x8, scoped, tag = 'scoped memory for encoder_forward.1']
    #allocation7 [shape = 'u8[131072]{0}', space=vmem, size = 0x20000, scoped, tag = 'input window, operand 7, single buffered']
    #allocation8 [shape = 's32[1]{0}', space=sflag, size = 0x4, scoped, tag = 'scoped memory for encoder_forward.1']
    #allocation9 [shape = 'u8[65536]{0}', space=vmem, size = 0x10000, scoped, tag = 'output window, operand 0, single buffered']
    %14 = vsyncpa [#allocation5], 0
    %15 = vsyncpa [#allocation8], 0
    %16 = vsyncpa [#allocation6], 0
    loop: start=0, step=1, limit=6
    $region2: #{encoder_forward.1} parent=1 // loop_pre_header
      _
    $region3: #{encoder_forward.1} parent=1 // loop_header
      %s18 = sphi 0, %s22
      %p19 = scmp.ge.s32.totalorder %s18, 6
      %s28 = sphi 0, %s30
      %s31 = sphi 0, %s28
      %s32 = sphi 0, %s31
      %s48 = sphi 0, %s32
      %s54 = sphi 0, %s56
      %s57 = sphi 0, %s54
      %s58 = sphi 0, %s57
      %s74 = sphi 0, %s58
      %s78 = sphi 0, %s78
      %s80 = sphi 0, %s78
      %s81 = sphi 0, %s80
      %s95 = sphi 0, %s81
      %s99 = sphi 0, %s99
      %s101 = sphi 0, %s99
      %s102 = sphi 0, %s101
      %s116 = sphi 0, %s102
      %s120 = sphi 0, %s120
      %s122 = sphi 0, %s120
      %s123 = sphi 0, %s122
      %s137 = sphi 0, %s123
      %s141 = sphi 0, %s141
      %s143 = sphi 0, %s141
      %s144 = sphi 0, %s143
      %s158 = sphi 0, %s144
      %s162 = sphi 0, %s162
      %s164 = sphi 0, %s162
      %s165 = sphi 0, %s164
      %s179 = sphi 0, %s165
      %s183 = sphi 0, %s183
      %s185 = sphi 0, %s183
      %s186 = sphi 0, %s185
      %s200 = sphi 0, %s186
      %s204 = sphi 0, %s204
      %s206 = sphi 0, %s204
      %s207 = sphi 0, %s206
      %s221 = sphi 0, %s207
      %s225 = sphi 0, %s225
      %s227 = sphi 0, %s225
      %s228 = sphi 0, %s227
      %s242 = sphi 0, %s228
    $region4: #{encoder_forward.1} parent=1 // loop_header_branch
      %21 = sbr.rel (%p19) target = $region8
    $region5: #{encoder_forward.1} parent=1 // loop_body
      %s23 = ssub.s32 %s18, 1
      %s24 = ssub.s32 %s18, 2
      %s25 = sadd.s32 %s18, 1
      %s26 = ssub.s32 %s18, %s25
      %p27 = scmp.eq.s32.totalorder %s26, 0
      %s29 = sadd.s32 %s28, 1
      %s30 = scalar_select %p27, %s28, %s29
      %p33 = pneg %p27
      %p34 = scmp.eq.s32.totalorder %s18, 3
      %p35 = por %p33, %p34
      %p36 = scmp.ne.s32.totalorder %s28, %s31
      %p37 = scmp.eq.s32.totalorder %s18, 0
      %p38 = por %p36, %p37
      %p39 = scmp.ne.s32.totalorder %s28, %s31
      %p40 = scmp.eq.s32.totalorder %s23, 3
      %p41 = por %p39, %p40
      %p42 = scmp.ne.s32.totalorder %s31, %s32
      %p43 = scmp.eq.s32.totalorder %s23, 0
      %p44 = por %p42, %p43
      %p45 = scmp.ne.s32.totalorder %s31, %s32
      %p46 = scmp.eq.s32.totalorder %s24, 3
      %p47 = por %p45, %p46
      %p49 = scmp.ne.s32.totalorder %s32, %s48
      %p50 = scmp.eq.s32.totalorder %s24, 0
      %p51 = por %p49, %p50
      %s52 = ssub.s32 %s18, %s25
      %p53 = scmp.eq.s32.totalorder %s52, 0
      %s55 = sadd.s32 %s54, 1
      %s56 = scalar_select %p53, %s54, %s55
      %p59 = pneg %p53
      %p60 = scmp.eq.s32.totalorder %s18, 3
      %p61 = por %p59, %p60
      %p62 = scmp.ne.s32.totalorder %s54, %s57
      %p63 = scmp.eq.s32.totalorder %s18, 0
      %p64 = por %p62, %p63
      %p65 = scmp.ne.s32.totalorder %s54, %s57
      %p66 = scmp.eq.s32.totalorder %s23, 3
      %p67 = por %p65, %p66
      %p68 = scmp.ne.s32.totalorder %s57, %s58
      %p69 = scmp.eq.s32.totalorder %s23, 0
      %p70 = por %p68, %p69
      %p71 = scmp.ne.s32.totalorder %s57, %s58
      %p72 = scmp.eq.s32.totalorder %s24, 3
      %p73 = por %p71, %p72
      %p75 = scmp.ne.s32.totalorder %s58, %s74
      %p76 = scmp.eq.s32.totalorder %s24, 0
      %p77 = por %p75, %p76
      %s79 = sadd.s32 %s78, 1
      %p82 = scmp.eq.s32.totalorder %s18, 3
      %p83 = scmp.ne.s32.totalorder %s78, %s80
      %p84 = scmp.eq.s32.totalorder %s18, 0
      %p85 = por %p83, %p84
      %p86 = scmp.ne.s32.totalorder %s78, %s80
      %p87 = scmp.eq.s32.totalorder %s23, 3
      %p88 = por %p86, %p87
      %p89 = scmp.ne.s32.totalorder %s80, %s81
      %p90 = scmp.eq.s32.totalorder %s23, 0
      %p91 = por %p89, %p90
      %p92 = scmp.ne.s32.totalorder %s80, %s81
      %p93 = scmp.eq.s32.totalorder %s24, 3
      %p94 = por %p92, %p93
      %p96 = scmp.ne.s32.totalorder %s81, %s95
      %p97 = scmp.eq.s32.totalorder %s24, 0
      %p98 = por %p96, %p97
      %s100 = sadd.s32 %s99, 1
      %p103 = scmp.eq.s32.totalorder %s18, 3
      %p104 = scmp.ne.s32.totalorder %s99, %s101
      %p105 = scmp.eq.s32.totalorder %s18, 0
      %p106 = por %p104, %p105
      %p107 = scmp.ne.s32.totalorder %s99, %s101
      %p108 = scmp.eq.s32.totalorder %s23, 3
      %p109 = por %p107, %p108
      %p110 = scmp.ne.s32.totalorder %s101, %s102
      %p111 = scmp.eq.s32.totalorder %s23, 0
      %p112 = por %p110, %p111
      %p113 = scmp.ne.s32.totalorder %s101, %s102
      %p114 = scmp.eq.s32.totalorder %s24, 3
      %p115 = por %p113, %p114
      %p117 = scmp.ne.s32.totalorder %s102, %s116
      %p118 = scmp.eq.s32.totalorder %s24, 0
      %p119 = por %p117, %p118
      %s121 = sadd.s32 %s120, 1
      %p124 = scmp.eq.s32.totalorder %s18, 3
      %p125 = scmp.ne.s32.totalorder %s120, %s122
      %p126 = scmp.eq.s32.totalorder %s18, 0
      %p127 = por %p125, %p126
      %p128 = scmp.ne.s32.totalorder %s120, %s122
      %p129 = scmp.eq.s32.totalorder %s23, 3
      %p130 = por %p128, %p129
      %p131 = scmp.ne.s32.totalorder %s122, %s123
      %p132 = scmp.eq.s32.totalorder %s23, 0
      %p133 = por %p131, %p132
      %p134 = scmp.ne.s32.totalorder %s122, %s123
      %p135 = scmp.eq.s32.totalorder %s24, 3
      %p136 = por %p134, %p135
      %p138 = scmp.ne.s32.totalorder %s123, %s137
      %p139 = scmp.eq.s32.totalorder %s24, 0
      %p140 = por %p138, %p139
      %s142 = sadd.s32 %s141, 1
      %p145 = scmp.eq.s32.totalorder %s18, 3
      %p146 = scmp.ne.s32.totalorder %s141, %s143
      %p147 = scmp.eq.s32.totalorder %s18, 0
      %p148 = por %p146, %p147
      %p149 = scmp.ne.s32.totalorder %s141, %s143
      %p150 = scmp.eq.s32.totalorder %s23, 3
      %p151 = por %p149, %p150
      %p152 = scmp.ne.s32.totalorder %s143, %s144
      %p153 = scmp.eq.s32.totalorder %s23, 0
      %p154 = por %p152, %p153
      %p155 = scmp.ne.s32.totalorder %s143, %s144
      %p156 = scmp.eq.s32.totalorder %s24, 3
      %p157 = por %p155, %p156
      %p159 = scmp.ne.s32.totalorder %s144, %s158
      %p160 = scmp.eq.s32.totalorder %s24, 0
      %p161 = por %p159, %p160
      %s163 = sadd.s32 %s162, 1
      %p166 = scmp.eq.s32.totalorder %s18, 3
      %p167 = scmp.ne.s32.totalorder %s162, %s164
      %p168 = scmp.eq.s32.totalorder %s18, 0
      %p169 = por %p167, %p168
      %p170 = scmp.ne.s32.totalorder %s162, %s164
      %p171 = scmp.eq.s32.totalorder %s23, 3
      %p172 = por %p170, %p171
      %p173 = scmp.ne.s32.totalorder %s164, %s165
      %p174 = scmp.eq.s32.totalorder %s23, 0
      %p175 = por %p173, %p174
      %p176 = scmp.ne.s32.totalorder %s164, %s165
      %p177 = scmp.eq.s32.totalorder %s24, 3
      %p178 = por %p176, %p177
      %p180 = scmp.ne.s32.totalorder %s165, %s179
      %p181 = scmp.eq.s32.totalorder %s24, 0
      %p182 = por %p180, %p181
      %s184 = sadd.s32 %s183, 1
      %p187 = scmp.eq.s32.totalorder %s18, 3
      %p188 = scmp.ne.s32.totalorder %s183, %s185
      %p189 = scmp.eq.s32.totalorder %s18, 0
      %p190 = por %p188, %p189
      %p191 = scmp.ne.s32.totalorder %s183, %s185
      %p192 = scmp.eq.s32.totalorder %s23, 3
      %p193 = por %p191, %p192
      %p194 = scmp.ne.s32.totalorder %s185, %s186
      %p195 = scmp.eq.s32.totalorder %s23, 0
      %p196 = por %p194, %p195
      %p197 = scmp.ne.s32.totalorder %s185, %s186
      %p198 = scmp.eq.s32.totalorder %s24, 3
      %p199 = por %p197, %p198
      %p201 = scmp.ne.s32.totalorder %s186, %s200
      %p202 = scmp.eq.s32.totalorder %s24, 0
      %p203 = por %p201, %p202
      %s205 = sadd.s32 %s204, 1
      %p208 = scmp.eq.s32.totalorder %s18, 3
      %p209 = scmp.ne.s32.totalorder %s204, %s206
      %p210 = scmp.eq.s32.totalorder %s18, 0
      %p211 = por %p209, %p210
      %p212 = scmp.ne.s32.totalorder %s204, %s206
      %p213 = scmp.eq.s32.totalorder %s23, 3
      %p214 = por %p212, %p213
      %p215 = scmp.ne.s32.totalorder %s206, %s207
      %p216 = scmp.eq.s32.totalorder %s23, 0
      %p217 = por %p215, %p216
      %p218 = scmp.ne.s32.totalorder %s206, %s207
      %p219 = scmp.eq.s32.totalorder %s24, 3
      %p220 = por %p218, %p219
      %p222 = scmp.ne.s32.totalorder %s207, %s221
      %p223 = scmp.eq.s32.totalorder %s24, 0
      %p224 = por %p222, %p223
      %s226 = sadd.s32 %s225, 1
      %p229 = scmp.eq.s32.totalorder %s18, 3
      %p230 = scmp.ne.s32.totalorder %s225, %s227
      %p231 = scmp.eq.s32.totalorder %s18, 0
      %p232 = por %p230, %p231
      %p233 = scmp.ne.s32.totalorder %s225, %s227
      %p234 = scmp.eq.s32.totalorder %s23, 3
      %p235 = por %p233, %p234
      %p236 = scmp.ne.s32.totalorder %s227, %s228
      %p237 = scmp.eq.s32.totalorder %s23, 0
      %p238 = por %p236, %p237
      %p239 = scmp.ne.s32.totalorder %s227, %s228
      %p240 = scmp.eq.s32.totalorder %s24, 3
      %p241 = por %p239, %p240
      %p243 = scmp.ne.s32.totalorder %s228, %s242
      %p244 = scmp.eq.s32.totalorder %s24, 0
      %p245 = por %p243, %p244
      %p246 = scmp.le.s32.totalorder 1, %s18
      %p247 = scmp.lt.s32.totalorder %s18, 5
      %p248 = pnand %p246, %p247
      %p249 = pneg %p248
      // Predicated region
      $region9: #{encoder_forward.1} parent=5 // pred_check
        _
      $region10: #{encoder_forward.1} parent=5 // pred_check_branch
        %251 = sbr.rel (%p248) target = $region12
      $region11: #{encoder_forward.1} parent=5 // pred_region
        %s252 = ssub.s32 %s18, 1
        // Predicated region
        $region13: #{encoder_forward.1} parent=11 // pred_check
          %p253 = pneg %p91
        $region14: #{encoder_forward.1} parent=11 // pred_check_branch
          %255 = sbr.rel (%p253) target = $region16
        $region15: #{encoder_forward.1} parent=11 // pred_region
          _
        $region16: #{encoder_forward.1} parent=11 // pred_fallthru
          _
        // Predicated region
        $region17: #{encoder_forward.1} parent=11 // pred_check
          %p256 = pneg %p112
        $region18: #{encoder_forward.1} parent=11 // pred_check_branch
          %258 = sbr.rel (%p256) target = $region20
        $region19: #{encoder_forward.1} parent=11 // pred_region
          %s260 = ssub.s32 16384, 16384
          %261 = vsyncadd [#allocation5], %s260
          %s262 = sshll.u32 [#allocation4], 4
          %s263 = int_to_ptr.vmem [resolvable:$true] %s262
          %268 = dma.hbm_to_vmem [thread:$0]  %s3, 16384, %s263, [#allocation5], 256, 256, 16
        $region20: #{encoder_forward.1} parent=11 // pred_fallthru
          _
        // Predicated region
        $region21: #{encoder_forward.1} parent=11 // pred_check
          %p269 = pneg %p133
        $region22: #{encoder_forward.1} parent=11 // pred_check_branch
          %271 = sbr.rel (%p269) target = $region24
        $region23: #{encoder_forward.1} parent=11 // pred_region
          _
        $region24: #{encoder_forward.1} parent=11 // pred_fallthru
          _
        // Predicated region
        $region25: #{encoder_forward.1} parent=11 // pred_check
          %p272 = pneg %p154
        $region26: #{encoder_forward.1} parent=11 // pred_check_branch
          %274 = sbr.rel (%p272) target = $region28
        $region27: #{encoder_forward.1} parent=11 // pred_region
          _
        $region28: #{encoder_forward.1} parent=11 // pred_fallthru
          _
        // Predicated region
        $region29: #{encoder_forward.1} parent=11 // pred_check
          %p275 = pneg %p175
        $region30: #{encoder_forward.1} parent=11 // pred_check_branch
          %277 = sbr.rel (%p275) target = $region32
        $region31: #{encoder_forward.1} parent=11 // pred_region
          _
        $region32: #{encoder_forward.1} parent=11 // pred_fallthru
          _
        // Predicated region
        $region33: #{encoder_forward.1} parent=11 // pred_check
          %p278 = pneg %p196
        $region34: #{encoder_forward.1} parent=11 // pred_check_branch
          %280 = sbr.rel (%p278) target = $region36
        $region35: #{encoder_forward.1} parent=11 // pred_region
          %s282 = ssub.s32 4096, 4096
          %283 = vsyncadd [#allocation8], %s282
          %s284 = sshll.u32 [#allocation7], 4
          %s285 = int_to_ptr.vmem [resolvable:$true] %s284
          %290 = dma.hbm_to_vmem [thread:$0]  %s7, 4096, %s285, [#allocation8], 64, 64, 4
        $region36: #{encoder_forward.1} parent=11 // pred_fallthru
          _
        // Predicated region
        $region37: #{encoder_forward.1} parent=11 // pred_check
          %p291 = pneg %p217
        $region38: #{encoder_forward.1} parent=11 // pred_check_branch
          %293 = sbr.rel (%p291) target = $region40
        $region39: #{encoder_forward.1} parent=11 // pred_region
          _
        $region40: #{encoder_forward.1} parent=11 // pred_fallthru
          _
      $region12: #{encoder_forward.1} parent=5 // pred_fallthru
        _
      %p294 = scmp.lt.s32.totalorder %s18, 4
      // Predicated region
      $region41: #{encoder_forward.1} parent=5 // pred_check
        %p295 = pneg %p294
      $region42: #{encoder_forward.1} parent=5 // pred_check_branch
        %297 = sbr.rel (%p295) target = $region44
      $region43: #{encoder_forward.1} parent=5 // pred_region
        // Predicated region
        $region45: #{encoder_forward.1} parent=43 // pred_check
          %p298 = pneg %p38
        $region46: #{encoder_forward.1} parent=43 // pred_check_branch
          %300 = sbr.rel (%p298) target = $region48
        $region47: #{encoder_forward.1} parent=43 // pred_region
          %s301 = sand.u32 %s28, 1
          %s302 = sand.u32 %s28, 1
          %s303 = smul.addr %s302, 256
          %s304 = scalar_lea.vmem [#allocation3], %s303
          %s305 = smul.u32 2, %s18
          %s306 = smul.addr %s305, 8
          %s307 = scalar_lea.vmem %s0, %s306
          // Predicated region
          $region49: #{encoder_forward.1} parent=47 // pred_check
            _
          $region50: #{encoder_forward.1} parent=47 // pred_check_branch
            %309 = sbr.rel (0) target = $region52
          $region51: #{encoder_forward.1} parent=47 // pred_region
            // Predicated region
            $region53: #{encoder_forward.1} parent=51 // pred_check
              _
            $region54: #{encoder_forward.1} parent=51 // pred_check_branch
              %311 = sbr.rel (0) target = $region56
            $region55: #{encoder_forward.1} parent=51 // pred_region
              loop: start=0, step=1, limit=1
              $region57: #{encoder_forward.1} parent=55 // loop_pre_header
                _
              $region58: #{encoder_forward.1} parent=55 // loop_header
                %s313 = sphi 0, %s317
                %p314 = scmp.ge.s32.totalorder %s313, 1
                %s318 = sphi %s307, %s307
                %s319 = sphi %s304, %s304
              $region59: #{encoder_forward.1} parent=55 // loop_header_branch
                %316 = sbr.rel (%p314) target = $region63
              $region60: #{encoder_forward.1} parent=55 // loop_body
                %v320 = vld [vmem:[%s318] sm:$0xff]
                %321 = vst [vmem:[%s319] sm:$0xff] %v320
                %v322 = vld [vmem:[%s318 + $0x8] sm:$0xff]
                %323 = vst [vmem:[%s319 + $0x8] sm:$0xff] %v322
                %v324 = vld [vmem:[%s318 + $0x40] sm:$0xff]
                %325 = vst [vmem:[%s319 + $0x10] sm:$0xff] %v324
                %v326 = vld [vmem:[%s318 + $0x48] sm:$0xff]
                %327 = vst [vmem:[%s319 + $0x18] sm:$0xff] %v326
                %v328 = vld [vmem:[%s318 + $0x80] sm:$0xff]
                %329 = vst [vmem:[%s319 + $0x20] sm:$0xff] %v328
                %v330 = vld [vmem:[%s318 + $0x88] sm:$0xff]
                %331 = vst [vmem:[%s319 + $0x28] sm:$0xff] %v330
                %v332 = vld [vmem:[%s318 + $0xc0] sm:$0xff]
                %333 = vst [vmem:[%s319 + $0x30] sm:$0xff] %v332
                %v334 = vld [vmem:[%s318 + $0xc8] sm:$0xff]
                %335 = vst [vmem:[%s319 + $0x38] sm:$0xff] %v334
                %v336 = vld [vmem:[%s318 + $0x100] sm:$0xff]
                %337 = vst [vmem:[%s319 + $0x40] sm:$0xff] %v336
                %v338 = vld [vmem:[%s318 + $0x108] sm:$0xff]
                %339 = vst [vmem:[%s319 + $0x48] sm:$0xff] %v338
                %v340 = vld [vmem:[%s318 + $0x140] sm:$0xff]
                %341 = vst [vmem:[%s319 + $0x50] sm:$0xff] %v340
                %v342 = vld [vmem:[%s318 + $0x148] sm:$0xff]
                %343 = vst [vmem:[%s319 + $0x58] sm:$0xff] %v342
                %v344 = vld [vmem:[%s318 + $0x180] sm:$0xff]
                %345 = vst [vmem:[%s319 + $0x60] sm:$0xff] %v344
                %v346 = vld [vmem:[%s318 + $0x188] sm:$0xff]
                %347 = vst [vmem:[%s319 + $0x68] sm:$0xff] %v346
                %v348 = vld [vmem:[%s318 + $0x1c0] sm:$0xff]
                %349 = vst [vmem:[%s319 + $0x70] sm:$0xff] %v348
                %v350 = vld [vmem:[%s318 + $0x1c8] sm:$0xff]
                %351 = vst [vmem:[%s319 + $0x78] sm:$0xff] %v350
                %v352 = vld [vmem:[%s318 + $0x200] sm:$0xff]
                %353 = vst [vmem:[%s319 + $0x80] sm:$0xff] %v352
                %v354 = vld [vmem:[%s318 + $0x208] sm:$0xff]
                %355 = vst [vmem:[%s319 + $0x88] sm:$0xff] %v354
                %v356 = vld [vmem:[%s318 + $0x240] sm:$0xff]
                %357 = vst [vmem:[%s319 + $0x90] sm:$0xff] %v356
                %v358 = vld [vmem:[%s318 + $0x248] sm:$0xff]
                %359 = vst [vmem:[%s319 + $0x98] sm:$0xff] %v358
                %v360 = vld [vmem:[%s318 + $0x280] sm:$0xff]
                %361 = vst [vmem:[%s319 + $0xa0] sm:$0xff] %v360
                %v362 = vld [vmem:[%s318 + $0x288] sm:$0xff]
                %363 = vst [vmem:[%s319 + $0xa8] sm:$0xff] %v362
                %v364 = vld [vmem:[%s318 + $0x2c0] sm:$0xff]
                %365 = vst [vmem:[%s319 + $0xb0] sm:$0xff] %v364
                %v366 = vld [vmem:[%s318 + $0x2c8] sm:$0xff]
                %367 = vst [vmem:[%s319 + $0xb8] sm:$0xff] %v366
                %v368 = vld [vmem:[%s318 + $0x300] sm:$0xff]
                %369 = vst [vmem:[%s319 + $0xc0] sm:$0xff] %v368
                %v370 = vld [vmem:[%s318 + $0x308] sm:$0xff]
                %371 = vst [vmem:[%s319 + $0xc8] sm:$0xff] %v370
                %v372 = vld [vmem:[%s318 + $0x340] sm:$0xff]
                %373 = vst [vmem:[%s319 + $0xd0] sm:$0xff] %v372
                %v374 = vld [vmem:[%s318 + $0x348] sm:$0xff]
                %375 = vst [vmem:[%s319 + $0xd8] sm:$0xff] %v374
                %v376 = vld [vmem:[%s318 + $0x380] sm:$0xff]
                %377 = vst [vmem:[%s319 + $0xe0] sm:$0xff] %v376
                %v378 = vld [vmem:[%s318 + $0x388] sm:$0xff]
                %379 = vst [vmem:[%s319 + $0xe8] sm:$0xff] %v378
                %v380 = vld [vmem:[%s318 + $0x3c0] sm:$0xff]
                %381 = vst [vmem:[%s319 + $0xf0] sm:$0xff] %v380
                %v382 = vld [vmem:[%s318 + $0x3c8] sm:$0xff]
                %383 = vst [vmem:[%s319 + $0xf8] sm:$0xff] %v382
              $region61: #{encoder_forward.1} parent=55 // loop_footer
                %s317 = sadd.s32 1, %s313
              $region62: #{encoder_forward.1} parent=55 // loop_footer_branch
                %312 = sbr.rel target = $region58
              $region63: #{encoder_forward.1} parent=55 // loop_exit
                _
            $region56: #{encoder_forward.1} parent=51 // pred_fallthru
              _
            // Predicated region
            $region64: #{encoder_forward.1} parent=51 // pred_check
              _
            $region65: #{encoder_forward.1} parent=51 // pred_check_branch
              %385 = sbr.rel target = $region67
            $region66: #{encoder_forward.1} parent=51 // pred_region
              _
            $region67: #{encoder_forward.1} parent=51 // pred_fallthru
              _
          $region52: #{encoder_forward.1} parent=47 // pred_fallthru
            _
          %386 = vnop
        $region48: #{encoder_forward.1} parent=43 // pred_fallthru
          _
        // Predicated region
        $region68: #{encoder_forward.1} parent=43 // pred_check
          %p387 = pneg %p64
        $region69: #{encoder_forward.1} parent=43 // pred_check_branch
          %389 = sbr.rel (%p387) target = $region71
        $region70: #{encoder_forward.1} parent=43 // pred_region
          %s390 = smul.u32 32, %s18
          %p391 = scmp.lt.s32.totalorder %s390, 127
          %s392 = scalar_select %p391, %s390, 127
          %s393 = smul.addr %s392, 4
          %s394 = smul.addr %s393, 4
          %s395 = scalar_lea.vmem %s1, %s394
          %s396 = smul.u32 32, %s18
        $region71: #{encoder_forward.1} parent=43 // pred_fallthru
          _
      $region44: #{encoder_forward.1} parent=5 // pred_fallthru
        _
      %p397 = scmp.le.s32.totalorder 1, %s18
      %p398 = scmp.lt.s32.totalorder %s18, 5
      %p399 = pnand %p397, %p398
      %p400 = pneg %p399
      // Predicated region
      $region72: #{encoder_forward.1} parent=5 // pred_check
        _
      $region73: #{encoder_forward.1} parent=5 // pred_check_branch
        %402 = sbr.rel (%p399) target = $region75
      $region74: #{encoder_forward.1} parent=5 // pred_region
        %s403 = ssub.s32 %s18, 1
        %s404 = sand.u32 %s31, 1
        %s405 = sand.u32 %s31, 1
        %s406 = smul.addr %s405, 256
        %s407 = scalar_lea.vmem [#allocation3], %s406
        // Predicated region
        $region76: #{encoder_forward.1} parent=74 // pred_check
          %p408 = pneg %p44
        $region77: #{encoder_forward.1} parent=74 // pred_check_branch
          %410 = sbr.rel (%p408) target = $region79
        $region78: #{encoder_forward.1} parent=74 // pred_region
          _
        $region79: #{encoder_forward.1} parent=74 // pred_fallthru
          _
        // Predicated region
        $region80: #{encoder_forward.1} parent=74 // pred_check
          %p411 = pneg %p112
        $region81: #{encoder_forward.1} parent=74 // pred_check_branch
          %413 = sbr.rel (%p411) target = $region83
        $region82: #{encoder_forward.1} parent=74 // pred_region
          %414 = dma.done [#allocation5], 16384
        $region83: #{encoder_forward.1} parent=74 // pred_fallthru
          _
        // Predicated region
        $region84: #{encoder_forward.1} parent=74 // pred_check
          %p415 = pneg %p196
        $region85: #{encoder_forward.1} parent=74 // pred_check_branch
          %417 = sbr.rel (%p415) target = $region87
        $region86: #{encoder_forward.1} parent=74 // pred_region
          %418 = dma.done [#allocation8], 4096
        $region87: #{encoder_forward.1} parent=74 // pred_fallthru
          _
        %s419 = sand.u32 %s31, 1
        %s420 = sand.u32 %s31, 1
        %s421 = smul.addr %s420, 256
        %s422 = scalar_lea.vmem [#allocation3], %s421
        %p423 = pneg %p44
        %p424 = pneg %p41
        %s425 = smul.u32 32, %s23
        %p426 = scmp.lt.s32.totalorder %s425, 127
        %s427 = scalar_select %p426, %s425, 127
        %s428 = smul.addr %s427, 4
        %s429 = smul.addr %s428, 4
        %s430 = scalar_lea.vmem %s1, %s429
        %p431 = pneg %p70
        %p432 = pneg %p67
        %p433 = pneg %p91
        %p434 = pneg %p88
        %p435 = pneg %p112
        %p436 = pneg %p109
        %p437 = pneg %p133
        %p438 = pneg %p130
        %p439 = pneg %p154
        %p440 = pneg %p151
        %p441 = pneg %p175
        %p442 = pneg %p172
        %p443 = pneg %p196
        %p444 = pneg %p193
        %p445 = pneg %p217
        %p446 = pneg %p214
        %p447 = pneg %p238
        %p448 = pneg %p235
        %s449 = smul.u32 2, %s23
        %s450 = smul.u32 32, %s23
        %p451 = scmp.lt.s32.totalorder %s450, 127
        %s452 = scalar_select %p451, %s450, 127
        %s453 = smul.addr %s452, 4
        %s454 = smul.addr %s453, 4
        %s455 = scalar_lea.vmem %s1, %s454
        %s456 = smul.u32 32, %s23
        %p458 = scmp.eq.s32.totalorder %s23, 0
        // Predicated region
        $region88: #{encoder_forward.1} parent=74 // pred_check
          %p459 = pneg %p458
        $region89: #{encoder_forward.1} parent=74 // pred_check_branch
          %461 = sbr.rel (%p459) target = $region91
        $region90: #{encoder_forward.1} parent=74 // pred_region
          %462 = vst [vmem:[#allocation2] sm:$0xff] 0.0
          %463 = vst [vmem:[#allocation2 + $0x8] sm:$0xff] 0.0
          %464 = vst [vmem:[#allocation2 + $0x10] sm:$0xff] 0.0
          %465 = vst [vmem:[#allocation2 + $0x18] sm:$0xff] 0.0
          %466 = vst [vmem:[#allocation2 + $0x20] sm:$0xff] 0.0
          %467 = vst [vmem:[#allocation2 + $0x28] sm:$0xff] 0.0
          %468 = vst [vmem:[#allocation2 + $0x30] sm:$0xff] 0.0
          %469 = vst [vmem:[#allocation2 + $0x38] sm:$0xff] 0.0
          %470 = vst [vmem:[#allocation2 + $0x40] sm:$0xff] 0.0
          %471 = vst [vmem:[#allocation2 + $0x48] sm:$0xff] 0.0
          %472 = vst [vmem:[#allocation2 + $0x50] sm:$0xff] 0.0
          %473 = vst [vmem:[#allocation2 + $0x58] sm:$0xff] 0.0
          %474 = vst [vmem:[#allocation2 + $0x60] sm:$0xff] 0.0
          %475 = vst [vmem:[#allocation2 + $0x68] sm:$0xff] 0.0
          %476 = vst [vmem:[#allocation2 + $0x70] sm:$0xff] 0.0
          %477 = vst [vmem:[#allocation2 + $0x78] sm:$0xff] 0.0
          %478 = vst [vmem:[#allocation2 + $0x80] sm:$0xff] 0.0
          %479 = vst [vmem:[#allocation2 + $0x88] sm:$0xff] 0.0
          %480 = vst [vmem:[#allocation2 + $0x90] sm:$0xff] 0.0
          %481 = vst [vmem:[#allocation2 + $0x98] sm:$0xff] 0.0
          %482 = vst [vmem:[#allocation2 + $0xa0] sm:$0xff] 0.0
          %483 = vst [vmem:[#allocation2 + $0xa8] sm:$0xff] 0.0
          %484 = vst [vmem:[#allocation2 + $0xb0] sm:$0xff] 0.0
          %485 = vst [vmem:[#allocation2 + $0xb8] sm:$0xff] 0.0
          %486 = vst [vmem:[#allocation2 + $0xc0] sm:$0xff] 0.0
          %487 = vst [vmem:[#allocation2 + $0xc8] sm:$0xff] 0.0
          %488 = vst [vmem:[#allocation2 + $0xd0] sm:$0xff] 0.0
          %489 = vst [vmem:[#allocation2 + $0xd8] sm:$0xff] 0.0
          %490 = vst [vmem:[#allocation2 + $0xe0] sm:$0xff] 0.0
          %491 = vst [vmem:[#allocation2 + $0xe8] sm:$0xff] 0.0
          %492 = vst [vmem:[#allocation2 + $0xf0] sm:$0xff] 0.0
          %493 = vst [vmem:[#allocation2 + $0xf8] sm:$0xff] 0.0
          %494 = vst [vmem:[#allocation2 + $0x100] sm:$0xff] 0.0
          %495 = vst [vmem:[#allocation2 + $0x108] sm:$0xff] 0.0
          %496 = vst [vmem:[#allocation2 + $0x110] sm:$0xff] 0.0
          %497 = vst [vmem:[#allocation2 + $0x118] sm:$0xff] 0.0
          %498 = vst [vmem:[#allocation2 + $0x120] sm:$0xff] 0.0
          %499 = vst [vmem:[#allocation2 + $0x128] sm:$0xff] 0.0
          %500 = vst [vmem:[#allocation2 + $0x130] sm:$0xff] 0.0
          %501 = vst [vmem:[#allocation2 + $0x138] sm:$0xff] 0.0
          %502 = vst [vmem:[#allocation2 + $0x140] sm:$0xff] 0.0
          %503 = vst [vmem:[#allocation2 + $0x148] sm:$0xff] 0.0
          %504 = vst [vmem:[#allocation2 + $0x150] sm:$0xff] 0.0
          %505 = vst [vmem:[#allocation2 + $0x158] sm:$0xff] 0.0
          %506 = vst [vmem:[#allocation2 + $0x160] sm:$0xff] 0.0
          %507 = vst [vmem:[#allocation2 + $0x168] sm:$0xff] 0.0
          %508 = vst [vmem:[#allocation2 + $0x170] sm:$0xff] 0.0
          %509 = vst [vmem:[#allocation2 + $0x178] sm:$0xff] 0.0
          %510 = vst [vmem:[#allocation2 + $0x180] sm:$0xff] 0.0
          %511 = vst [vmem:[#allocation2 + $0x188] sm:$0xff] 0.0
          %512 = vst [vmem:[#allocation2 + $0x190] sm:$0xff] 0.0
          %513 = vst [vmem:[#allocation2 + $0x198] sm:$0xff] 0.0
          %514 = vst [vmem:[#allocation2 + $0x1a0] sm:$0xff] 0.0
          %515 = vst [vmem:[#allocation2 + $0x1a8] sm:$0xff] 0.0
          %516 = vst [vmem:[#allocation2 + $0x1b0] sm:$0xff] 0.0
          %517 = vst [vmem:[#allocation2 + $0x1b8] sm:$0xff] 0.0
          %518 = vst [vmem:[#allocation2 + $0x1c0] sm:$0xff] 0.0
          %519 = vst [vmem:[#allocation2 + $0x1c8] sm:$0xff] 0.0
          %520 = vst [vmem:[#allocation2 + $0x1d0] sm:$0xff] 0.0
          %521 = vst [vmem:[#allocation2 + $0x1d8] sm:$0xff] 0.0
          %522 = vst [vmem:[#allocation2 + $0x1e0] sm:$0xff] 0.0
          %523 = vst [vmem:[#allocation2 + $0x1e8] sm:$0xff] 0.0
          %524 = vst [vmem:[#allocation2 + $0x1f0] sm:$0xff] 0.0
          %525 = vst [vmem:[#allocation2 + $0x1f8] sm:$0xff] 0.0
        $region91: #{encoder_forward.1} parent=74 // pred_fallthru
          _
        %v526 = vld [vmem:[#allocation2] sm:$0xff]
        %v527 = vld [vmem:[#allocation2 + $0x8] sm:$0xff]
        %v528 = vld [vmem:[#allocation2 + $0x10] sm:$0xff]
        %v529 = vld [vmem:[#allocation2 + $0x18] sm:$0xff]
        %v530 = vld [vmem:[#allocation2 + $0x20] sm:$0xff]
        %v531 = vld [vmem:[#allocation2 + $0x28] sm:$0xff]
        %v532 = vld [vmem:[#allocation2 + $0x30] sm:$0xff]
        %v533 = vld [vmem:[#allocation2 + $0x38] sm:$0xff]
        %v534 = vld [vmem:[#allocation2 + $0x40] sm:$0xff]
        %v535 = vld [vmem:[#allocation2 + $0x48] sm:$0xff]
        %v536 = vld [vmem:[#allocation2 + $0x50] sm:$0xff]
        %v537 = vld [vmem:[#allocation2 + $0x58] sm:$0xff]
        %v538 = vld [vmem:[#allocation2 + $0x60] sm:$0xff]
        %v539 = vld [vmem:[#allocation2 + $0x68] sm:$0xff]
        %v540 = vld [vmem:[#allocation2 + $0x70] sm:$0xff]
        %v541 = vld [vmem:[#allocation2 + $0x78] sm:$0xff]
        %v542 = vld [vmem:[#allocation2 + $0x80] sm:$0xff]
        %v543 = vld [vmem:[#allocation2 + $0x88] sm:$0xff]
        %v544 = vld [vmem:[#allocation2 + $0x90] sm:$0xff]
        %v545 = vld [vmem:[#allocation2 + $0x98] sm:$0xff]
        %v546 = vld [vmem:[#allocation2 + $0xa0] sm:$0xff]
        %v547 = vld [vmem:[#allocation2 + $0xa8] sm:$0xff]
        %v548 = vld [vmem:[#allocation2 + $0xb0] sm:$0xff]
        %v549 = vld [vmem:[#allocation2 + $0xb8] sm:$0xff]
        %v550 = vld [vmem:[#allocation2 + $0xc0] sm:$0xff]
        %v551 = vld [vmem:[#allocation2 + $0xc8] sm:$0xff]
        %v552 = vld [vmem:[#allocation2 + $0xd0] sm:$0xff]
        %v553 = vld [vmem:[#allocation2 + $0xd8] sm:$0xff]
        %v554 = vld [vmem:[#allocation2 + $0xe0] sm:$0xff]
        %v555 = vld [vmem:[#allocation2 + $0xe8] sm:$0xff]
        %v556 = vld [vmem:[#allocation2 + $0xf0] sm:$0xff]
        %v557 = vld [vmem:[#allocation2 + $0xf8] sm:$0xff]
        %v558 = vld [vmem:[#allocation2 + $0x100] sm:$0xff]
        %v559 = vld [vmem:[#allocation2 + $0x108] sm:$0xff]
        %v560 = vld [vmem:[#allocation2 + $0x110] sm:$0xff]
        %v561 = vld [vmem:[#allocation2 + $0x118] sm:$0xff]
        %v562 = vld [vmem:[#allocation2 + $0x120] sm:$0xff]
        %v563 = vld [vmem:[#allocation2 + $0x128] sm:$0xff]
        %v564 = vld [vmem:[#allocation2 + $0x130] sm:$0xff]
        %v565 = vld [vmem:[#allocation2 + $0x138] sm:$0xff]
        %v566 = vld [vmem:[#allocation2 + $0x140] sm:$0xff]
        %v567 = vld [vmem:[#allocation2 + $0x148] sm:$0xff]
        %v568 = vld [vmem:[#allocation2 + $0x150] sm:$0xff]
        %v569 = vld [vmem:[#allocation2 + $0x158] sm:$0xff]
        %v570 = vld [vmem:[#allocation2 + $0x160] sm:$0xff]
        %v571 = vld [vmem:[#allocation2 + $0x168] sm:$0xff]
        %v572 = vld [vmem:[#allocation2 + $0x170] sm:$0xff]
        %v573 = vld [vmem:[#allocation2 + $0x178] sm:$0xff]
        %v574 = vld [vmem:[#allocation2 + $0x180] sm:$0xff]
        %v575 = vld [vmem:[#allocation2 + $0x188] sm:$0xff]
        %v576 = vld [vmem:[#allocation2 + $0x190] sm:$0xff]
        %v577 = vld [vmem:[#allocation2 + $0x198] sm:$0xff]
        %v578 = vld [vmem:[#allocation2 + $0x1a0] sm:$0xff]
        %v579 = vld [vmem:[#allocation2 + $0x1a8] sm:$0xff]
        %v580 = vld [vmem:[#allocation2 + $0x1b0] sm:$0xff]
        %v581 = vld [vmem:[#allocation2 + $0x1b8] sm:$0xff]
        %v582 = vld [vmem:[#allocation2 + $0x1c0] sm:$0xff]
        %v583 = vld [vmem:[#allocation2 + $0x1c8] sm:$0xff]
        %v584 = vld [vmem:[#allocation2 + $0x1d0] sm:$0xff]
        %v585 = vld [vmem:[#allocation2 + $0x1d8] sm:$0xff]
        %v586 = vld [vmem:[#allocation2 + $0x1e0] sm:$0xff]
        %v587 = vld [vmem:[#allocation2 + $0x1e8] sm:$0xff]
        %v588 = vld [vmem:[#allocation2 + $0x1f0] sm:$0xff]
        %v589 = vld [vmem:[#allocation2 + $0x1f8] sm:$0xff]
        %v590 = vld [vmem:[%s407] sm:$0xff]
        %v591 = vld [vmem:[%s407 + $0x8] sm:$0xff]
        %v592 = vld [vmem:[%s407 + $0x10] sm:$0xff]
        %v593 = vld [vmem:[%s407 + $0x18] sm:$0xff]
        %v594 = vld [vmem:[%s407 + $0x20] sm:$0xff]
        %v595 = vld [vmem:[%s407 + $0x28] sm:$0xff]
        %v596 = vld [vmem:[%s407 + $0x30] sm:$0xff]
        %v597 = vld [vmem:[%s407 + $0x38] sm:$0xff]
        %v598 = vld [vmem:[%s407 + $0x40] sm:$0xff]
        %v599 = vld [vmem:[%s407 + $0x48] sm:$0xff]
        %v600 = vld [vmem:[%s407 + $0x50] sm:$0xff]
        %v601 = vld [vmem:[%s407 + $0x58] sm:$0xff]
        %v602 = vld [vmem:[%s407 + $0x60] sm:$0xff]
        %v603 = vld [vmem:[%s407 + $0x68] sm:$0xff]
        %v604 = vld [vmem:[%s407 + $0x70] sm:$0xff]
        %v605 = vld [vmem:[%s407 + $0x78] sm:$0xff]
        %v606 = vld [vmem:[%s407 + $0x80] sm:$0xff]
        %v607 = vld [vmem:[%s407 + $0x88] sm:$0xff]
        %v608 = vld [vmem:[%s407 + $0x90] sm:$0xff]
        %v609 = vld [vmem:[%s407 + $0x98] sm:$0xff]
        %v610 = vld [vmem:[%s407 + $0xa0] sm:$0xff]
        %v611 = vld [vmem:[%s407 + $0xa8] sm:$0xff]
        %v612 = vld [vmem:[%s407 + $0xb0] sm:$0xff]
        %v613 = vld [vmem:[%s407 + $0xb8] sm:$0xff]
        %v614 = vld [vmem:[%s407 + $0xc0] sm:$0xff]
        %v615 = vld [vmem:[%s407 + $0xc8] sm:$0xff]
        %v616 = vld [vmem:[%s407 + $0xd0] sm:$0xff]
        %v617 = vld [vmem:[%s407 + $0xd8] sm:$0xff]
        %v618 = vld [vmem:[%s407 + $0xe0] sm:$0xff]
        %v619 = vld [vmem:[%s407 + $0xe8] sm:$0xff]
        %v620 = vld [vmem:[%s407 + $0xf0] sm:$0xff]
        %v621 = vld [vmem:[%s407 + $0xf8] sm:$0xff]
        %v622 = vpack.c.bf16 %v592, %v590
        %v623 = vpack.c.bf16 %v593, %v591
        %v624 = vpack.c.bf16 %v596, %v594
        %v625 = vpack.c.bf16 %v597, %v595
        %v626 = vpack.c.bf16 %v600, %v598
        %v627 = vpack.c.bf16 %v601, %v599
        %v628 = vpack.c.bf16 %v604, %v602
        %v629 = vpack.c.bf16 %v605, %v603
        %v630 = vpack.c.bf16 %v608, %v606
        %v631 = vpack.c.bf16 %v609, %v607
        %v632 = vpack.c.bf16 %v612, %v610
        %v633 = vpack.c.bf16 %v613, %v611
        %v634 = vpack.c.bf16 %v616, %v614
        %v635 = vpack.c.bf16 %v617, %v615
        %v636 = vpack.c.bf16 %v620, %v618
        %v637 = vpack.c.bf16 %v621, %v619
        %v638 = vld [vmem:[%s455] sm:$0xff]
        %v639 = vld [vmem:[%s455 + $0x8] sm:$0xff]
        %v640 = vld [vmem:[%s455 + $0x10] sm:$0xff]
        %v641 = vld [vmem:[%s455 + $0x18] sm:$0xff]
        %v642 = vld [vmem:[%s455 + $0x20] sm:$0xff]
        %v643 = vld [vmem:[%s455 + $0x28] sm:$0xff]
        %v644 = vld [vmem:[%s455 + $0x30] sm:$0xff]
        %v645 = vld [vmem:[%s455 + $0x38] sm:$0xff]
        %v646 = vld [vmem:[%s455 + $0x40] sm:$0xff]
        %v647 = vld [vmem:[%s455 + $0x48] sm:$0xff]
        %v648 = vld [vmem:[%s455 + $0x50] sm:$0xff]
        %v649 = vld [vmem:[%s455 + $0x58] sm:$0xff]
        %v650 = vld [vmem:[%s455 + $0x60] sm:$0xff]
        %v651 = vld [vmem:[%s455 + $0x68] sm:$0xff]
        %v652 = vld [vmem:[%s455 + $0x70] sm:$0xff]
        %v653 = vld [vmem:[%s455 + $0x78] sm:$0xff]
        %v654 = vld [vmem:[%s455 + $0x80] sm:$0xff]
        %v655 = vld [vmem:[%s455 + $0x88] sm:$0xff]
        %v656 = vld [vmem:[%s455 + $0x90] sm:$0xff]
        %v657 = vld [vmem:[%s455 + $0x98] sm:$0xff]
        %v658 = vld [vmem:[%s455 + $0xa0] sm:$0xff]
        %v659 = vld [vmem:[%s455 + $0xa8] sm:$0xff]
        %v660 = vld [vmem:[%s455 + $0xb0] sm:$0xff]
        %v661 = vld [vmem:[%s455 + $0xb8] sm:$0xff]
        %v662 = vld [vmem:[%s455 + $0xc0] sm:$0xff]
        %v663 = vld [vmem:[%s455 + $0xc8] sm:$0xff]
        %v664 = vld [vmem:[%s455 + $0xd0] sm:$0xff]
        %v665 = vld [vmem:[%s455 + $0xd8] sm:$0xff]
        %v666 = vld [vmem:[%s455 + $0xe0] sm:$0xff]
        %v667 = vld [vmem:[%s455 + $0xe8] sm:$0xff]
        %v668 = vld [vmem:[%s455 + $0xf0] sm:$0xff]
        %v669 = vld [vmem:[%s455 + $0xf8] sm:$0xff]
        %v670 = vld [vmem:[%s455 + $0x100] sm:$0xff]
        %v671 = vld [vmem:[%s455 + $0x108] sm:$0xff]
        %v672 = vld [vmem:[%s455 + $0x110] sm:$0xff]
        %v673 = vld [vmem:[%s455 + $0x118] sm:$0xff]
        %v674 = vld [vmem:[%s455 + $0x120] sm:$0xff]
        %v675 = vld [vmem:[%s455 + $0x128] sm:$0xff]
        %v676 = vld [vmem:[%s455 + $0x130] sm:$0xff]
        %v677 = vld [vmem:[%s455 + $0x138] sm:$0xff]
        %v678 = vld [vmem:[%s455 + $0x140] sm:$0xff]
        %v679 = vld [vmem:[%s455 + $0x148] sm:$0xff]
        %v680 = vld [vmem:[%s455 + $0x150] sm:$0xff]
        %v681 = vld [vmem:[%s455 + $0x158] sm:$0xff]
        %v682 = vld [vmem:[%s455 + $0x160] sm:$0xff]
        %v683 = vld [vmem:[%s455 + $0x168] sm:$0xff]
        %v684 = vld [vmem:[%s455 + $0x170] sm:$0xff]
        %v685 = vld [vmem:[%s455 + $0x178] sm:$0xff]
        %v686 = vld [vmem:[%s455 + $0x180] sm:$0xff]
        %v687 = vld [vmem:[%s455 + $0x188] sm:$0xff]
        %v688 = vld [vmem:[%s455 + $0x190] sm:$0xff]
        %v689 = vld [vmem:[%s455 + $0x198] sm:$0xff]
        %v690 = vld [vmem:[%s455 + $0x1a0] sm:$0xff]
        %v691 = vld [vmem:[%s455 + $0x1a8] sm:$0xff]
        %v692 = vld [vmem:[%s455 + $0x1b0] sm:$0xff]
        %v693 = vld [vmem:[%s455 + $0x1b8] sm:$0xff]
        %v694 = vld [vmem:[%s455 + $0x1c0] sm:$0xff]
        %v695 = vld [vmem:[%s455 + $0x1c8] sm:$0xff]
        %v696 = vld [vmem:[%s455 + $0x1d0] sm:$0xff]
        %v697 = vld [vmem:[%s455 + $0x1d8] sm:$0xff]
        %v698 = vld [vmem:[%s455 + $0x1e0] sm:$0xff]
        %v699 = vld [vmem:[%s455 + $0x1e8] sm:$0xff]
        %v700 = vld [vmem:[%s455 + $0x1f0] sm:$0xff]
        %v701 = vld [vmem:[%s455 + $0x1f8] sm:$0xff]
        %v766 = vunpack.c.l.b16 %v638
        %v767 = vunpack.c.h.b16 %v638
        %v768 = vunpack.c.l.b16 %v639
        %v769 = vunpack.c.h.b16 %v639
        %v770 = vunpack.c.l.b16 %v640
        %v771 = vunpack.c.h.b16 %v640
        %v772 = vunpack.c.l.b16 %v641
        %v773 = vunpack.c.h.b16 %v641
        %v774 = vunpack.c.l.b16 %v642
        %v775 = vunpack.c.h.b16 %v642
        %v776 = vunpack.c.l.b16 %v643
        %v777 = vunpack.c.h.b16 %v643
        %v778 = vunpack.c.l.b16 %v644
        %v779 = vunpack.c.h.b16 %v644
        %v780 = vunpack.c.l.b16 %v645
        %v781 = vunpack.c.h.b16 %v645
        %v782 = vunpack.c.l.b16 %v646
        %v783 = vunpack.c.h.b16 %v646
        %v784 = vunpack.c.l.b16 %v647
        %v785 = vunpack.c.h.b16 %v647
        %v786 = vunpack.c.l.b16 %v648
        %v787 = vunpack.c.h.b16 %v648
        %v788 = vunpack.c.l.b16 %v649
        %v789 = vunpack.c.h.b16 %v649
        %v790 = vunpack.c.l.b16 %v650
        %v791 = vunpack.c.h.b16 %v650
        %v792 = vunpack.c.l.b16 %v651
        %v793 = vunpack.c.h.b16 %v651
        %v794 = vunpack.c.l.b16 %v652
        %v795 = vunpack.c.h.b16 %v652
        %v796 = vunpack.c.l.b16 %v653
        %v797 = vunpack.c.h.b16 %v653
        %v798 = vunpack.c.l.b16 %v654
        %v799 = vunpack.c.h.b16 %v654
        %v800 = vunpack.c.l.b16 %v655
        %v801 = vunpack.c.h.b16 %v655
        %v802 = vunpack.c.l.b16 %v656
        %v803 = vunpack.c.h.b16 %v656
        %v804 = vunpack.c.l.b16 %v657
        %v805 = vunpack.c.h.b16 %v657
        %v806 = vunpack.c.l.b16 %v658
        %v807 = vunpack.c.h.b16 %v658
        %v808 = vunpack.c.l.b16 %v659
        %v809 = vunpack.c.h.b16 %v659
        %v810 = vunpack.c.l.b16 %v660
        %v811 = vunpack.c.h.b16 %v660
        %v812 = vunpack.c.l.b16 %v661
        %v813 = vunpack.c.h.b16 %v661
        %v814 = vunpack.c.l.b16 %v662
        %v815 = vunpack.c.h.b16 %v662
        %v816 = vunpack.c.l.b16 %v663
        %v817 = vunpack.c.h.b16 %v663
        %v818 = vunpack.c.l.b16 %v664
        %v819 = vunpack.c.h.b16 %v664
        %v820 = vunpack.c.l.b16 %v665
        %v821 = vunpack.c.h.b16 %v665
        %v822 = vunpack.c.l.b16 %v666
        %v823 = vunpack.c.h.b16 %v666
        %v824 = vunpack.c.l.b16 %v667
        %v825 = vunpack.c.h.b16 %v667
        %v826 = vunpack.c.l.b16 %v668
        %v827 = vunpack.c.h.b16 %v668
        %v828 = vunpack.c.l.b16 %v669
        %v829 = vunpack.c.h.b16 %v669
        %v830 = vunpack.c.l.b16 %v670
        %v831 = vunpack.c.h.b16 %v670
        %v832 = vunpack.c.l.b16 %v671
        %v833 = vunpack.c.h.b16 %v671
        %v834 = vunpack.c.l.b16 %v672
        %v835 = vunpack.c.h.b16 %v672
        %v836 = vunpack.c.l.b16 %v673
        %v837 = vunpack.c.h.b16 %v673
        %v838 = vunpack.c.l.b16 %v674
        %v839 = vunpack.c.h.b16 %v674
        %v840 = vunpack.c.l.b16 %v675
        %v841 = vunpack.c.h.b16 %v675
        %v842 = vunpack.c.l.b16 %v676
        %v843 = vunpack.c.h.b16 %v676
        %v844 = vunpack.c.l.b16 %v677
        %v845 = vunpack.c.h.b16 %v677
        %v846 = vunpack.c.l.b16 %v678
        %v847 = vunpack.c.h.b16 %v678
        %v848 = vunpack.c.l.b16 %v679
        %v849 = vunpack.c.h.b16 %v679
        %v850 = vunpack.c.l.b16 %v680
        %v851 = vunpack.c.h.b16 %v680
        %v852 = vunpack.c.l.b16 %v681
        %v853 = vunpack.c.h.b16 %v681
        %v854 = vunpack.c.l.b16 %v682
        %v855 = vunpack.c.h.b16 %v682
        %v856 = vunpack.c.l.b16 %v683
        %v857 = vunpack.c.h.b16 %v683
        %v858 = vunpack.c.l.b16 %v684
        %v859 = vunpack.c.h.b16 %v684
        %v860 = vunpack.c.l.b16 %v685
        %v861 = vunpack.c.h.b16 %v685
        %v862 = vunpack.c.l.b16 %v686
        %v863 = vunpack.c.h.b16 %v686
        %v864 = vunpack.c.l.b16 %v687
        %v865 = vunpack.c.h.b16 %v687
        %v866 = vunpack.c.l.b16 %v688
        %v867 = vunpack.c.h.b16 %v688
        %v868 = vunpack.c.l.b16 %v689
        %v869 = vunpack.c.h.b16 %v689
        %v870 = vunpack.c.l.b16 %v690
        %v871 = vunpack.c.h.b16 %v690
        %v872 = vunpack.c.l.b16 %v691
        %v873 = vunpack.c.h.b16 %v691
        %v874 = vunpack.c.l.b16 %v692
        %v875 = vunpack.c.h.b16 %v692
        %v876 = vunpack.c.l.b16 %v693
        %v877 = vunpack.c.h.b16 %v693
        %v878 = vunpack.c.l.b16 %v694
        %v879 = vunpack.c.h.b16 %v694
        %v880 = vunpack.c.l.b16 %v695
        %v881 = vunpack.c.h.b16 %v695
        %v882 = vunpack.c.l.b16 %v696
        %v883 = vunpack.c.h.b16 %v696
        %v884 = vunpack.c.l.b16 %v697
        %v885 = vunpack.c.h.b16 %v697
        %v886 = vunpack.c.l.b16 %v698
        %v887 = vunpack.c.h.b16 %v698
        %v888 = vunpack.c.l.b16 %v699
        %v889 = vunpack.c.h.b16 %v699
        %v890 = vunpack.c.l.b16 %v700
        %v891 = vunpack.c.h.b16 %v700
        %v892 = vunpack.c.l.b16 %v701
        %v893 = vunpack.c.h.b16 %v701
        %v894 = vpack.c.b16 %v770, %v766
        %v895 = vpack.c.b16 %v771, %v767
        %v896 = vpack.c.b16 %v772, %v768
        %v897 = vpack.c.b16 %v773, %v769
        %v898 = vpack.c.b16 %v778, %v774
        %v899 = vpack.c.b16 %v779, %v775
        %v900 = vpack.c.b16 %v780, %v776
        %v901 = vpack.c.b16 %v781, %v777
        %v902 = vpack.c.b16 %v786, %v782
        %v903 = vpack.c.b16 %v787, %v783
        %v904 = vpack.c.b16 %v788, %v784
        %v905 = vpack.c.b16 %v789, %v785
        %v906 = vpack.c.b16 %v794, %v790
        %v907 = vpack.c.b16 %v795, %v791
        %v908 = vpack.c.b16 %v796, %v792
        %v909 = vpack.c.b16 %v797, %v793
        %v910 = vpack.c.b16 %v802, %v798
        %v911 = vpack.c.b16 %v803, %v799
        %v912 = vpack.c.b16 %v804, %v800
        %v913 = vpack.c.b16 %v805, %v801
        %v914 = vpack.c.b16 %v810, %v806
        %v915 = vpack.c.b16 %v811, %v807
        %v916 = vpack.c.b16 %v812, %v808
        %v917 = vpack.c.b16 %v813, %v809
        %v918 = vpack.c.b16 %v818, %v814
        %v919 = vpack.c.b16 %v819, %v815
        %v920 = vpack.c.b16 %v820, %v816
        %v921 = vpack.c.b16 %v821, %v817
        %v922 = vpack.c.b16 %v826, %v822
        %v923 = vpack.c.b16 %v827, %v823
        %v924 = vpack.c.b16 %v828, %v824
        %v925 = vpack.c.b16 %v829, %v825
        %v926 = vpack.c.b16 %v834, %v830
        %v927 = vpack.c.b16 %v835, %v831
        %v928 = vpack.c.b16 %v836, %v832
        %v929 = vpack.c.b16 %v837, %v833
        %v930 = vpack.c.b16 %v842, %v838
        %v931 = vpack.c.b16 %v843, %v839
        %v932 = vpack.c.b16 %v844, %v840
        %v933 = vpack.c.b16 %v845, %v841
        %v934 = vpack.c.b16 %v850, %v846
        %v935 = vpack.c.b16 %v851, %v847
        %v936 = vpack.c.b16 %v852, %v848
        %v937 = vpack.c.b16 %v853, %v849
        %v938 = vpack.c.b16 %v858, %v854
        %v939 = vpack.c.b16 %v859, %v855
        %v940 = vpack.c.b16 %v860, %v856
        %v941 = vpack.c.b16 %v861, %v857
        %v942 = vpack.c.b16 %v866, %v862
        %v943 = vpack.c.b16 %v867, %v863
        %v944 = vpack.c.b16 %v868, %v864
        %v945 = vpack.c.b16 %v869, %v865
        %v946 = vpack.c.b16 %v874, %v870
        %v947 = vpack.c.b16 %v875, %v871
        %v948 = vpack.c.b16 %v876, %v872
        %v949 = vpack.c.b16 %v877, %v873
        %v950 = vpack.c.b16 %v882, %v878
        %v951 = vpack.c.b16 %v883, %v879
        %v952 = vpack.c.b16 %v884, %v880
        %v953 = vpack.c.b16 %v885, %v881
        %v954 = vpack.c.b16 %v890, %v886
        %v955 = vpack.c.b16 %v891, %v887
        %v956 = vpack.c.b16 %v892, %v888
        %v957 = vpack.c.b16 %v893, %v889
        %1022 = vmatprep.subr.bf16.mxu0 %v895
        %1023 = vmatpush1.bf16.msra.mxu0 %v894
        %1024 = vmatprep.subr.bf16.mxu0 %v899
        %1025 = vmatpush1.bf16.msra.mxu0 %v898
        %1026 = vmatprep.subr.bf16.mxu0 %v903
        %1027 = vmatpush1.bf16.msra.mxu0 %v902
        %1028 = vmatprep.subr.bf16.mxu0 %v907
        %1029 = vmatpush1.bf16.msra.mxu0 %v906
        %1030 = vmatprep.subr.bf16.mxu0 %v911
        %1031 = vmatpush1.bf16.msra.mxu0 %v910
        %1032 = vmatprep.subr.bf16.mxu0 %v915
        %1033 = vmatpush1.bf16.msra.mxu0 %v914
        %1034 = vmatprep.subr.bf16.mxu0 %v919
        %1035 = vmatpush1.bf16.msra.mxu0 %v918
        %1036 = vmatprep.subr.bf16.mxu0 %v923
        %1037 = vmatpush1.bf16.msra.mxu0 %v922
        %1038 = vmatprep.subr.bf16.mxu0 %v927
        %1039 = vmatpush1.bf16.msra.mxu0 %v926
        %1040 = vmatprep.subr.bf16.mxu0 %v931
        %1041 = vmatpush1.bf16.msra.mxu0 %v930
        %1042 = vmatprep.subr.bf16.mxu0 %v935
        %1043 = vmatpush1.bf16.msra.mxu0 %v934
        %1044 = vmatprep.subr.bf16.mxu0 %v939
        %1045 = vmatpush1.bf16.msra.mxu0 %v938
        %1046 = vmatprep.subr.bf16.mxu0 %v943
        %1047 = vmatpush1.bf16.msra.mxu0 %v942
        %1048 = vmatprep.subr.bf16.mxu0 %v947
        %1049 = vmatpush1.bf16.msra.mxu0 %v946
        %1050 = vmatprep.subr.bf16.mxu0 %v951
        %1051 = vmatpush1.bf16.msra.mxu0 %v950
        %1052 = vmatprep.subr.bf16.mxu0 %v955
        %1053 = vmatpush1.bf16.msra.mxu0 %v954
        %1054 = vmatprep.mubr.bf16.mxu0 %v623
        %1055 = vmatmul.mubr.bf16.gmra.mrb[0].mxu0 %v622
        %v1056 = vpop.f32.mrb[0].mxu0
        %v1057 = vadd.f32 0.0, %v1056
        %v1058 = vpop.f32.mrb[0].mxu0
        %v1059 = vadd.f32 0.0, %v1058
        %v1060 = vpop.f32.mrb[0].mxu0
        %v1061 = vadd.f32 0.0, %v1060
        %v1062 = vpop.f32.mrb[0].mxu0
        %v1063 = vadd.f32 0.0, %v1062
        %1064 = vmatprep.mubr.bf16.mxu0 %v625
        %1065 = vmatmul.mubr.bf16.gmra.mrb[0].mxu0 %v624
        %v1066 = vpop.f32.mrb[0].mxu0
        %v1067 = vadd.f32 0.0, %v1066
        %v1068 = vpop.f32.mrb[0].mxu0
        %v1069 = vadd.f32 0.0, %v1068
        %v1070 = vpop.f32.mrb[0].mxu0
        %v1071 = vadd.f32 0.0, %v1070
        %v1072 = vpop.f32.mrb[0].mxu0
        %v1073 = vadd.f32 0.0, %v1072
        %1074 = vmatprep.mubr.bf16.mxu0 %v627
        %1075 = vmatmul.mubr.bf16.gmra.mrb[0].mxu0 %v626
        %v1076 = vpop.f32.mrb[0].mxu0
        %v1077 = vadd.f32 0.0, %v1076
        %v1078 = vpop.f32.mrb[0].mxu0
        %v1079 = vadd.f32 0.0, %v1078
        %v1080 = vpop.f32.mrb[0].mxu0
        %v1081 = vadd.f32 0.0, %v1080
        %v1082 = vpop.f32.mrb[0].mxu0
        %v1083 = vadd.f32 0.0, %v1082
        %1084 = vmatprep.mubr.bf16.mxu0 %v629
        %1085 = vmatmul.mubr.bf16.gmra.mrb[0].mxu0 %v628
        %v1086 = vpop.f32.mrb[0].mxu0
        %v1087 = vadd.f32 0.0, %v1086
        %v1088 = vpop.f32.mrb[0].mxu0
        %v1089 = vadd.f32 0.0, %v1088
        %v1090 = vpop.f32.mrb[0].mxu0
        %v1091 = vadd.f32 0.0, %v1090
        %v1092 = vpop.f32.mrb[0].mxu0
        %v1093 = vadd.f32 0.0, %v1092
        %1094 = vmatprep.mubr.bf16.mxu0 %v631
        %1095 = vmatmul.mubr.bf16.gmra.mrb[0].mxu0 %v630
        %v1096 = vpop.f32.mrb[0].mxu0
        %v1097 = vadd.f32 0.0, %v1096
        %v1098 = vpop.f32.mrb[0].mxu0
        %v1099 = vadd.f32 0.0, %v1098
        %v1100 = vpop.f32.mrb[0].mxu0
        %v1101 = vadd.f32 0.0, %v1100
        %v1102 = vpop.f32.mrb[0].mxu0
        %v1103 = vadd.f32 0.0, %v1102
        %1104 = vmatprep.mubr.bf16.mxu0 %v633
        %1105 = vmatmul.mubr.bf16.gmra.mrb[0].mxu0 %v632
        %v1106 = vpop.f32.mrb[0].mxu0
        %v1107 = vadd.f32 0.0, %v1106
        %v1108 = vpop.f32.mrb[0].mxu0
        %v1109 = vadd.f32 0.0, %v1108
        %v1110 = vpop.f32.mrb[0].mxu0
        %v1111 = vadd.f32 0.0, %v1110
        %v1112 = vpop.f32.mrb[0].mxu0
        %v1113 = vadd.f32 0.0, %v1112
        %1114 = vmatprep.mubr.bf16.mxu0 %v635
        %1115 = vmatmul.mubr.bf16.gmra.mrb[0].mxu0 %v634
        %v1116 = vpop.f32.mrb[0].mxu0
        %v1117 = vadd.f32 0.0, %v1116
        %v1118 = vpop.f32.mrb[0].mxu0
        %v1119 = vadd.f32 0.0, %v1118
        %v1120 = vpop.f32.mrb[0].mxu0
        %v1121 = vadd.f32 0.0, %v1120
        %v1122 = vpop.f32.mrb[0].mxu0
        %v1123 = vadd.f32 0.0, %v1122
        %1124 = vmatprep.mubr.bf16.mxu0 %v637
        %1125 = vmatmul.mubr.bf16.gmra.mrb[0].mxu0 %v636
        %v1126 = vpop.f32.mrb[0].mxu0
        %v1127 = vadd.f32 0.0, %v1126
        %v1128 = vpop.f32.mrb[0].mxu0
        %v1129 = vadd.f32 0.0, %v1128
        %v1130 = vpop.f32.mrb[0].mxu0
        %v1131 = vadd.f32 0.0, %v1130
        %v1132 = vpop.f32.mrb[0].mxu0
        %v1133 = vadd.f32 0.0, %v1132
        %1134 = vdwg.mxu0
        %1135 = vmatprep.subr.bf16.mxu0 %v897
        %1136 = vmatpush1.bf16.msra.mxu0 %v896
        %1137 = vmatprep.subr.bf16.mxu0 %v901
        %1138 = vmatpush1.bf16.msra.mxu0 %v900
        %1139 = vmatprep.subr.bf16.mxu0 %v905
        %1140 = vmatpush1.bf16.msra.mxu0 %v904
        %1141 = vmatprep.subr.bf16.mxu0 %v909
        %1142 = vmatpush1.bf16.msra.mxu0 %v908
        %1143 = vmatprep.subr.bf16.mxu0 %v913
        %1144 = vmatpush1.bf16.msra.mxu0 %v912
        %1145 = vmatprep.subr.bf16.mxu0 %v917
        %1146 = vmatpush1.bf16.msra.mxu0 %v916
        %1147 = vmatprep.subr.bf16.mxu0 %v921
        %1148 = vmatpush1.bf16.msra.mxu0 %v920
        %1149 = vmatprep.subr.bf16.mxu0 %v925
        %1150 = vmatpush1.bf16.msra.mxu0 %v924
        %1151 = vmatprep.subr.bf16.mxu0 %v929
        %1152 = vmatpush1.bf16.msra.mxu0 %v928
        %1153 = vmatprep.subr.bf16.mxu0 %v933
        %1154 = vmatpush1.bf16.msra.mxu0 %v932
        %1155 = vmatprep.subr.bf16.mxu0 %v937
        %1156 = vmatpush1.bf16.msra.mxu0 %v936
        %1157 = vmatprep.subr.bf16.mxu0 %v941
        %1158 = vmatpush1.bf16.msra.mxu0 %v940
        %1159 = vmatprep.subr.bf16.mxu0 %v945
        %1160 = vmatpush1.bf16.msra.mxu0 %v944
        %1161 = vmatprep.subr.bf16.mxu0 %v949
        %1162 = vmatpush1.bf16.msra.mxu0 %v948
        %1163 = vmatprep.subr.bf16.mxu0 %v953
        %1164 = vmatpush1.bf16.msra.mxu0 %v952
        %1165 = vmatprep.subr.bf16.mxu0 %v957
        %1166 = vmatpush1.bf16.msra.mxu0 %v956
        %1167 = vmatprep.mubr.bf16.mxu0 %v623
        %1168 = vmatmul.mubr.bf16.gmra.mrb[0].mxu0 %v622
        %v1169 = vpop.f32.mrb[0].mxu0
        %v1170 = vadd.f32 0.0, %v1169
        %v1171 = vpop.f32.mrb[0].mxu0
        %v1172 = vadd.f32 0.0, %v1171
        %v1173 = vpop.f32.mrb[0].mxu0
        %v1174 = vadd.f32 0.0, %v1173
        %v1175 = vpop.f32.mrb[0].mxu0
        %v1176 = vadd.f32 0.0, %v1175
        %1177 = vmatprep.mubr.bf16.mxu0 %v625
        %1178 = vmatmul.mubr.bf16.gmra.mrb[0].mxu0 %v624
        %v1179 = vpop.f32.mrb[0].mxu0
        %v1180 = vadd.f32 0.0, %v1179
        %v1181 = vpop.f32.mrb[0].mxu0
        %v1182 = vadd.f32 0.0, %v1181
        %v1183 = vpop.f32.mrb[0].mxu0
        %v1184 = vadd.f32 0.0, %v1183
        %v1185 = vpop.f32.mrb[0].mxu0
        %v1186 = vadd.f32 0.0, %v1185
        %1187 = vmatprep.mubr.bf16.mxu0 %v627
        %1188 = vmatmul.mubr.bf16.gmra.mrb[0].mxu0 %v626
        %v1189 = vpop.f32.mrb[0].mxu0
        %v1190 = vadd.f32 0.0, %v1189
        %v1191 = vpop.f32.mrb[0].mxu0
        %v1192 = vadd.f32 0.0, %v1191
        %v1193 = vpop.f32.mrb[0].mxu0
        %v1194 = vadd.f32 0.0, %v1193
        %v1195 = vpop.f32.mrb[0].mxu0
        %v1196 = vadd.f32 0.0, %v1195
        %1197 = vmatprep.mubr.bf16.mxu0 %v629
        %1198 = vmatmul.mubr.bf16.gmra.mrb[0].mxu0 %v628
        %v1199 = vpop.f32.mrb[0].mxu0
        %v1200 = vadd.f32 0.0, %v1199
        %v1201 = vpop.f32.mrb[0].mxu0
        %v1202 = vadd.f32 0.0, %v1201
        %v1203 = vpop.f32.mrb[0].mxu0
        %v1204 = vadd.f32 0.0, %v1203
        %v1205 = vpop.f32.mrb[0].mxu0
        %v1206 = vadd.f32 0.0, %v1205
        %1207 = vmatprep.mubr.bf16.mxu0 %v631
        %1208 = vmatmul.mubr.bf16.gmra.mrb[0].mxu0 %v630
        %v1209 = vpop.f32.mrb[0].mxu0
        %v1210 = vadd.f32 0.0, %v1209
        %v1211 = vpop.f32.mrb[0].mxu0
        %v1212 = vadd.f32 0.0, %v1211
        %v1213 = vpop.f32.mrb[0].mxu0
        %v1214 = vadd.f32 0.0, %v1213
        %v1215 = vpop.f32.mrb[0].mxu0
        %v1216 = vadd.f32 0.0, %v1215
        %1217 = vmatprep.mubr.bf16.mxu0 %v633
        %1218 = vmatmul.mubr.bf16.gmra.mrb[0].mxu0 %v632
        %v1219 = vpop.f32.mrb[0].mxu0
        %v1220 = vadd.f32 0.0, %v1219
        %v1221 = vpop.f32.mrb[0].mxu0
        %v1222 = vadd.f32 0.0, %v1221
        %v1223 = vpop.f32.mrb[0].mxu0
        %v1224 = vadd.f32 0.0, %v1223
        %v1225 = vpop.f32.mrb[0].mxu0
        %v1226 = vadd.f32 0.0, %v1225
        %1227 = vmatprep.mubr.bf16.mxu0 %v635
        %1228 = vmatmul.mubr.bf16.gmra.mrb[0].mxu0 %v634
        %v1229 = vpop.f32.mrb[0].mxu0
        %v1230 = vadd.f32 0.0, %v1229
        %v1231 = vpop.f32.mrb[0].mxu0
        %v1232 = vadd.f32 0.0, %v1231
        %v1233 = vpop.f32.mrb[0].mxu0
        %v1234 = vadd.f32 0.0, %v1233
        %v1235 = vpop.f32.mrb[0].mxu0
        %v1236 = vadd.f32 0.0, %v1235
        %1237 = vmatprep.mubr.bf16.mxu0 %v637
        %1238 = vmatmul.mubr.bf16.gmra.mrb[0].mxu0 %v636
        %v1239 = vpop.f32.mrb[0].mxu0
        %v1240 = vadd.f32 0.0, %v1239
        %v1241 = vpop.f32.mrb[0].mxu0
        %v1242 = vadd.f32 0.0, %v1241
        %v1243 = vpop.f32.mrb[0].mxu0
        %v1244 = vadd.f32 0.0, %v1243
        %v1245 = vpop.f32.mrb[0].mxu0
        %v1246 = vadd.f32 0.0, %v1245
        %1247 = vdwg.mxu0
        %v1248 = vadd.f32 %v526, %v1057
        %v1249 = vadd.f32 %v527, %v1059
        %v1250 = vadd.f32 %v528, %v1170
        %v1251 = vadd.f32 %v529, %v1172
        %v1252 = vadd.f32 %v530, %v1061
        %v1253 = vadd.f32 %v531, %v1063
        %v1254 = vadd.f32 %v532, %v1174
        %v1255 = vadd.f32 %v533, %v1176
        %v1256 = vadd.f32 %v534, %v1067
        %v1257 = vadd.f32 %v535, %v1069
        %v1258 = vadd.f32 %v536, %v1180
        %v1259 = vadd.f32 %v537, %v1182
        %v1260 = vadd.f32 %v538, %v1071
        %v1261 = vadd.f32 %v539, %v1073
        %v1262 = vadd.f32 %v540, %v1184
        %v1263 = vadd.f32 %v541, %v1186
        %v1264 = vadd.f32 %v542, %v1077
        %v1265 = vadd.f32 %v543, %v1079
        %v1266 = vadd.f32 %v544, %v1190
        %v1267 = vadd.f32 %v545, %v1192
        %v1268 = vadd.f32 %v546, %v1081
        %v1269 = vadd.f32 %v547, %v1083
        %v1270 = vadd.f32 %v548, %v1194
        %v1271 = vadd.f32 %v549, %v1196
        %v1272 = vadd.f32 %v550, %v1087
        %v1273 = vadd.f32 %v551, %v1089
        %v1274 = vadd.f32 %v552, %v1200
        %v1275 = vadd.f32 %v553, %v1202
        %v1276 = vadd.f32 %v554, %v1091
        %v1277 = vadd.f32 %v555, %v1093
        %v1278 = vadd.f32 %v556, %v1204
        %v1279 = vadd.f32 %v557, %v1206
        %v1280 = vadd.f32 %v558, %v1097
        %v1281 = vadd.f32 %v559, %v1099
        %v1282 = vadd.f32 %v560, %v1210
        %v1283 = vadd.f32 %v561, %v1212
        %v1284 = vadd.f32 %v562, %v1101
        %v1285 = vadd.f32 %v563, %v1103
        %v1286 = vadd.f32 %v564, %v1214
        %v1287 = vadd.f32 %v565, %v1216
        %v1288 = vadd.f32 %v566, %v1107
        %v1289 = vadd.f32 %v567, %v1109
        %v1290 = vadd.f32 %v568, %v1220
        %v1291 = vadd.f32 %v569, %v1222
        %v1292 = vadd.f32 %v570, %v1111
        %v1293 = vadd.f32 %v571, %v1113
        %v1294 = vadd.f32 %v572, %v1224
        %v1295 = vadd.f32 %v573, %v1226
        %v1296 = vadd.f32 %v574, %v1117
        %v1297 = vadd.f32 %v575, %v1119
        %v1298 = vadd.f32 %v576, %v1230
        %v1299 = vadd.f32 %v577, %v1232
        %v1300 = vadd.f32 %v578, %v1121
        %v1301 = vadd.f32 %v579, %v1123
        %v1302 = vadd.f32 %v580, %v1234
        %v1303 = vadd.f32 %v581, %v1236
        %v1304 = vadd.f32 %v582, %v1127
        %v1305 = vadd.f32 %v583, %v1129
        %v1306 = vadd.f32 %v584, %v1240
        %v1307 = vadd.f32 %v585, %v1242
        %v1308 = vadd.f32 %v586, %v1131
        %v1309 = vadd.f32 %v587, %v1133
        %v1310 = vadd.f32 %v588, %v1244
        %v1311 = vadd.f32 %v589, %v1246
        %1312 = vst [vmem:[#allocation2] sm:$0xff] %v1248
        %1313 = vst [vmem:[#allocation2 + $0x8] sm:$0xff] %v1249
        %1314 = vst [vmem:[#allocation2 + $0x10] sm:$0xff] %v1250
        %1315 = vst [vmem:[#allocation2 + $0x18] sm:$0xff] %v1251
        %1316 = vst [vmem:[#allocation2 + $0x20] sm:$0xff] %v1252
        %1317 = vst [vmem:[#allocation2 + $0x28] sm:$0xff] %v1253
        %1318 = vst [vmem:[#allocation2 + $0x30] sm:$0xff] %v1254
        %1319 = vst [vmem:[#allocation2 + $0x38] sm:$0xff] %v1255
        %1320 = vst [vmem:[#allocation2 + $0x40] sm:$0xff] %v1256
        %1321 = vst [vmem:[#allocation2 + $0x48] sm:$0xff] %v1257
        %1322 = vst [vmem:[#allocation2 + $0x50] sm:$0xff] %v1258
        %1323 = vst [vmem:[#allocation2 + $0x58] sm:$0xff] %v1259
        %1324 = vst [vmem:[#allocation2 + $0x60] sm:$0xff] %v1260
        %1325 = vst [vmem:[#allocation2 + $0x68] sm:$0xff] %v1261
        %1326 = vst [vmem:[#allocation2 + $0x70] sm:$0xff] %v1262
        %1327 = vst [vmem:[#allocation2 + $0x78] sm:$0xff] %v1263
        %1328 = vst [vmem:[#allocation2 + $0x80] sm:$0xff] %v1264
        %1329 = vst [vmem:[#allocation2 + $0x88] sm:$0xff] %v1265
        %1330 = vst [vmem:[#allocation2 + $0x90] sm:$0xff] %v1266
        %1331 = vst [vmem:[#allocation2 + $0x98] sm:$0xff] %v1267
        %1332 = vst [vmem:[#allocation2 + $0xa0] sm:$0xff] %v1268
        %1333 = vst [vmem:[#allocation2 + $0xa8] sm:$0xff] %v1269
        %1334 = vst [vmem:[#allocation2 + $0xb0] sm:$0xff] %v1270
        %1335 = vst [vmem:[#allocation2 + $0xb8] sm:$0xff] %v1271
        %1336 = vst [vmem:[#allocation2 + $0xc0] sm:$0xff] %v1272
        %1337 = vst [vmem:[#allocation2 + $0xc8] sm:$0xff] %v1273
        %1338 = vst [vmem:[#allocation2 + $0xd0] sm:$0xff] %v1274
        %1339 = vst [vmem:[#allocation2 + $0xd8] sm:$0xff] %v1275
        %1340 = vst [vmem:[#allocation2 + $0xe0] sm:$0xff] %v1276
        %1341 = vst [vmem:[#allocation2 + $0xe8] sm:$0xff] %v1277
        %1342 = vst [vmem:[#allocation2 + $0xf0] sm:$0xff] %v1278
        %1343 = vst [vmem:[#allocation2 + $0xf8] sm:$0xff] %v1279
        %1344 = vst [vmem:[#allocation2 + $0x100] sm:$0xff] %v1280
        %1345 = vst [vmem:[#allocation2 + $0x108] sm:$0xff] %v1281
        %1346 = vst [vmem:[#allocation2 + $0x110] sm:$0xff] %v1282
        %1347 = vst [vmem:[#allocation2 + $0x118] sm:$0xff] %v1283
        %1348 = vst [vmem:[#allocation2 + $0x120] sm:$0xff] %v1284
        %1349 = vst [vmem:[#allocation2 + $0x128] sm:$0xff] %v1285
        %1350 = vst [vmem:[#allocation2 + $0x130] sm:$0xff] %v1286
        %1351 = vst [vmem:[#allocation2 + $0x138] sm:$0xff] %v1287
        %1352 = vst [vmem:[#allocation2 + $0x140] sm:$0xff] %v1288
        %1353 = vst [vmem:[#allocation2 + $0x148] sm:$0xff] %v1289
        %1354 = vst [vmem:[#allocation2 + $0x150] sm:$0xff] %v1290
        %1355 = vst [vmem:[#allocation2 + $0x158] sm:$0xff] %v1291
        %1356 = vst [vmem:[#allocation2 + $0x160] sm:$0xff] %v1292
        %1357 = vst [vmem:[#allocation2 + $0x168] sm:$0xff] %v1293
        %1358 = vst [vmem:[#allocation2 + $0x170] sm:$0xff] %v1294
        %1359 = vst [vmem:[#allocation2 + $0x178] sm:$0xff] %v1295
        %1360 = vst [vmem:[#allocation2 + $0x180] sm:$0xff] %v1296
        %1361 = vst [vmem:[#allocation2 + $0x188] sm:$0xff] %v1297
        %1362 = vst [vmem:[#allocation2 + $0x190] sm:$0xff] %v1298
        %1363 = vst [vmem:[#allocation2 + $0x198] sm:$0xff] %v1299
        %1364 = vst [vmem:[#allocation2 + $0x1a0] sm:$0xff] %v1300
        %1365 = vst [vmem:[#allocation2 + $0x1a8] sm:$0xff] %v1301
        %1366 = vst [vmem:[#allocation2 + $0x1b0] sm:$0xff] %v1302
        %1367 = vst [vmem:[#allocation2 + $0x1b8] sm:$0xff] %v1303
        %1368 = vst [vmem:[#allocation2 + $0x1c0] sm:$0xff] %v1304
        %1369 = vst [vmem:[#allocation2 + $0x1c8] sm:$0xff] %v1305
        %1370 = vst [vmem:[#allocation2 + $0x1d0] sm:$0xff] %v1306
        %1371 = vst [vmem:[#allocation2 + $0x1d8] sm:$0xff] %v1307
        %1372 = vst [vmem:[#allocation2 + $0x1e0] sm:$0xff] %v1308
        %1373 = vst [vmem:[#allocation2 + $0x1e8] sm:$0xff] %v1309
        %1374 = vst [vmem:[#allocation2 + $0x1f0] sm:$0xff] %v1310
        %1375 = vst [vmem:[#allocation2 + $0x1f8] sm:$0xff] %v1311
        %p1376 = scmp.eq.s32.totalorder %s23, 3
        // Predicated region
        $region92: #{encoder_forward.1} parent=74 // pred_check
          %p1377 = pneg %p1376
        $region93: #{encoder_forward.1} parent=74 // pred_check_branch
          %1379 = sbr.rel (%p1377) target = $region95
        $region94: #{encoder_forward.1} parent=74 // pred_region
          %v1380 = vld [vmem:[#allocation2] sm:$0xff]
          %v1381 = vld [vmem:[#allocation2 + $0x8] sm:$0xff]
          %v1382 = vld [vmem:[#allocation2 + $0x10] sm:$0xff]
          %v1383 = vld [vmem:[#allocation2 + $0x18] sm:$0xff]
          %v1384 = vld [vmem:[#allocation2 + $0x20] sm:$0xff]
          %v1385 = vld [vmem:[#allocation2 + $0x28] sm:$0xff]
          %v1386 = vld [vmem:[#allocation2 + $0x30] sm:$0xff]
          %v1387 = vld [vmem:[#allocation2 + $0x38] sm:$0xff]
          %v1388 = vld [vmem:[#allocation2 + $0x40] sm:$0xff]
          %v1389 = vld [vmem:[#allocation2 + $0x48] sm:$0xff]
          %v1390 = vld [vmem:[#allocation2 + $0x50] sm:$0xff]
          %v1391 = vld [vmem:[#allocation2 + $0x58] sm:$0xff]
          %v1392 = vld [vmem:[#allocation2 + $0x60] sm:$0xff]
          %v1393 = vld [vmem:[#allocation2 + $0x68] sm:$0xff]
          %v1394 = vld [vmem:[#allocation2 + $0x70] sm:$0xff]
          %v1395 = vld [vmem:[#allocation2 + $0x78] sm:$0xff]
          %v1396 = vld [vmem:[#allocation2 + $0x80] sm:$0xff]
          %v1397 = vld [vmem:[#allocation2 + $0x88] sm:$0xff]
          %v1398 = vld [vmem:[#allocation2 + $0x90] sm:$0xff]
          %v1399 = vld [vmem:[#allocation2 + $0x98] sm:$0xff]
          %v1400 = vld [vmem:[#allocation2 + $0xa0] sm:$0xff]
          %v1401 = vld [vmem:[#allocation2 + $0xa8] sm:$0xff]
          %v1402 = vld [vmem:[#allocation2 + $0xb0] sm:$0xff]
          %v1403 = vld [vmem:[#allocation2 + $0xb8] sm:$0xff]
          %v1404 = vld [vmem:[#allocation2 + $0xc0] sm:$0xff]
          %v1405 = vld [vmem:[#allocation2 + $0xc8] sm:$0xff]
          %v1406 = vld [vmem:[#allocation2 + $0xd0] sm:$0xff]
          %v1407 = vld [vmem:[#allocation2 + $0xd8] sm:$0xff]
          %v1408 = vld [vmem:[#allocation2 + $0xe0] sm:$0xff]
          %v1409 = vld [vmem:[#allocation2 + $0xe8] sm:$0xff]
          %v1410 = vld [vmem:[#allocation2 + $0xf0] sm:$0xff]
          %v1411 = vld [vmem:[#allocation2 + $0xf8] sm:$0xff]
          %v1412 = vld [vmem:[#allocation2 + $0x100] sm:$0xff]
          %v1413 = vld [vmem:[#allocation2 + $0x108] sm:$0xff]
          %v1414 = vld [vmem:[#allocation2 + $0x110] sm:$0xff]
          %v1415 = vld [vmem:[#allocation2 + $0x118] sm:$0xff]
          %v1416 = vld [vmem:[#allocation2 + $0x120] sm:$0xff]
          %v1417 = vld [vmem:[#allocation2 + $0x128] sm:$0xff]
          %v1418 = vld [vmem:[#allocation2 + $0x130] sm:$0xff]
          %v1419 = vld [vmem:[#allocation2 + $0x138] sm:$0xff]
          %v1420 = vld [vmem:[#allocation2 + $0x140] sm:$0xff]
          %v1421 = vld [vmem:[#allocation2 + $0x148] sm:$0xff]
          %v1422 = vld [vmem:[#allocation2 + $0x150] sm:$0xff]
          %v1423 = vld [vmem:[#allocation2 + $0x158] sm:$0xff]
          %v1424 = vld [vmem:[#allocation2 + $0x160] sm:$0xff]
          %v1425 = vld [vmem:[#allocation2 + $0x168] sm:$0xff]
          %v1426 = vld [vmem:[#allocation2 + $0x170] sm:$0xff]
          %v1427 = vld [vmem:[#allocation2 + $0x178] sm:$0xff]
          %v1428 = vld [vmem:[#allocation2 + $0x180] sm:$0xff]
          %v1429 = vld [vmem:[#allocation2 + $0x188] sm:$0xff]
          %v1430 = vld [vmem:[#allocation2 + $0x190] sm:$0xff]
          %v1431 = vld [vmem:[#allocation2 + $0x198] sm:$0xff]
          %v1432 = vld [vmem:[#allocation2 + $0x1a0] sm:$0xff]
          %v1433 = vld [vmem:[#allocation2 + $0x1a8] sm:$0xff]
          %v1434 = vld [vmem:[#allocation2 + $0x1b0] sm:$0xff]
          %v1435 = vld [vmem:[#allocation2 + $0x1b8] sm:$0xff]
          %v1436 = vld [vmem:[#allocation2 + $0x1c0] sm:$0xff]
          %v1437 = vld [vmem:[#allocation2 + $0x1c8] sm:$0xff]
          %v1438 = vld [vmem:[#allocation2 + $0x1d0] sm:$0xff]
          %v1439 = vld [vmem:[#allocation2 + $0x1d8] sm:$0xff]
          %v1440 = vld [vmem:[#allocation2 + $0x1e0] sm:$0xff]
          %v1441 = vld [vmem:[#allocation2 + $0x1e8] sm:$0xff]
          %v1442 = vld [vmem:[#allocation2 + $0x1f0] sm:$0xff]
          %v1443 = vld [vmem:[#allocation2 + $0x1f8] sm:$0xff]
          %v1444 = vld [vmem:[%s2] sm:$0xf]
          %v1446 = vlaneseq
          %v1447 = vshrl.u32 %v1446, 7
          %v1448 = vsub.s32 0, %v1447
          %v1449 = vrot.slane %v1444, %v1448
          %v1450 = vlaneseq
          %v1451 = vshrl.u32 %v1450, 7
          %v1452 = vsub.s32 1, %v1451
          %v1453 = vrot.slane %v1444, %v1452
          %v1454 = vlaneseq
          %v1455 = vshrl.u32 %v1454, 7
          %v1456 = vsub.s32 2, %v1455
          %v1457 = vrot.slane %v1444, %v1456
          %v1458 = vlaneseq
          %v1459 = vshrl.u32 %v1458, 7
          %v1460 = vsub.s32 3, %v1459
          %v1461 = vrot.slane %v1444, %v1460
          %v1466 = vadd.f32 %v1380, %v1449
          %v1467 = vadd.f32 %v1381, %v1453
          %v1468 = vadd.f32 %v1382, %v1457
          %v1469 = vadd.f32 %v1383, %v1461
          %v1470 = vadd.f32 %v1384, %v1449
          %v1471 = vadd.f32 %v1385, %v1453
          %v1472 = vadd.f32 %v1386, %v1457
          %v1473 = vadd.f32 %v1387, %v1461
          %v1474 = vadd.f32 %v1388, %v1449
          %v1475 = vadd.f32 %v1389, %v1453
          %v1476 = vadd.f32 %v1390, %v1457
          %v1477 = vadd.f32 %v1391, %v1461
          %v1478 = vadd.f32 %v1392, %v1449
          %v1479 = vadd.f32 %v1393, %v1453
          %v1480 = vadd.f32 %v1394, %v1457
          %v1481 = vadd.f32 %v1395, %v1461
          %v1482 = vadd.f32 %v1396, %v1449
          %v1483 = vadd.f32 %v1397, %v1453
          %v1484 = vadd.f32 %v1398, %v1457
          %v1485 = vadd.f32 %v1399, %v1461
          %v1486 = vadd.f32 %v1400, %v1449
          %v1487 = vadd.f32 %v1401, %v1453
          %v1488 = vadd.f32 %v1402, %v1457
          %v1489 = vadd.f32 %v1403, %v1461
          %v1490 = vadd.f32 %v1404, %v1449
          %v1491 = vadd.f32 %v1405, %v1453
          %v1492 = vadd.f32 %v1406, %v1457
          %v1493 = vadd.f32 %v1407, %v1461
          %v1494 = vadd.f32 %v1408, %v1449
          %v1495 = vadd.f32 %v1409, %v1453
          %v1496 = vadd.f32 %v1410, %v1457
          %v1497 = vadd.f32 %v1411, %v1461
          %v1498 = vadd.f32 %v1412, %v1449
          %v1499 = vadd.f32 %v1413, %v1453
          %v1500 = vadd.f32 %v1414, %v1457
          %v1501 = vadd.f32 %v1415, %v1461
          %v1502 = vadd.f32 %v1416, %v1449
          %v1503 = vadd.f32 %v1417, %v1453
          %v1504 = vadd.f32 %v1418, %v1457
          %v1505 = vadd.f32 %v1419, %v1461
          %v1506 = vadd.f32 %v1420, %v1449
          %v1507 = vadd.f32 %v1421, %v1453
          %v1508 = vadd.f32 %v1422, %v1457
          %v1509 = vadd.f32 %v1423, %v1461
          %v1510 = vadd.f32 %v1424, %v1449
          %v1511 = vadd.f32 %v1425, %v1453
          %v1512 = vadd.f32 %v1426, %v1457
          %v1513 = vadd.f32 %v1427, %v1461
          %v1514 = vadd.f32 %v1428, %v1449
          %v1515 = vadd.f32 %v1429, %v1453
          %v1516 = vadd.f32 %v1430, %v1457
          %v1517 = vadd.f32 %v1431, %v1461
          %v1518 = vadd.f32 %v1432, %v1449
          %v1519 = vadd.f32 %v1433, %v1453
          %v1520 = vadd.f32 %v1434, %v1457
          %v1521 = vadd.f32 %v1435, %v1461
          %v1522 = vadd.f32 %v1436, %v1449
          %v1523 = vadd.f32 %v1437, %v1453
          %v1524 = vadd.f32 %v1438, %v1457
          %v1525 = vadd.f32 %v1439, %v1461
          %v1526 = vadd.f32 %v1440, %v1449
          %v1527 = vadd.f32 %v1441, %v1453
          %v1528 = vadd.f32 %v1442, %v1457
          %v1529 = vadd.f32 %v1443, %v1461
          %v1530 = vmul.f32 %v1466, 0.2
          %v1531 = vmul.f32 %v1467, 0.2
          %v1532 = vmul.f32 %v1468, 0.2
          %v1533 = vmul.f32 %v1469, 0.2
          %v1534 = vmul.f32 %v1470, 0.2
          %v1535 = vmul.f32 %v1471, 0.2
          %v1536 = vmul.f32 %v1472, 0.2
          %v1537 = vmul.f32 %v1473, 0.2
          %v1538 = vmul.f32 %v1474, 0.2
          %v1539 = vmul.f32 %v1475, 0.2
          %v1540 = vmul.f32 %v1476, 0.2
          %v1541 = vmul.f32 %v1477, 0.2
          %v1542 = vmul.f32 %v1478, 0.2
          %v1543 = vmul.f32 %v1479, 0.2
          %v1544 = vmul.f32 %v1480, 0.2
          %v1545 = vmul.f32 %v1481, 0.2
          %v1546 = vmul.f32 %v1482, 0.2
          %v1547 = vmul.f32 %v1483, 0.2
          %v1548 = vmul.f32 %v1484, 0.2
          %v1549 = vmul.f32 %v1485, 0.2
          %v1550 = vmul.f32 %v1486, 0.2
          %v1551 = vmul.f32 %v1487, 0.2
          %v1552 = vmul.f32 %v1488, 0.2
          %v1553 = vmul.f32 %v1489, 0.2
          %v1554 = vmul.f32 %v1490, 0.2
          %v1555 = vmul.f32 %v1491, 0.2
          %v1556 = vmul.f32 %v1492, 0.2
          %v1557 = vmul.f32 %v1493, 0.2
          %v1558 = vmul.f32 %v1494, 0.2
          %v1559 = vmul.f32 %v1495, 0.2
          %v1560 = vmul.f32 %v1496, 0.2
          %v1561 = vmul.f32 %v1497, 0.2
          %v1562 = vmul.f32 %v1498, 0.2
          %v1563 = vmul.f32 %v1499, 0.2
          %v1564 = vmul.f32 %v1500, 0.2
          %v1565 = vmul.f32 %v1501, 0.2
          %v1566 = vmul.f32 %v1502, 0.2
          %v1567 = vmul.f32 %v1503, 0.2
          %v1568 = vmul.f32 %v1504, 0.2
          %v1569 = vmul.f32 %v1505, 0.2
          %v1570 = vmul.f32 %v1506, 0.2
          %v1571 = vmul.f32 %v1507, 0.2
          %v1572 = vmul.f32 %v1508, 0.2
          %v1573 = vmul.f32 %v1509, 0.2
          %v1574 = vmul.f32 %v1510, 0.2
          %v1575 = vmul.f32 %v1511, 0.2
          %v1576 = vmul.f32 %v1512, 0.2
          %v1577 = vmul.f32 %v1513, 0.2
          %v1578 = vmul.f32 %v1514, 0.2
          %v1579 = vmul.f32 %v1515, 0.2
          %v1580 = vmul.f32 %v1516, 0.2
          %v1581 = vmul.f32 %v1517, 0.2
          %v1582 = vmul.f32 %v1518, 0.2
          %v1583 = vmul.f32 %v1519, 0.2
          %v1584 = vmul.f32 %v1520, 0.2
          %v1585 = vmul.f32 %v1521, 0.2
          %v1586 = vmul.f32 %v1522, 0.2
          %v1587 = vmul.f32 %v1523, 0.2
          %v1588 = vmul.f32 %v1524, 0.2
          %v1589 = vmul.f32 %v1525, 0.2
          %v1590 = vmul.f32 %v1526, 0.2
          %v1591 = vmul.f32 %v1527, 0.2
          %v1592 = vmul.f32 %v1528, 0.2
          %v1593 = vmul.f32 %v1529, 0.2
          %v1594 = vmax.f32 %v1466, %v1530
          %v1595 = vmax.f32 %v1467, %v1531
          %v1596 = vmax.f32 %v1468, %v1532
          %v1597 = vmax.f32 %v1469, %v1533
          %v1598 = vmax.f32 %v1470, %v1534
          %v1599 = vmax.f32 %v1471, %v1535
          %v1600 = vmax.f32 %v1472, %v1536
          %v1601 = vmax.f32 %v1473, %v1537
          %v1602 = vmax.f32 %v1474, %v1538
          %v1603 = vmax.f32 %v1475, %v1539
          %v1604 = vmax.f32 %v1476, %v1540
          %v1605 = vmax.f32 %v1477, %v1541
          %v1606 = vmax.f32 %v1478, %v1542
          %v1607 = vmax.f32 %v1479, %v1543
          %v1608 = vmax.f32 %v1480, %v1544
          %v1609 = vmax.f32 %v1481, %v1545
          %v1610 = vmax.f32 %v1482, %v1546
          %v1611 = vmax.f32 %v1483, %v1547
          %v1612 = vmax.f32 %v1484, %v1548
          %v1613 = vmax.f32 %v1485, %v1549
          %v1614 = vmax.f32 %v1486, %v1550
          %v1615 = vmax.f32 %v1487, %v1551
          %v1616 = vmax.f32 %v1488, %v1552
          %v1617 = vmax.f32 %v1489, %v1553
          %v1618 = vmax.f32 %v1490, %v1554
          %v1619 = vmax.f32 %v1491, %v1555
          %v1620 = vmax.f32 %v1492, %v1556
          %v1621 = vmax.f32 %v1493, %v1557
          %v1622 = vmax.f32 %v1494, %v1558
          %v1623 = vmax.f32 %v1495, %v1559
          %v1624 = vmax.f32 %v1496, %v1560
          %v1625 = vmax.f32 %v1497, %v1561
          %v1626 = vmax.f32 %v1498, %v1562
          %v1627 = vmax.f32 %v1499, %v1563
          %v1628 = vmax.f32 %v1500, %v1564
          %v1629 = vmax.f32 %v1501, %v1565
          %v1630 = vmax.f32 %v1502, %v1566
          %v1631 = vmax.f32 %v1503, %v1567
          %v1632 = vmax.f32 %v1504, %v1568
          %v1633 = vmax.f32 %v1505, %v1569
          %v1634 = vmax.f32 %v1506, %v1570
          %v1635 = vmax.f32 %v1507, %v1571
          %v1636 = vmax.f32 %v1508, %v1572
          %v1637 = vmax.f32 %v1509, %v1573
          %v1638 = vmax.f32 %v1510, %v1574
          %v1639 = vmax.f32 %v1511, %v1575
          %v1640 = vmax.f32 %v1512, %v1576
          %v1641 = vmax.f32 %v1513, %v1577
          %v1642 = vmax.f32 %v1514, %v1578
          %v1643 = vmax.f32 %v1515, %v1579
          %v1644 = vmax.f32 %v1516, %v1580
          %v1645 = vmax.f32 %v1517, %v1581
          %v1646 = vmax.f32 %v1518, %v1582
          %v1647 = vmax.f32 %v1519, %v1583
          %v1648 = vmax.f32 %v1520, %v1584
          %v1649 = vmax.f32 %v1521, %v1585
          %v1650 = vmax.f32 %v1522, %v1586
          %v1651 = vmax.f32 %v1523, %v1587
          %v1652 = vmax.f32 %v1524, %v1588
          %v1653 = vmax.f32 %v1525, %v1589
          %v1654 = vmax.f32 %v1526, %v1590
          %v1655 = vmax.f32 %v1527, %v1591
          %v1656 = vmax.f32 %v1528, %v1592
          %v1657 = vmax.f32 %v1529, %v1593
          %v1658 = vpack.c.bf16 %v1598, %v1594
          %v1659 = vpack.c.bf16 %v1599, %v1595
          %v1660 = vpack.c.bf16 %v1600, %v1596
          %v1661 = vpack.c.bf16 %v1601, %v1597
          %v1662 = vpack.c.bf16 %v1606, %v1602
          %v1663 = vpack.c.bf16 %v1607, %v1603
          %v1664 = vpack.c.bf16 %v1608, %v1604
          %v1665 = vpack.c.bf16 %v1609, %v1605
          %v1666 = vpack.c.bf16 %v1614, %v1610
          %v1667 = vpack.c.bf16 %v1615, %v1611
          %v1668 = vpack.c.bf16 %v1616, %v1612
          %v1669 = vpack.c.bf16 %v1617, %v1613
          %v1670 = vpack.c.bf16 %v1622, %v1618
          %v1671 = vpack.c.bf16 %v1623, %v1619
          %v1672 = vpack.c.bf16 %v1624, %v1620
          %v1673 = vpack.c.bf16 %v1625, %v1621
          %v1674 = vpack.c.bf16 %v1630, %v1626
          %v1675 = vpack.c.bf16 %v1631, %v1627
          %v1676 = vpack.c.bf16 %v1632, %v1628
          %v1677 = vpack.c.bf16 %v1633, %v1629
          %v1678 = vpack.c.bf16 %v1638, %v1634
          %v1679 = vpack.c.bf16 %v1639, %v1635
          %v1680 = vpack.c.bf16 %v1640, %v1636
          %v1681 = vpack.c.bf16 %v1641, %v1637
          %v1682 = vpack.c.bf16 %v1646, %v1642
          %v1683 = vpack.c.bf16 %v1647, %v1643
          %v1684 = vpack.c.bf16 %v1648, %v1644
          %v1685 = vpack.c.bf16 %v1649, %v1645
          %v1686 = vpack.c.bf16 %v1654, %v1650
          %v1687 = vpack.c.bf16 %v1655, %v1651
          %v1688 = vpack.c.bf16 %v1656, %v1652
          %v1689 = vpack.c.bf16 %v1657, %v1653
          %v1690 = vld [vmem:[#allocation4] sm:$0xff]
          %v1691 = vld [vmem:[#allocation4 + $0x8] sm:$0xff]
          %v1692 = vld [vmem:[#allocation4 + $0x10] sm:$0xff]
          %v1693 = vld [vmem:[#allocation4 + $0x18] sm:$0xff]
          %v1694 = vld [vmem:[#allocation4 + $0x20] sm:$0xff]
          %v1695 = vld [vmem:[#allocation4 + $0x28] sm:$0xff]
          %v1696 = vld [vmem:[#allocation4 + $0x30] sm:$0xff]
          %v1697 = vld [vmem:[#allocation4 + $0x38] sm:$0xff]
          %v1698 = vld [vmem:[#allocation4 + $0x40] sm:$0xff]
          %v1699 = vld [vmem:[#allocation4 + $0x48] sm:$0xff]
          %v1700 = vld [vmem:[#allocation4 + $0x50] sm:$0xff]
          %v1701 = vld [vmem:[#allocation4 + $0x58] sm:$0xff]
          %v1702 = vld [vmem:[#allocation4 + $0x60] sm:$0xff]
          %v1703 = vld [vmem:[#allocation4 + $0x68] sm:$0xff]
          %v1704 = vld [vmem:[#allocation4 + $0x70] sm:$0xff]
          %v1705 = vld [vmem:[#allocation4 + $0x78] sm:$0xff]
          %v1706 = vld [vmem:[#allocation4 + $0x80] sm:$0xff]
          %v1707 = vld [vmem:[#allocation4 + $0x88] sm:$0xff]
          %v1708 = vld [vmem:[#allocation4 + $0x90] sm:$0xff]
          %v1709 = vld [vmem:[#allocation4 + $0x98] sm:$0xff]
          %v1710 = vld [vmem:[#allocation4 + $0xa0] sm:$0xff]
          %v1711 = vld [vmem:[#allocation4 + $0xa8] sm:$0xff]
          %v1712 = vld [vmem:[#allocation4 + $0xb0] sm:$0xff]
          %v1713 = vld [vmem:[#allocation4 + $0xb8] sm:$0xff]
          %v1714 = vld [vmem:[#allocation4 + $0xc0] sm:$0xff]
          %v1715 = vld [vmem:[#allocation4 + $0xc8] sm:$0xff]
          %v1716 = vld [vmem:[#allocation4 + $0xd0] sm:$0xff]
          %v1717 = vld [vmem:[#allocation4 + $0xd8] sm:$0xff]
          %v1718 = vld [vmem:[#allocation4 + $0xe0] sm:$0xff]
          %v1719 = vld [vmem:[#allocation4 + $0xe8] sm:$0xff]
          %v1720 = vld [vmem:[#allocation4 + $0xf0] sm:$0xff]
          %v1721 = vld [vmem:[#allocation4 + $0xf8] sm:$0xff]
          %v1722 = vld [vmem:[#allocation4 + $0x100] sm:$0xff]
          %v1723 = vld [vmem:[#allocation4 + $0x108] sm:$0xff]
          %v1724 = vld [vmem:[#allocation4 + $0x110] sm:$0xff]
          %v1725 = vld [vmem:[#allocation4 + $0x118] sm:$0xff]
          %v1726 = vld [vmem:[#allocation4 + $0x120] sm:$0xff]
          %v1727 = vld [vmem:[#allocation4 + $0x128] sm:$0xff]
          %v1728 = vld [vmem:[#allocation4 + $0x130] sm:$0xff]
          %v1729 = vld [vmem:[#allocation4 + $0x138] sm:$0xff]
          %v1730 = vld [vmem:[#allocation4 + $0x140] sm:$0xff]
          %v1731 = vld [vmem:[#allocation4 + $0x148] sm:$0xff]
          %v1732 = vld [vmem:[#allocation4 + $0x150] sm:$0xff]
          %v1733 = vld [vmem:[#allocation4 + $0x158] sm:$0xff]
          %v1734 = vld [vmem:[#allocation4 + $0x160] sm:$0xff]
          %v1735 = vld [vmem:[#allocation4 + $0x168] sm:$0xff]
          %v1736 = vld [vmem:[#allocation4 + $0x170] sm:$0xff]
          %v1737 = vld [vmem:[#allocation4 + $0x178] sm:$0xff]
          %v1738 = vld [vmem:[#allocation4 + $0x180] sm:$0xff]
          %v1739 = vld [vmem:[#allocation4 + $0x188] sm:$0xff]
          %v1740 = vld [vmem:[#allocation4 + $0x190] sm:$0xff]
          %v1741 = vld [vmem:[#allocation4 + $0x198] sm:$0xff]
          %v1742 = vld [vmem:[#allocation4 + $0x1a0] sm:$0xff]
          %v1743 = vld [vmem:[#allocation4 + $0x1a8] sm:$0xff]
          %v1744 = vld [vmem:[#allocation4 + $0x1b0] sm:$0xff]
          %v1745 = vld [vmem:[#allocation4 + $0x1b8] sm:$0xff]
          %v1746 = vld [vmem:[#allocation4 + $0x1c0] sm:$0xff]
          %v1747 = vld [vmem:[#allocation4 + $0x1c8] sm:$0xff]
          %v1748 = vld [vmem:[#allocation4 + $0x1d0] sm:$0xff]
          %v1749 = vld [vmem:[#allocation4 + $0x1d8] sm:$0xff]
          %v1750 = vld [vmem:[#allocation4 + $0x1e0] sm:$0xff]
          %v1751 = vld [vmem:[#allocation4 + $0x1e8] sm:$0xff]
          %v1752 = vld [vmem:[#allocation4 + $0x1f0] sm:$0xff]
          %v1753 = vld [vmem:[#allocation4 + $0x1f8] sm:$0xff]
          %v1754 = vld [vmem:[#allocation4 + $0x200] sm:$0xff]
          %v1755 = vld [vmem:[#allocation4 + $0x208] sm:$0xff]
          %v1756 = vld [vmem:[#allocation4 + $0x210] sm:$0xff]
          %v1757 = vld [vmem:[#allocation4 + $0x218] sm:$0xff]
          %v1758 = vld [vmem:[#allocation4 + $0x220] sm:$0xff]
          %v1759 = vld [vmem:[#allocation4 + $0x228] sm:$0xff]
          %v1760 = vld [vmem:[#allocation4 + $0x230] sm:$0xff]
          %v1761 = vld [vmem:[#allocation4 + $0x238] sm:$0xff]
          %v1762 = vld [vmem:[#allocation4 + $0x240] sm:$0xff]
          %v1763 = vld [vmem:[#allocation4 + $0x248] sm:$0xff]
          %v1764 = vld [vmem:[#allocation4 + $0x250] sm:$0xff]
          %v1765 = vld [vmem:[#allocation4 + $0x258] sm:$0xff]
          %v1766 = vld [vmem:[#allocation4 + $0x260] sm:$0xff]
          %v1767 = vld [vmem:[#allocation4 + $0x268] sm:$0xff]
          %v1768 = vld [vmem:[#allocation4 + $0x270] sm:$0xff]
          %v1769 = vld [vmem:[#allocation4 + $0x278] sm:$0xff]
          %v1770 = vld [vmem:[#allocation4 + $0x280] sm:$0xff]
          %v1771 = vld [vmem:[#allocation4 + $0x288] sm:$0xff]
          %v1772 = vld [vmem:[#allocation4 + $0x290] sm:$0xff]
          %v1773 = vld [vmem:[#allocation4 + $0x298] sm:$0xff]
          %v1774 = vld [vmem:[#allocation4 + $0x2a0] sm:$0xff]
          %v1775 = vld [vmem:[#allocation4 + $0x2a8] sm:$0xff]
          %v1776 = vld [vmem:[#allocation4 + $0x2b0] sm:$0xff]
          %v1777 = vld [vmem:[#allocation4 + $0x2b8] sm:$0xff]
          %v1778 = vld [vmem:[#allocation4 + $0x2c0] sm:$0xff]
          %v1779 = vld [vmem:[#allocation4 + $0x2c8] sm:$0xff]
          %v1780 = vld [vmem:[#allocation4 + $0x2d0] sm:$0xff]
          %v1781 = vld [vmem:[#allocation4 + $0x2d8] sm:$0xff]
          %v1782 = vld [vmem:[#allocation4 + $0x2e0] sm:$0xff]
          %v1783 = vld [vmem:[#allocation4 + $0x2e8] sm:$0xff]
          %v1784 = vld [vmem:[#allocation4 + $0x2f0] sm:$0xff]
          %v1785 = vld [vmem:[#allocation4 + $0x2f8] sm:$0xff]
          %v1786 = vld [vmem:[#allocation4 + $0x300] sm:$0xff]
          %v1787 = vld [vmem:[#allocation4 + $0x308] sm:$0xff]
          %v1788 = vld [vmem:[#allocation4 + $0x310] sm:$0xff]
          %v1789 = vld [vmem:[#allocation4 + $0x318] sm:$0xff]
          %v1790 = vld [vmem:[#allocation4 + $0x320] sm:$0xff]
          %v1791 = vld [vmem:[#allocation4 + $0x328] sm:$0xff]
          %v1792 = vld [vmem:[#allocation4 + $0x330] sm:$0xff]
          %v1793 = vld [vmem:[#allocation4 + $0x338] sm:$0xff]
          %v1794 = vld [vmem:[#allocation4 + $0x340] sm:$0xff]
          %v1795 = vld [vmem:[#allocation4 + $0x348] sm:$0xff]
          %v1796 = vld [vmem:[#allocation4 + $0x350] sm:$0xff]
          %v1797 = vld [vmem:[#allocation4 + $0x358] sm:$0xff]
          %v1798 = vld [vmem:[#allocation4 + $0x360] sm:$0xff]
          %v1799 = vld [vmem:[#allocation4 + $0x368] sm:$0xff]
          %v1800 = vld [vmem:[#allocation4 + $0x370] sm:$0xff]
          %v1801 = vld [vmem:[#allocation4 + $0x378] sm:$0xff]
          %v1802 = vld [vmem:[#allocation4 + $0x380] sm:$0xff]
          %v1803 = vld [vmem:[#allocation4 + $0x388] sm:$0xff]
          %v1804 = vld [vmem:[#allocation4 + $0x390] sm:$0xff]
          %v1805 = vld [vmem:[#allocation4 + $0x398] sm:$0xff]
          %v1806 = vld [vmem:[#allocation4 + $0x3a0] sm:$0xff]
          %v1807 = vld [vmem:[#allocation4 + $0x3a8] sm:$0xff]
          %v1808 = vld [vmem:[#allocation4 + $0x3b0] sm:$0xff]
          %v1809 = vld [vmem:[#allocation4 + $0x3b8] sm:$0xff]
          %v1810 = vld [vmem:[#allocation4 + $0x3c0] sm:$0xff]
          %v1811 = vld [vmem:[#allocation4 + $0x3c8] sm:$0xff]
          %v1812 = vld [vmem:[#allocation4 + $0x3d0] sm:$0xff]
          %v1813 = vld [vmem:[#allocation4 + $0x3d8] sm:$0xff]
          %v1814 = vld [vmem:[#allocation4 + $0x3e0] sm:$0xff]
          %v1815 = vld [vmem:[#allocation4 + $0x3e8] sm:$0xff]
          %v1816 = vld [vmem:[#allocation4 + $0x3f0] sm:$0xff]
          %v1817 = vld [vmem:[#allocation4 + $0x3f8] sm:$0xff]
          %v1818 = vld [vmem:[%s4] sm:$0xf]
          %v1820 = vlaneseq
          %v1821 = vshrl.u32 %v1820, 7
          %v1822 = vsub.s32 0, %v1821
          %v1823 = vrot.slane %v1818, %v1822
          %v1824 = vlaneseq
          %v1825 = vshrl.u32 %v1824, 7
          %v1826 = vsub.s32 1, %v1825
          %v1827 = vrot.slane %v1818, %v1826
          %v1828 = vlaneseq
          %v1829 = vshrl.u32 %v1828, 7
          %v1830 = vsub.s32 2, %v1829
          %v1831 = vrot.slane %v1818, %v1830
          %v1832 = vlaneseq
          %v1833 = vshrl.u32 %v1832, 7
          %v1834 = vsub.s32 3, %v1833
          %v1835 = vrot.slane %v1818, %v1834
          %v1968 = vunpack.c.l.b16 %v1690
          %v1969 = vunpack.c.h.b16 %v1690
          %v1970 = vunpack.c.l.b16 %v1691
          %v1971 = vunpack.c.h.b16 %v1691
          %v1972 = vunpack.c.l.b16 %v1692
          %v1973 = vunpack.c.h.b16 %v1692
          %v1974 = vunpack.c.l.b16 %v1693
          %v1975 = vunpack.c.h.b16 %v1693
          %v1976 = vunpack.c.l.b16 %v1694
          %v1977 = vunpack.c.h.b16 %v1694
          %v1978 = vunpack.c.l.b16 %v1695
          %v1979 = vunpack.c.h.b16 %v1695
          %v1980 = vunpack.c.l.b16 %v1696
          %v1981 = vunpack.c.h.b16 %v1696
          %v1982 = vunpack.c.l.b16 %v1697
          %v1983 = vunpack.c.h.b16 %v1697
          %v1984 = vunpack.c.l.b16 %v1698
          %v1985 = vunpack.c.h.b16 %v1698
          %v1986 = vunpack.c.l.b16 %v1699
          %v1987 = vunpack.c.h.b16 %v1699
          %v1988 = vunpack.c.l.b16 %v1700
          %v1989 = vunpack.c.h.b16 %v1700
          %v1990 = vunpack.c.l.b16 %v1701
          %v1991 = vunpack.c.h.b16 %v1701
          %v1992 = vunpack.c.l.b16 %v1702
          %v1993 = vunpack.c.h.b16 %v1702
          %v1994 = vunpack.c.l.b16 %v1703
          %v1995 = vunpack.c.h.b16 %v1703
          %v1996 = vunpack.c.l.b16 %v1704
          %v1997 = vunpack.c.h.b16 %v1704
          %v1998 = vunpack.c.l.b16 %v1705
          %v1999 = vunpack.c.h.b16 %v1705
          %v2000 = vunpack.c.l.b16 %v1706
          %v2001 = vunpack.c.h.b16 %v1706
          %v2002 = vunpack.c.l.b16 %v1707
          %v2003 = vunpack.c.h.b16 %v1707
          %v2004 = vunpack.c.l.b16 %v1708
          %v2005 = vunpack.c.h.b16 %v1708
          %v2006 = vunpack.c.l.b16 %v1709
          %v2007 = vunpack.c.h.b16 %v1709
          %v2008 = vunpack.c.l.b16 %v1710
          %v2009 = vunpack.c.h.b16 %v1710
          %v2010 = vunpack.c.l.b16 %v1711
          %v2011 = vunpack.c.h.b16 %v1711
          %v2012 = vunpack.c.l.b16 %v1712
          %v2013 = vunpack.c.h.b16 %v1712
          %v2014 = vunpack.c.l.b16 %v1713
          %v2015 = vunpack.c.h.b16 %v1713
          %v2016 = vunpack.c.l.b16 %v1714
          %v2017 = vunpack.c.h.b16 %v1714
          %v2018 = vunpack.c.l.b16 %v1715
          %v2019 = vunpack.c.h.b16 %v1715
          %v2020 = vunpack.c.l.b16 %v1716
          %v2021 = vunpack.c.h.b16 %v1716
          %v2022 = vunpack.c.l.b16 %v1717
          %v2023 = vunpack.c.h.b16 %v1717
          %v2024 = vunpack.c.l.b16 %v1718
          %v2025 = vunpack.c.h.b16 %v1718
          %v2026 = vunpack.c.l.b16 %v1719
          %v2027 = vunpack.c.h.b16 %v1719
          %v2028 = vunpack.c.l.b16 %v1720
          %v2029 = vunpack.c.h.b16 %v1720
          %v2030 = vunpack.c.l.b16 %v1721
          %v2031 = vunpack.c.h.b16 %v1721
          %v2032 = vunpack.c.l.b16 %v1722
          %v2033 = vunpack.c.h.b16 %v1722
          %v2034 = vunpack.c.l.b16 %v1723
          %v2035 = vunpack.c.h.b16 %v1723
          %v2036 = vunpack.c.l.b16 %v1724
          %v2037 = vunpack.c.h.b16 %v1724
          %v2038 = vunpack.c.l.b16 %v1725
          %v2039 = vunpack.c.h.b16 %v1725
          %v2040 = vunpack.c.l.b16 %v1726
          %v2041 = vunpack.c.h.b16 %v1726
          %v2042 = vunpack.c.l.b16 %v1727
          %v2043 = vunpack.c.h.b16 %v1727
          %v2044 = vunpack.c.l.b16 %v1728
          %v2045 = vunpack.c.h.b16 %v1728
          %v2046 = vunpack.c.l.b16 %v1729
          %v2047 = vunpack.c.h.b16 %v1729
          %v2048 = vunpack.c.l.b16 %v1730
          %v2049 = vunpack.c.h.b16 %v1730
          %v2050 = vunpack.c.l.b16 %v1731
          %v2051 = vunpack.c.h.b16 %v1731
          %v2052 = vunpack.c.l.b16 %v1732
          %v2053 = vunpack.c.h.b16 %v1732
          %v2054 = vunpack.c.l.b16 %v1733
          %v2055 = vunpack.c.h.b16 %v1733
          %v2056 = vunpack.c.l.b16 %v1734
          %v2057 = vunpack.c.h.b16 %v1734
          %v2058 = vunpack.c.l.b16 %v1735
          %v2059 = vunpack.c.h.b16 %v1735
          %v2060 = vunpack.c.l.b16 %v1736
          %v2061 = vunpack.c.h.b16 %v1736
          %v2062 = vunpack.c.l.b16 %v1737
          %v2063 = vunpack.c.h.b16 %v1737
          %v2064 = vunpack.c.l.b16 %v1738
          %v2065 = vunpack.c.h.b16 %v1738
          %v2066 = vunpack.c.l.b16 %v1739
          %v2067 = vunpack.c.h.b16 %v1739
          %v2068 = vunpack.c.l.b16 %v1740
          %v2069 = vunpack.c.h.b16 %v1740
          %v2070 = vunpack.c.l.b16 %v1741
          %v2071 = vunpack.c.h.b16 %v1741
          %v2072 = vunpack.c.l.b16 %v1742
          %v2073 = vunpack.c.h.b16 %v1742
          %v2074 = vunpack.c.l.b16 %v1743
          %v2075 = vunpack.c.h.b16 %v1743
          %v2076 = vunpack.c.l.b16 %v1744
          %v2077 = vunpack.c.h.b16 %v1744
          %v2078 = vunpack.c.l.b16 %v1745
          %v2079 = vunpack.c.h.b16 %v1745
          %v2080 = vunpack.c.l.b16 %v1746
          %v2081 = vunpack.c.h.b16 %v1746
          %v2082 = vunpack.c.l.b16 %v1747
          %v2083 = vunpack.c.h.b16 %v1747
          %v2084 = vunpack.c.l.b16 %v1748
          %v2085 = vunpack.c.h.b16 %v1748
          %v2086 = vunpack.c.l.b16 %v1749
          %v2087 = vunpack.c.h.b16 %v1749
          %v2088 = vunpack.c.l.b16 %v1750
          %v2089 = vunpack.c.h.b16 %v1750
          %v2090 = vunpack.c.l.b16 %v1751
          %v2091 = vunpack.c.h.b16 %v1751
          %v2092 = vunpack.c.l.b16 %v1752
          %v2093 = vunpack.c.h.b16 %v1752
          %v2094 = vunpack.c.l.b16 %v1753
          %v2095 = vunpack.c.h.b16 %v1753
          %v2096 = vunpack.c.l.b16 %v1754
          %v2097 = vunpack.c.h.b16 %v1754
          %v2098 = vunpack.c.l.b16 %v1755
          %v2099 = vunpack.c.h.b16 %v1755
          %v2100 = vunpack.c.l.b16 %v1756
          %v2101 = vunpack.c.h.b16 %v1756
          %v2102 = vunpack.c.l.b16 %v1757
          %v2103 = vunpack.c.h.b16 %v1757
          %v2104 = vunpack.c.l.b16 %v1758
          %v2105 = vunpack.c.h.b16 %v1758
          %v2106 = vunpack.c.l.b16 %v1759
          %v2107 = vunpack.c.h.b16 %v1759
          %v2108 = vunpack.c.l.b16 %v1760
          %v2109 = vunpack.c.h.b16 %v1760
          %v2110 = vunpack.c.l.b16 %v1761
          %v2111 = vunpack.c.h.b16 %v1761
          %v2112 = vunpack.c.l.b16 %v1762
          %v2113 = vunpack.c.h.b16 %v1762
          %v2114 = vunpack.c.l.b16 %v1763
          %v2115 = vunpack.c.h.b16 %v1763
          %v2116 = vunpack.c.l.b16 %v1764
          %v2117 = vunpack.c.h.b16 %v1764
          %v2118 = vunpack.c.l.b16 %v1765
          %v2119 = vunpack.c.h.b16 %v1765
          %v2120 = vunpack.c.l.b16 %v1766
          %v2121 = vunpack.c.h.b16 %v1766
          %v2122 = vunpack.c.l.b16 %v1767
          %v2123 = vunpack.c.h.b16 %v1767
          %v2124 = vunpack.c.l.b16 %v1768
          %v2125 = vunpack.c.h.b16 %v1768
          %v2126 = vunpack.c.l.b16 %v1769
          %v2127 = vunpack.c.h.b16 %v1769
          %v2128 = vunpack.c.l.b16 %v1770
          %v2129 = vunpack.c.h.b16 %v1770
          %v2130 = vunpack.c.l.b16 %v1771
          %v2131 = vunpack.c.h.b16 %v1771
          %v2132 = vunpack.c.l.b16 %v1772
          %v2133 = vunpack.c.h.b16 %v1772
          %v2134 = vunpack.c.l.b16 %v1773
          %v2135 = vunpack.c.h.b16 %v1773
          %v2136 = vunpack.c.l.b16 %v1774
          %v2137 = vunpack.c.h.b16 %v1774
          %v2138 = vunpack.c.l.b16 %v1775
          %v2139 = vunpack.c.h.b16 %v1775
          %v2140 = vunpack.c.l.b16 %v1776
          %v2141 = vunpack.c.h.b16 %v1776
          %v2142 = vunpack.c.l.b16 %v1777
          %v2143 = vunpack.c.h.b16 %v1777
          %v2144 = vunpack.c.l.b16 %v1778
          %v2145 = vunpack.c.h.b16 %v1778
          %v2146 = vunpack.c.l.b16 %v1779
          %v2147 = vunpack.c.h.b16 %v1779
          %v2148 = vunpack.c.l.b16 %v1780
          %v2149 = vunpack.c.h.b16 %v1780
          %v2150 = vunpack.c.l.b16 %v1781
          %v2151 = vunpack.c.h.b16 %v1781
          %v2152 = vunpack.c.l.b16 %v1782
          %v2153 = vunpack.c.h.b16 %v1782
          %v2154 = vunpack.c.l.b16 %v1783
          %v2155 = vunpack.c.h.b16 %v1783
          %v2156 = vunpack.c.l.b16 %v1784
          %v2157 = vunpack.c.h.b16 %v1784
          %v2158 = vunpack.c.l.b16 %v1785
          %v2159 = vunpack.c.h.b16 %v1785
          %v2160 = vunpack.c.l.b16 %v1786
          %v2161 = vunpack.c.h.b16 %v1786
          %v2162 = vunpack.c.l.b16 %v1787
          %v2163 = vunpack.c.h.b16 %v1787
          %v2164 = vunpack.c.l.b16 %v1788
          %v2165 = vunpack.c.h.b16 %v1788
          %v2166 = vunpack.c.l.b16 %v1789
          %v2167 = vunpack.c.h.b16 %v1789
          %v2168 = vunpack.c.l.b16 %v1790
          %v2169 = vunpack.c.h.b16 %v1790
          %v2170 = vunpack.c.l.b16 %v1791
          %v2171 = vunpack.c.h.b16 %v1791
          %v2172 = vunpack.c.l.b16 %v1792
          %v2173 = vunpack.c.h.b16 %v1792
          %v2174 = vunpack.c.l.b16 %v1793
          %v2175 = vunpack.c.h.b16 %v1793
          %v2176 = vunpack.c.l.b16 %v1794
          %v2177 = vunpack.c.h.b16 %v1794
          %v2178 = vunpack.c.l.b16 %v1795
          %v2179 = vunpack.c.h.b16 %v1795
          %v2180 = vunpack.c.l.b16 %v1796
          %v2181 = vunpack.c.h.b16 %v1796
          %v2182 = vunpack.c.l.b16 %v1797
          %v2183 = vunpack.c.h.b16 %v1797
          %v2184 = vunpack.c.l.b16 %v1798
          %v2185 = vunpack.c.h.b16 %v1798
          %v2186 = vunpack.c.l.b16 %v1799
          %v2187 = vunpack.c.h.b16 %v1799
          %v2188 = vunpack.c.l.b16 %v1800
          %v2189 = vunpack.c.h.b16 %v1800
          %v2190 = vunpack.c.l.b16 %v1801
          %v2191 = vunpack.c.h.b16 %v1801
          %v2192 = vunpack.c.l.b16 %v1802
          %v2193 = vunpack.c.h.b16 %v1802
          %v2194 = vunpack.c.l.b16 %v1803
          %v2195 = vunpack.c.h.b16 %v1803
          %v2196 = vunpack.c.l.b16 %v1804
          %v2197 = vunpack.c.h.b16 %v1804
          %v2198 = vunpack.c.l.b16 %v1805
          %v2199 = vunpack.c.h.b16 %v1805
          %v2200 = vunpack.c.l.b16 %v1806
          %v2201 = vunpack.c.h.b16 %v1806
          %v2202 = vunpack.c.l.b16 %v1807
          %v2203 = vunpack.c.h.b16 %v1807
          %v2204 = vunpack.c.l.b16 %v1808
          %v2205 = vunpack.c.h.b16 %v1808
          %v2206 = vunpack.c.l.b16 %v1809
          %v2207 = vunpack.c.h.b16 %v1809
          %v2208 = vunpack.c.l.b16 %v1810
          %v2209 = vunpack.c.h.b16 %v1810
          %v2210 = vunpack.c.l.b16 %v1811
          %v2211 = vunpack.c.h.b16 %v1811
          %v2212 = vunpack.c.l.b16 %v1812
          %v2213 = vunpack.c.h.b16 %v1812
          %v2214 = vunpack.c.l.b16 %v1813
          %v2215 = vunpack.c.h.b16 %v1813
          %v2216 = vunpack.c.l.b16 %v1814
          %v2217 = vunpack.c.h.b16 %v1814
          %v2218 = vunpack.c.l.b16 %v1815
          %v2219 = vunpack.c.h.b16 %v1815
          %v2220 = vunpack.c.l.b16 %v1816
          %v2221 = vunpack.c.h.b16 %v1816
          %v2222 = vunpack.c.l.b16 %v1817
          %v2223 = vunpack.c.h.b16 %v1817
          %v2224 = vpack.c.b16 %v1972, %v1968
          %v2225 = vpack.c.b16 %v1973, %v1969
          %v2226 = vpack.c.b16 %v1974, %v1970
          %v2227 = vpack.c.b16 %v1975, %v1971
          %v2228 = vpack.c.b16 %v1980, %v1976
          %v2229 = vpack.c.b16 %v1981, %v1977
          %v2230 = vpack.c.b16 %v1982, %v1978
          %v2231 = vpack.c.b16 %v1983, %v1979
          %v2232 = vpack.c.b16 %v1988, %v1984
          %v2233 = vpack.c.b16 %v1989, %v1985
          %v2234 = vpack.c.b16 %v1990, %v1986
          %v2235 = vpack.c.b16 %v1991, %v1987
          %v2236 = vpack.c.b16 %v1996, %v1992
          %v2237 = vpack.c.b16 %v1997, %v1993
          %v2238 = vpack.c.b16 %v1998, %v1994
          %v2239 = vpack.c.b16 %v1999, %v1995
          %v2240 = vpack.c.b16 %v2004, %v2000
          %v2241 = vpack.c.b16 %v2005, %v2001
          %v2242 = vpack.c.b16 %v2006, %v2002
          %v2243 = vpack.c.b16 %v2007, %v2003
          %v2244 = vpack.c.b16 %v2012, %v2008
          %v2245 = vpack.c.b16 %v2013, %v2009
          %v2246 = vpack.c.b16 %v2014, %v2010
          %v2247 = vpack.c.b16 %v2015, %v2011
          %v2248 = vpack.c.b16 %v2020, %v2016
          %v2249 = vpack.c.b16 %v2021, %v2017
          %v2250 = vpack.c.b16 %v2022, %v2018
          %v2251 = vpack.c.b16 %v2023, %v2019
          %v2252 = vpack.c.b16 %v2028, %v2024
          %v2253 = vpack.c.b16 %v2029, %v2025
          %v2254 = vpack.c.b16 %v2030, %v2026
          %v2255 = vpack.c.b16 %v2031, %v2027
          %v2256 = vpack.c.b16 %v2036, %v2032
          %v2257 = vpack.c.b16 %v2037, %v2033
          %v2258 = vpack.c.b16 %v2038, %v2034
          %v2259 = vpack.c.b16 %v2039, %v2035
          %v2260 = vpack.c.b16 %v2044, %v2040
          %v2261 = vpack.c.b16 %v2045, %v2041
          %v2262 = vpack.c.b16 %v2046, %v2042
          %v2263 = vpack.c.b16 %v2047, %v2043
          %v2264 = vpack.c.b16 %v2052, %v2048
          %v2265 = vpack.c.b16 %v2053, %v2049
          %v2266 = vpack.c.b16 %v2054, %v2050
          %v2267 = vpack.c.b16 %v2055, %v2051
          %v2268 = vpack.c.b16 %v2060, %v2056
          %v2269 = vpack.c.b16 %v2061, %v2057
          %v2270 = vpack.c.b16 %v2062, %v2058
          %v2271 = vpack.c.b16 %v2063, %v2059
          %v2272 = vpack.c.b16 %v2068, %v2064
          %v2273 = vpack.c.b16 %v2069, %v2065
          %v2274 = vpack.c.b16 %v2070, %v2066
          %v2275 = vpack.c.b16 %v2071, %v2067
          %v2276 = vpack.c.b16 %v2076, %v2072
          %v2277 = vpack.c.b16 %v2077, %v2073
          %v2278 = vpack.c.b16 %v2078, %v2074
          %v2279 = vpack.c.b16 %v2079, %v2075
          %v2280 = vpack.c.b16 %v2084, %v2080
          %v2281 = vpack.c.b16 %v2085, %v2081
          %v2282 = vpack.c.b16 %v2086, %v2082
          %v2283 = vpack.c.b16 %v2087, %v2083
          %v2284 = vpack.c.b16 %v2092, %v2088
          %v2285 = vpack.c.b16 %v2093, %v2089
          %v2286 = vpack.c.b16 %v2094, %v2090
          %v2287 = vpack.c.b16 %v2095, %v2091
          %v2288 = vpack.c.b16 %v2100, %v2096
          %v2289 = vpack.c.b16 %v2101, %v2097
          %v2290 = vpack.c.b16 %v2102, %v2098
          %v2291 = vpack.c.b16 %v2103, %v2099
          %v2292 = vpack.c.b16 %v2108, %v2104
          %v2293 = vpack.c.b16 %v2109, %v2105
          %v2294 = vpack.c.b16 %v2110, %v2106
          %v2295 = vpack.c.b16 %v2111, %v2107
          %v2296 = vpack.c.b16 %v2116, %v2112
          %v2297 = vpack.c.b16 %v2117, %v2113
          %v2298 = vpack.c.b16 %v2118, %v2114
          %v2299 = vpack.c.b16 %v2119, %v2115
          %v2300 = vpack.c.b16 %v2124, %v2120
          %v2301 = vpack.c.b16 %v2125, %v2121
          %v2302 = vpack.c.b16 %v2126, %v2122
          %v2303 = vpack.c.b16 %v2127, %v2123
          %v2304 = vpack.c.b16 %v2132, %v2128
          %v2305 = vpack.c.b16 %v2133, %v2129
          %v2306 = vpack.c.b16 %v2134, %v2130
          %v2307 = vpack.c.b16 %v2135, %v2131
          %v2308 = vpack.c.b16 %v2140, %v2136
          %v2309 = vpack.c.b16 %v2141, %v2137
          %v2310 = vpack.c.b16 %v2142, %v2138
          %v2311 = vpack.c.b16 %v2143, %v2139
          %v2312 = vpack.c.b16 %v2148, %v2144
          %v2313 = vpack.c.b16 %v2149, %v2145
          %v2314 = vpack.c.b16 %v2150, %v2146
          %v2315 = vpack.c.b16 %v2151, %v2147
          %v2316 = vpack.c.b16 %v2156, %v2152
          %v2317 = vpack.c.b16 %v2157, %v2153
          %v2318 = vpack.c.b16 %v2158, %v2154
          %v2319 = vpack.c.b16 %v2159, %v2155
          %v2320 = vpack.c.b16 %v2164, %v2160
          %v2321 = vpack.c.b16 %v2165, %v2161
          %v2322 = vpack.c.b16 %v2166, %v2162
          %v2323 = vpack.c.b16 %v2167, %v2163
          %v2324 = vpack.c.b16 %v2172, %v2168
          %v2325 = vpack.c.b16 %v2173, %v2169
          %v2326 = vpack.c.b16 %v2174, %v2170
          %v2327 = vpack.c.b16 %v2175, %v2171
          %v2328 = vpack.c.b16 %v2180, %v2176
          %v2329 = vpack.c.b16 %v2181, %v2177
          %v2330 = vpack.c.b16 %v2182, %v2178
          %v2331 = vpack.c.b16 %v2183, %v2179
          %v2332 = vpack.c.b16 %v2188, %v2184
          %v2333 = vpack.c.b16 %v2189, %v2185
          %v2334 = vpack.c.b16 %v2190, %v2186
          %v2335 = vpack.c.b16 %v2191, %v2187
          %v2336 = vpack.c.b16 %v2196, %v2192
          %v2337 = vpack.c.b16 %v2197, %v2193
          %v2338 = vpack.c.b16 %v2198, %v2194
          %v2339 = vpack.c.b16 %v2199, %v2195
          %v2340 = vpack.c.b16 %v2204, %v2200
          %v2341 = vpack.c.b16 %v2205, %v2201
          %v2342 = vpack.c.b16 %v2206, %v2202
          %v2343 = vpack.c.b16 %v2207, %v2203
          %v2344 = vpack.c.b16 %v2212, %v2208
          %v2345 = vpack.c.b16 %v2213, %v2209
          %v2346 = vpack.c.b16 %v2214, %v2210
          %v2347 = vpack.c.b16 %v2215, %v2211
          %v2348 = vpack.c.b16 %v2220, %v2216
          %v2349 = vpack.c.b16 %v2221, %v2217
          %v2350 = vpack.c.b16 %v2222, %v2218
          %v2351 = vpack.c.b16 %v2223, %v2219
          %2480 = vmatprep.subr.bf16.mxu0 %v2225
          %2481 = vmatpush1.bf16.msra.mxu0 %v2224
          %2482 = vmatprep.subr.bf16.mxu0 %v2229
          %2483 = vmatpush1.bf16.msra.mxu0 %v2228
          %2484 = vmatprep.subr.bf16.mxu0 %v2233
          %2485 = vmatpush1.bf16.msra.mxu0 %v2232
          %2486 = vmatprep.subr.bf16.mxu0 %v2237
          %2487 = vmatpush1.bf16.msra.mxu0 %v2236
          %2488 = vmatprep.subr.bf16.mxu0 %v2241
          %2489 = vmatpush1.bf16.msra.mxu0 %v2240
          %2490 = vmatprep.subr.bf16.mxu0 %v2245
          %2491 = vmatpush1.bf16.msra.mxu0 %v2244
          %2492 = vmatprep.subr.bf16.mxu0 %v2249
          %2493 = vmatpush1.bf16.msra.mxu0 %v2248
          %2494 = vmatprep.subr.bf16.mxu0 %v2253
          %2495 = vmatpush1.bf16.msra.mxu0 %v2252
          %2496 = vmatprep.subr.bf16.mxu0 %v2257
          %2497 = vmatpush1.bf16.msra.mxu0 %v2256
          %2498 = vmatprep.subr.bf16.mxu0 %v2261
          %2499 = vmatpush1.bf16.msra.mxu0 %v2260
          %2500 = vmatprep.subr.bf16.mxu0 %v2265
          %2501 = vmatpush1.bf16.msra.mxu0 %v2264
          %2502 = vmatprep.subr.bf16.mxu0 %v2269
          %2503 = vmatpush1.bf16.msra.mxu0 %v2268
          %2504 = vmatprep.subr.bf16.mxu0 %v2273
          %2505 = vmatpush1.bf16.msra.mxu0 %v2272
          %2506 = vmatprep.subr.bf16.mxu0 %v2277
          %2507 = vmatpush1.bf16.msra.mxu0 %v2276
          %2508 = vmatprep.subr.bf16.mxu0 %v2281
          %2509 = vmatpush1.bf16.msra.mxu0 %v2280
          %2510 = vmatprep.subr.bf16.mxu0 %v2285
          %2511 = vmatpush1.bf16.msra.mxu0 %v2284
          %2512 = vmatprep.mubr.bf16.mxu0 %v1659
          %2513 = vmatmul.mubr.bf16.gmra.mrb[0].mxu0 %v1658
          %v2514 = vpop.f32.mrb[0].mxu0
          %v2515 = vadd.f32 %v1823, %v2514
          %v2516 = vpop.f32.mrb[0].mxu0
          %v2517 = vadd.f32 %v1827, %v2516
          %v2518 = vpop.f32.mrb[0].mxu0
          %v2519 = vadd.f32 %v1823, %v2518
          %v2520 = vpop.f32.mrb[0].mxu0
          %v2521 = vadd.f32 %v1827, %v2520
          %2522 = vmatprep.mubr.bf16.mxu0 %v1663
          %2523 = vmatmul.mubr.bf16.gmra.mrb[0].mxu0 %v1662
          %v2524 = vpop.f32.mrb[0].mxu0
          %v2525 = vadd.f32 %v1823, %v2524
          %v2526 = vpop.f32.mrb[0].mxu0
          %v2527 = vadd.f32 %v1827, %v2526
          %v2528 = vpop.f32.mrb[0].mxu0
          %v2529 = vadd.f32 %v1823, %v2528
          %v2530 = vpop.f32.mrb[0].mxu0
          %v2531 = vadd.f32 %v1827, %v2530
          %2532 = vmatprep.mubr.bf16.mxu0 %v1667
          %2533 = vmatmul.mubr.bf16.gmra.mrb[0].mxu0 %v1666
          %v2534 = vpop.f32.mrb[0].mxu0
          %v2535 = vadd.f32 %v1823, %v2534
          %v2536 = vpop.f32.mrb[0].mxu0
          %v2537 = vadd.f32 %v1827, %v2536
          %v2538 = vpop.f32.mrb[0].mxu0
          %v2539 = vadd.f32 %v1823, %v2538
          %v2540 = vpop.f32.mrb[0].mxu0
          %v2541 = vadd.f32 %v1827, %v2540
          %2542 = vmatprep.mubr.bf16.mxu0 %v1671
          %2543 = vmatmul.mubr.bf16.gmra.mrb[0].mxu0 %v1670
          %v2544 = vpop.f32.mrb[0].mxu0
          %v2545 = vadd.f32 %v1823, %v2544
          %v2546 = vpop.f32.mrb[0].mxu0
          %v2547 = vadd.f32 %v1827, %v2546
          %v2548 = vpop.f32.mrb[0].mxu0
          %v2549 = vadd.f32 %v1823, %v2548
          %v2550 = vpop.f32.mrb[0].mxu0
          %v2551 = vadd.f32 %v1827, %v2550
          %2552 = vmatprep.mubr.bf16.mxu0 %v1675
          %2553 = vmatmul.mubr.bf16.gmra.mrb[0].mxu0 %v1674
          %v2554 = vpop.f32.mrb[0].mxu0
          %v2555 = vadd.f32 %v1823, %v2554
          %v2556 = vpop.f32.mrb[0].mxu0
          %v2557 = vadd.f32 %v1827, %v2556
          %v2558 = vpop.f32.mrb[0].mxu0
          %v2559 = vadd.f32 %v1823, %v2558
          %v2560 = vpop.f32.mrb[0].mxu0
          %v2561 = vadd.f32 %v1827, %v2560
          %2562 = vmatprep.mubr.bf16.mxu0 %v1679
          %2563 = vmatmul.mubr.bf16.gmra.mrb[0].mxu0 %v1678
          %v2564 = vpop.f32.mrb[0].mxu0
          %v2565 = vadd.f32 %v1823, %v2564
          %v2566 = vpop.f32.mrb[0].mxu0
          %v2567 = vadd.f32 %v1827, %v2566
          %v2568 = vpop.f32.mrb[0].mxu0
          %v2569 = vadd.f32 %v1823, %v2568
          %v2570 = vpop.f32.mrb[0].mxu0
          %v2571 = vadd.f32 %v1827, %v2570
          %2572 = vmatprep.mubr.bf16.mxu0 %v1683
          %2573 = vmatmul.mubr.bf16.gmra.mrb[0].mxu0 %v1682
          %v2574 = vpop.f32.mrb[0].mxu0
          %v2575 = vadd.f32 %v1823, %v2574
          %v2576 = vpop.f32.mrb[0].mxu0
          %v2577 = vadd.f32 %v1827, %v2576
          %v2578 = vpop.f32.mrb[0].mxu0
          %v2579 = vadd.f32 %v1823, %v2578
          %v2580 = vpop.f32.mrb[0].mxu0
          %v2581 = vadd.f32 %v1827, %v2580
          %2582 = vmatprep.mubr.bf16.mxu0 %v1687
          %2583 = vmatmul.mubr.bf16.gmra.mrb[0].mxu0 %v1686
          %v2584 = vpop.f32.mrb[0].mxu0
          %v2585 = vadd.f32 %v1823, %v2584
          %v2586 = vpop.f32.mrb[0].mxu0
          %v2587 = vadd.f32 %v1827, %v2586
          %v2588 = vpop.f32.mrb[0].mxu0
          %v2589 = vadd.f32 %v1823, %v2588
          %v2590 = vpop.f32.mrb[0].mxu0
          %v2591 = vadd.f32 %v1827, %v2590
          %2592 = vdwg.mxu0
          %2593 = vmatprep.subr.bf16.mxu0 %v2289
          %2594 = vmatpush1.bf16.msra.mxu0 %v2288
          %2595 = vmatprep.subr.bf16.mxu0 %v2293
          %2596 = vmatpush1.bf16.msra.mxu0 %v2292
          %2597 = vmatprep.subr.bf16.mxu0 %v2297
          %2598 = vmatpush1.bf16.msra.mxu0 %v2296
          %2599 = vmatprep.subr.bf16.mxu0 %v2301
          %2600 = vmatpush1.bf16.msra.mxu0 %v2300
          %2601 = vmatprep.subr.bf16.mxu0 %v2305
          %2602 = vmatpush1.bf16.msra.mxu0 %v2304
          %2603 = vmatprep.subr.bf16.mxu0 %v2309
          %2604 = vmatpush1.bf16.msra.mxu0 %v2308
          %2605 = vmatprep.subr.bf16.mxu0 %v2313
          %2606 = vmatpush1.bf16.msra.mxu0 %v2312
          %2607 = vmatprep.subr.bf16.mxu0 %v2317
          %2608 = vmatpush1.bf16.msra.mxu0 %v2316
          %2609 = vmatprep.subr.bf16.mxu0 %v2321
          %2610 = vmatpush1.bf16.msra.mxu0 %v2320
          %2611 = vmatprep.subr.bf16.mxu0 %v2325
          %2612 = vmatpush1.bf16.msra.mxu0 %v2324
          %2613 = vmatprep.subr.bf16.mxu0 %v2329
          %2614 = vmatpush1.bf16.msra.mxu0 %v2328
          %2615 = vmatprep.subr.bf16.mxu0 %v2333
          %2616 = vmatpush1.bf16.msra.mxu0 %v2332
          %2617 = vmatprep.subr.bf16.mxu0 %v2337
          %2618 = vmatpush1.bf16.msra.mxu0 %v2336
          %2619 = vmatprep.subr.bf16.mxu0 %v2341
          %2620 = vmatpush1.bf16.msra.mxu0 %v2340
          %2621 = vmatprep.subr.bf16.mxu0 %v2345
          %2622 = vmatpush1.bf16.msra.mxu0 %v2344
          %2623 = vmatprep.subr.bf16.mxu0 %v2349
          %2624 = vmatpush1.bf16.msra.mxu0 %v2348
          %2625 = vmatprep.mubr.bf16.mxu0 %v1661
          %2626 = vmatmul.mubr.bf16.gmra.mrb[0].mxu0 %v1660
          %v2627 = vpop.f32.mrb[0].mxu0
          %v2628 = vadd.f32 %v2515, %v2627
          %v2629 = vpop.f32.mrb[0].mxu0
          %v2630 = vadd.f32 %v2517, %v2629
          %v2631 = vpop.f32.mrb[0].mxu0
          %v2632 = vadd.f32 %v2519, %v2631
          %v2633 = vpop.f32.mrb[0].mxu0
          %v2634 = vadd.f32 %v2521, %v2633
          %2635 = vmatprep.mubr.bf16.mxu0 %v1665
          %2636 = vmatmul.mubr.bf16.gmra.mrb[0].mxu0 %v1664
          %v2637 = vpop.f32.mrb[0].mxu0
          %v2638 = vadd.f32 %v2525, %v2637
          %v2639 = vpop.f32.mrb[0].mxu0
          %v2640 = vadd.f32 %v2527, %v2639
          %v2641 = vpop.f32.mrb[0].mxu0
          %v2642 = vadd.f32 %v2529, %v2641
          %v2643 = vpop.f32.mrb[0].mxu0
          %v2644 = vadd.f32 %v2531, %v2643
          %2645 = vmatprep.mubr.bf16.mxu0 %v1669
          %2646 = vmatmul.mubr.bf16.gmra.mrb[0].mxu0 %v1668
          %v2647 = vpop.f32.mrb[0].mxu0
          %v2648 = vadd.f32 %v2535, %v2647
          %v2649 = vpop.f32.mrb[0].mxu0
          %v2650 = vadd.f32 %v2537, %v2649
          %v2651 = vpop.f32.mrb[0].mxu0
          %v2652 = vadd.f32 %v2539, %v2651
          %v2653 = vpop.f32.mrb[0].mxu0
          %v2654 = vadd.f32 %v2541, %v2653
          %2655 = vmatprep.mubr.bf16.mxu0 %v1673
          %2656 = vmatmul.mubr.bf16.gmra.mrb[0].mxu0 %v1672
          %v2657 = vpop.f32.mrb[0].mxu0
          %v2658 = vadd.f32 %v2545, %v2657
          %v2659 = vpop.f32.mrb[0].mxu0
          %v2660 = vadd.f32 %v2547, %v2659
          %v2661 = vpop.f32.mrb[0].mxu0
          %v2662 = vadd.f32 %v2549, %v2661
          %v2663 = vpop.f32.mrb[0].mxu0
          %v2664 = vadd.f32 %v2551, %v2663
          %2665 = vmatprep.mubr.bf16.mxu0 %v1677
          %2666 = vmatmul.mubr.bf16.gmra.mrb[0].mxu0 %v1676
          %v2667 = vpop.f32.mrb[0].mxu0
          %v2668 = vadd.f32 %v2555, %v2667
          %v2669 = vpop.f32.mrb[0].mxu0
          %v2670 = vadd.f32 %v2557, %v2669
          %v2671 = vpop.f32.mrb[0].mxu0
          %v2672 = vadd.f32 %v2559, %v2671
          %v2673 = vpop.f32.mrb[0].mxu0
          %v2674 = vadd.f32 %v2561, %v2673
          %2675 = vmatprep.mubr.bf16.mxu0 %v1681
          %2676 = vmatmul.mubr.bf16.gmra.mrb[0].mxu0 %v1680
          %v2677 = vpop.f32.mrb[0].mxu0
          %v2678 = vadd.f32 %v2565, %v2677
          %v2679 = vpop.f32.mrb[0].mxu0
          %v2680 = vadd.f32 %v2567, %v2679
          %v2681 = vpop.f32.mrb[0].mxu0
          %v2682 = vadd.f32 %v2569, %v2681
          %v2683 = vpop.f32.mrb[0].mxu0
          %v2684 = vadd.f32 %v2571, %v2683
          %2685 = vmatprep.mubr.bf16.mxu0 %v1685
          %2686 = vmatmul.mubr.bf16.gmra.mrb[0].mxu0 %v1684
          %v2687 = vpop.f32.mrb[0].mxu0
          %v2688 = vadd.f32 %v2575, %v2687
          %v2689 = vpop.f32.mrb[0].mxu0
          %v2690 = vadd.f32 %v2577, %v2689
          %v2691 = vpop.f32.mrb[0].mxu0
          %v2692 = vadd.f32 %v2579, %v2691
          %v2693 = vpop.f32.mrb[0].mxu0
          %v2694 = vadd.f32 %v2581, %v2693
          %2695 = vmatprep.mubr.bf16.mxu0 %v1689
          %2696 = vmatmul.mubr.bf16.gmra.mrb[0].mxu0 %v1688
          %v2697 = vpop.f32.mrb[0].mxu0
          %v2698 = vadd.f32 %v2585, %v2697
          %v2699 = vpop.f32.mrb[0].mxu0
          %v2700 = vadd.f32 %v2587, %v2699
          %v2701 = vpop.f32.mrb[0].mxu0
          %v2702 = vadd.f32 %v2589, %v2701
          %v2703 = vpop.f32.mrb[0].mxu0
          %v2704 = vadd.f32 %v2591, %v2703
          %2705 = vdwg.mxu0
          %2706 = vmatprep.subr.bf16.mxu0 %v2227
          %2707 = vmatpush1.bf16.msra.mxu0 %v2226
          %2708 = vmatprep.subr.bf16.mxu0 %v2231
          %2709 = vmatpush1.bf16.msra.mxu0 %v2230
          %2710 = vmatprep.subr.bf16.mxu0 %v2235
          %2711 = vmatpush1.bf16.msra.mxu0 %v2234
          %2712 = vmatprep.subr.bf16.mxu0 %v2239
          %2713 = vmatpush1.bf16.msra.mxu0 %v2238
          %2714 = vmatprep.subr.bf16.mxu0 %v2243
          %2715 = vmatpush1.bf16.msra.mxu0 %v2242
          %2716 = vmatprep.subr.bf16.mxu0 %v2247
          %2717 = vmatpush1.bf16.msra.mxu0 %v2246
          %2718 = vmatprep.subr.bf16.mxu0 %v2251
          %2719 = vmatpush1.bf16.msra.mxu0 %v2250
          %2720 = vmatprep.subr.bf16.mxu0 %v2255
          %2721 = vmatpush1.bf16.msra.mxu0 %v2254
          %2722 = vmatprep.subr.bf16.mxu0 %v2259
          %2723 = vmatpush1.bf16.msra.mxu0 %v2258
          %2724 = vmatprep.subr.bf16.mxu0 %v2263
          %2725 = vmatpush1.bf16.msra.mxu0 %v2262
          %2726 = vmatprep.subr.bf16.mxu0 %v2267
          %2727 = vmatpush1.bf16.msra.mxu0 %v2266
          %2728 = vmatprep.subr.bf16.mxu0 %v2271
          %2729 = vmatpush1.bf16.msra.mxu0 %v2270
          %2730 = vmatprep.subr.bf16.mxu0 %v2275
          %2731 = vmatpush1.bf16.msra.mxu0 %v2274
          %2732 = vmatprep.subr.bf16.mxu0 %v2279
          %2733 = vmatpush1.bf16.msra.mxu0 %v2278
          %2734 = vmatprep.subr.bf16.mxu0 %v2283
          %2735 = vmatpush1.bf16.msra.mxu0 %v2282
          %2736 = vmatprep.subr.bf16.mxu0 %v2287
          %2737 = vmatpush1.bf16.msra.mxu0 %v2286
          %2738 = vmatprep.mubr.bf16.mxu0 %v1659
          %2739 = vmatmul.mubr.bf16.gmra.mrb[0].mxu0 %v1658
          %v2740 = vpop.f32.mrb[0].mxu0
          %v2741 = vadd.f32 %v1831, %v2740
          %v2742 = vpop.f32.mrb[0].mxu0
          %v2743 = vadd.f32 %v1835, %v2742
          %v2744 = vpop.f32.mrb[0].mxu0
          %v2745 = vadd.f32 %v1831, %v2744
          %v2746 = vpop.f32.mrb[0].mxu0
          %v2747 = vadd.f32 %v1835, %v2746
          %2748 = vmatprep.mubr.bf16.mxu0 %v1663
          %2749 = vmatmul.mubr.bf16.gmra.mrb[0].mxu0 %v1662
          %v2750 = vpop.f32.mrb[0].mxu0
          %v2751 = vadd.f32 %v1831, %v2750
          %v2752 = vpop.f32.mrb[0].mxu0
          %v2753 = vadd.f32 %v1835, %v2752
          %v2754 = vpop.f32.mrb[0].mxu0
          %v2755 = vadd.f32 %v1831, %v2754
          %v2756 = vpop.f32.mrb[0].mxu0
          %v2757 = vadd.f32 %v1835, %v2756
          %2758 = vmatprep.mubr.bf16.mxu0 %v1667
          %2759 = vmatmul.mubr.bf16.gmra.mrb[0].mxu0 %v1666
          %v2760 = vpop.f32.mrb[0].mxu0
          %v2761 = vadd.f32 %v1831, %v2760
          %v2762 = vpop.f32.mrb[0].mxu0
          %v2763 = vadd.f32 %v1835, %v2762
          %v2764 = vpop.f32.mrb[0].mxu0
          %v2765 = vadd.f32 %v1831, %v2764
          %v2766 = vpop.f32.mrb[0].mxu0
          %v2767 = vadd.f32 %v1835, %v2766
          %2768 = vmatprep.mubr.bf16.mxu0 %v1671
          %2769 = vmatmul.mubr.bf16.gmra.mrb[0].mxu0 %v1670
          %v2770 = vpop.f32.mrb[0].mxu0
          %v2771 = vadd.f32 %v1831, %v2770
          %v2772 = vpop.f32.mrb[0].mxu0
          %v2773 = vadd.f32 %v1835, %v2772
          %v2774 = vpop.f32.mrb[0].mxu0
          %v2775 = vadd.f32 %v1831, %v2774
          %v2776 = vpop.f32.mrb[0].mxu0
          %v2777 = vadd.f32 %v1835, %v2776
          %2778 = vmatprep.mubr.bf16.mxu0 %v1675
          %2779 = vmatmul.mubr.bf16.gmra.mrb[0].mxu0 %v1674
          %v2780 = vpop.f32.mrb[0].mxu0
          %v2781 = vadd.f32 %v1831, %v2780
          %v2782 = vpop.f32.mrb[0].mxu0
          %v2783 = vadd.f32 %v1835, %v2782
          %v2784 = vpop.f32.mrb[0].mxu0
          %v2785 = vadd.f32 %v1831, %v2784
          %v2786 = vpop.f32.mrb[0].mxu0
          %v2787 = vadd.f32 %v1835, %v2786
          %2788 = vmatprep.mubr.bf16.mxu0 %v1679
          %2789 = vmatmul.mubr.bf16.gmra.mrb[0].mxu0 %v1678
          %v2790 = vpop.f32.mrb[0].mxu0
          %v2791 = vadd.f32 %v1831, %v2790
          %v2792 = vpop.f32.mrb[0].mxu0
          %v2793 = vadd.f32 %v1835, %v2792
          %v2794 = vpop.f32.mrb[0].mxu0
          %v2795 = vadd.f32 %v1831, %v2794
          %v2796 = vpop.f32.mrb[0].mxu0
          %v2797 = vadd.f32 %v1835, %v2796
          %2798 = vmatprep.mubr.bf16.mxu0 %v1683
          %2799 = vmatmul.mubr.bf16.gmra.mrb[0].mxu0 %v1682
          %v2800 = vpop.f32.mrb[0].mxu0
          %v2801 = vadd.f32 %v1831, %v2800
          %v2802 = vpop.f32.mrb[0].mxu0
          %v2803 = vadd.f32 %v1835, %v2802
          %v2804 = vpop.f32.mrb[0].mxu0
          %v2805 = vadd.f32 %v1831, %v2804
          %v2806 = vpop.f32.mrb[0].mxu0
          %v2807 = vadd.f32 %v1835, %v2806
          %2808 = vmatprep.mubr.bf16.mxu0 %v1687
          %2809 = vmatmul.mubr.bf16.gmra.mrb[0].mxu0 %v1686
          %v2810 = vpop.f32.mrb[0].mxu0
          %v2811 = vadd.f32 %v1831, %v2810
          %v2812 = vpop.f32.mrb[0].mxu0
          %v2813 = vadd.f32 %v1835, %v2812
          %v2814 = vpop.f32.mrb[0].mxu0
          %v2815 = vadd.f32 %v1831, %v2814
          %v2816 = vpop.f32.mrb[0].mxu0
          %v2817 = vadd.f32 %v1835, %v2816
          %2818 = vdwg.mxu0
          %2819 = vmatprep.subr.bf16.mxu0 %v2291
          %2820 = vmatpush1.bf16.msra.mxu0 %v2290
          %2821 = vmatprep.subr.bf16.mxu0 %v2295
          %2822 = vmatpush1.bf16.msra.mxu0 %v2294
          %2823 = vmatprep.subr.bf16.mxu0 %v2299
          %2824 = vmatpush1.bf16.msra.mxu0 %v2298
          %2825 = vmatprep.subr.bf16.mxu0 %v2303
          %2826 = vmatpush1.bf16.msra.mxu0 %v2302
          %2827 = vmatprep.subr.bf16.mxu0 %v2307
          %2828 = vmatpush1.bf16.msra.mxu0 %v2306
          %2829 = vmatprep.subr.bf16.mxu0 %v2311
          %2830 = vmatpush1.bf16.msra.mxu0 %v2310
          %2831 = vmatprep.subr.bf16.mxu0 %v2315
          %2832 = vmatpush1.bf16.msra.mxu0 %v2314
          %2833 = vmatprep.subr.bf16.mxu0 %v2319
          %2834 = vmatpush1.bf16.msra.mxu0 %v2318
          %2835 = vmatprep.subr.bf16.mxu0 %v2323
          %2836 = vmatpush1.bf16.msra.mxu0 %v2322
          %2837 = vmatprep.subr.bf16.mxu0 %v2327
          %2838 = vmatpush1.bf16.msra.mxu0 %v2326
          %2839 = vmatprep.subr.bf16.mxu0 %v2331
          %2840 = vmatpush1.bf16.msra.mxu0 %v2330
          %2841 = vmatprep.subr.bf16.mxu0 %v2335
          %2842 = vmatpush1.bf16.msra.mxu0 %v2334
          %2843 = vmatprep.subr.bf16.mxu0 %v2339
          %2844 = vmatpush1.bf16.msra.mxu0 %v2338
          %2845 = vmatprep.subr.bf16.mxu0 %v2343
          %2846 = vmatpush1.bf16.msra.mxu0 %v2342
          %2847 = vmatprep.subr.bf16.mxu0 %v2347
          %2848 = vmatpush1.bf16.msra.mxu0 %v2346
          %2849 = vmatprep.subr.bf16.mxu0 %v2351
          %2850 = vmatpush1.bf16.msra.mxu0 %v2350
          %2851 = vmatprep.mubr.bf16.mxu0 %v1661
          %2852 = vmatmul.mubr.bf16.gmra.mrb[0].mxu0 %v1660
          %v2853 = vpop.f32.mrb[0].mxu0
          %v2854 = vadd.f32 %v2741, %v2853
          %v2855 = vpop.f32.mrb[0].mxu0
          %v2856 = vadd.f32 %v2743, %v2855
          %v2857 = vpop.f32.mrb[0].mxu0
          %v2858 = vadd.f32 %v2745, %v2857
          %v2859 = vpop.f32.mrb[0].mxu0
          %v2860 = vadd.f32 %v2747, %v2859
          %2861 = vmatprep.mubr.bf16.mxu0 %v1665
          %2862 = vmatmul.mubr.bf16.gmra.mrb[0].mxu0 %v1664
          %v2863 = vpop.f32.mrb[0].mxu0
          %v2864 = vadd.f32 %v2751, %v2863
          %v2865 = vpop.f32.mrb[0].mxu0
          %v2866 = vadd.f32 %v2753, %v2865
          %v2867 = vpop.f32.mrb[0].mxu0
          %v2868 = vadd.f32 %v2755, %v2867
          %v2869 = vpop.f32.mrb[0].mxu0
          %v2870 = vadd.f32 %v2757, %v2869
          %2871 = vmatprep.mubr.bf16.mxu0 %v1669
          %2872 = vmatmul.mubr.bf16.gmra.mrb[0].mxu0 %v1668
          %v2873 = vpop.f32.mrb[0].mxu0
          %v2874 = vadd.f32 %v2761, %v2873
          %v2875 = vpop.f32.mrb[0].mxu0
          %v2876 = vadd.f32 %v2763, %v2875
          %v2877 = vpop.f32.mrb[0].mxu0
          %v2878 = vadd.f32 %v2765, %v2877
          %v2879 = vpop.f32.mrb[0].mxu0
          %v2880 = vadd.f32 %v2767, %v2879
          %2881 = vmatprep.mubr.bf16.mxu0 %v1673
          %2882 = vmatmul.mubr.bf16.gmra.mrb[0].mxu0 %v1672
          %v2883 = vpop.f32.mrb[0].mxu0
          %v2884 = vadd.f32 %v2771, %v2883
          %v2885 = vpop.f32.mrb[0].mxu0
          %v2886 = vadd.f32 %v2773, %v2885
          %v2887 = vpop.f32.mrb[0].mxu0
          %v2888 = vadd.f32 %v2775, %v2887
          %v2889 = vpop.f32.mrb[0].mxu0
          %v2890 = vadd.f32 %v2777, %v2889
          %2891 = vmatprep.mubr.bf16.mxu0 %v1677
          %2892 = vmatmul.mubr.bf16.gmra.mrb[0].mxu0 %v1676
          %v2893 = vpop.f32.mrb[0].mxu0
          %v2894 = vadd.f32 %v2781, %v2893
          %v2895 = vpop.f32.mrb[0].mxu0
          %v2896 = vadd.f32 %v2783, %v2895
          %v2897 = vpop.f32.mrb[0].mxu0
          %v2898 = vadd.f32 %v2785, %v2897
          %v2899 = vpop.f32.mrb[0].mxu0
          %v2900 = vadd.f32 %v2787, %v2899
          %2901 = vmatprep.mubr.bf16.mxu0 %v1681
          %2902 = vmatmul.mubr.bf16.gmra.mrb[0].mxu0 %v1680
          %v2903 = vpop.f32.mrb[0].mxu0
          %v2904 = vadd.f32 %v2791, %v2903
          %v2905 = vpop.f32.mrb[0].mxu0
          %v2906 = vadd.f32 %v2793, %v2905
          %v2907 = vpop.f32.mrb[0].mxu0
          %v2908 = vadd.f32 %v2795, %v2907
          %v2909 = vpop.f32.mrb[0].mxu0
          %v2910 = vadd.f32 %v2797, %v2909
          %2911 = vmatprep.mubr.bf16.mxu0 %v1685
          %2912 = vmatmul.mubr.bf16.gmra.mrb[0].mxu0 %v1684
          %v2913 = vpop.f32.mrb[0].mxu0
          %v2914 = vadd.f32 %v2801, %v2913
          %v2915 = vpop.f32.mrb[0].mxu0
          %v2916 = vadd.f32 %v2803, %v2915
          %v2917 = vpop.f32.mrb[0].mxu0
          %v2918 = vadd.f32 %v2805, %v2917
          %v2919 = vpop.f32.mrb[0].mxu0
          %v2920 = vadd.f32 %v2807, %v2919
          %2921 = vmatprep.mubr.bf16.mxu0 %v1689
          %2922 = vmatmul.mubr.bf16.gmra.mrb[0].mxu0 %v1688
          %v2923 = vpop.f32.mrb[0].mxu0
          %v2924 = vadd.f32 %v2811, %v2923
          %v2925 = vpop.f32.mrb[0].mxu0
          %v2926 = vadd.f32 %v2813, %v2925
          %v2927 = vpop.f32.mrb[0].mxu0
          %v2928 = vadd.f32 %v2815, %v2927
          %v2929 = vpop.f32.mrb[0].mxu0
          %v2930 = vadd.f32 %v2817, %v2929
          %2931 = vdwg.mxu0
          %v2932 = vadd.f32 %v2628, %v2632
          %v2933 = vadd.f32 %v2932, %v2638
          %v2934 = vadd.f32 %v2933, %v2642
          %v2935 = vadd.f32 %v2934, %v2648
          %v2936 = vadd.f32 %v2935, %v2652
          %v2937 = vadd.f32 %v2936, %v2658
          %v2938 = vadd.f32 %v2937, %v2662
          %v2939 = vadd.f32 %v2938, %v2668
          %v2940 = vadd.f32 %v2939, %v2672
          %v2941 = vadd.f32 %v2940, %v2678
          %v2942 = vadd.f32 %v2941, %v2682
          %v2943 = vadd.f32 %v2942, %v2688
          %v2944 = vadd.f32 %v2943, %v2692
          %v2945 = vadd.f32 %v2944, %v2698
          %v2946 = vadd.f32 %v2945, %v2702
          %v2947 = vrot.slane %v2946, 4
          %v2948 = vadd.f32 %v2946, %v2947
          %v2949 = vrot.slane %v2948, 2
          %v2950 = vadd.f32 %v2948, %v2949
          %v2951 = vrot.slane %v2950, 1
          %v2952 = vadd.f32 %v2950, %v2951
          %v2953 = vadd.f32 %v2630, %v2634
          %v2954 = vadd.f32 %v2953, %v2640
          %v2955 = vadd.f32 %v2954, %v2644
          %v2956 = vadd.f32 %v2955, %v2650
          %v2957 = vadd.f32 %v2956, %v2654
          %v2958 = vadd.f32 %v2957, %v2660
          %v2959 = vadd.f32 %v2958, %v2664
          %v2960 = vadd.f32 %v2959, %v2670
          %v2961 = vadd.f32 %v2960, %v2674
          %v2962 = vadd.f32 %v2961, %v2680
          %v2963 = vadd.f32 %v2962, %v2684
          %v2964 = vadd.f32 %v2963, %v2690
          %v2965 = vadd.f32 %v2964, %v2694
          %v2966 = vadd.f32 %v2965, %v2700
          %v2967 = vadd.f32 %v2966, %v2704
          %v2968 = vrot.slane %v2967, 4
          %v2969 = vadd.f32 %v2967, %v2968
          %v2970 = vrot.slane %v2969, 2
          %v2971 = vadd.f32 %v2969, %v2970
          %v2972 = vrot.slane %v2971, 1
          %v2973 = vadd.f32 %v2971, %v2972
          %v2974 = vadd.f32 %v2854, %v2858
          %v2975 = vadd.f32 %v2974, %v2864
          %v2976 = vadd.f32 %v2975, %v2868
          %v2977 = vadd.f32 %v2976, %v2874
          %v2978 = vadd.f32 %v2977, %v2878
          %v2979 = vadd.f32 %v2978, %v2884
          %v2980 = vadd.f32 %v2979, %v2888
          %v2981 = vadd.f32 %v2980, %v2894
          %v2982 = vadd.f32 %v2981, %v2898
          %v2983 = vadd.f32 %v2982, %v2904
          %v2984 = vadd.f32 %v2983, %v2908
          %v2985 = vadd.f32 %v2984, %v2914
          %v2986 = vadd.f32 %v2985, %v2918
          %v2987 = vadd.f32 %v2986, %v2924
          %v2988 = vadd.f32 %v2987, %v2928
          %v2989 = vrot.slane %v2988, 4
          %v2990 = vadd.f32 %v2988, %v2989
          %v2991 = vrot.slane %v2990, 2
          %v2992 = vadd.f32 %v2990, %v2991
          %v2993 = vrot.slane %v2992, 1
          %v2994 = vadd.f32 %v2992, %v2993
          %v2995 = vadd.f32 %v2856, %v2860
          %v2996 = vadd.f32 %v2995, %v2866
          %v2997 = vadd.f32 %v2996, %v2870
          %v2998 = vadd.f32 %v2997, %v2876
          %v2999 = vadd.f32 %v2998, %v2880
          %v3000 = vadd.f32 %v2999, %v2886
          %v3001 = vadd.f32 %v3000, %v2890
          %v3002 = vadd.f32 %v3001, %v2896
          %v3003 = vadd.f32 %v3002, %v2900
          %v3004 = vadd.f32 %v3003, %v2906
          %v3005 = vadd.f32 %v3004, %v2910
          %v3006 = vadd.f32 %v3005, %v2916
          %v3007 = vadd.f32 %v3006, %v2920
          %v3008 = vadd.f32 %v3007, %v2926
          %v3009 = vadd.f32 %v3008, %v2930
          %v3010 = vrot.slane %v3009, 4
          %v3011 = vadd.f32 %v3009, %v3010
          %v3012 = vrot.slane %v3011, 2
          %v3013 = vadd.f32 %v3011, %v3012
          %v3014 = vrot.slane %v3013, 1
          %v3015 = vadd.f32 %v3013, %v3014
          %v3016 = vrcp.pop 128.0
          %v3017 = vmul.f32 %v2952, %v3016
          %v3018 = vmul.f32 %v2973, %v3016
          %v3019 = vmul.f32 %v2994, %v3016
          %v3020 = vmul.f32 %v3015, %v3016
          %v3021 = vsub.f32 %v2628, %v3017
          %v3022 = vsub.f32 %v2630, %v3018
          %v3023 = vsub.f32 %v2854, %v3019
          %v3024 = vsub.f32 %v2856, %v3020
          %v3025 = vsub.f32 %v2632, %v3017
          %v3026 = vsub.f32 %v2634, %v3018
          %v3027 = vsub.f32 %v2858, %v3019
          %v3028 = vsub.f32 %v2860, %v3020
          %v3029 = vsub.f32 %v2638, %v3017
          %v3030 = vsub.f32 %v2640, %v3018
          %v3031 = vsub.f32 %v2864, %v3019
          %v3032 = vsub.f32 %v2866, %v3020
          %v3033 = vsub.f32 %v2642, %v3017
          %v3034 = vsub.f32 %v2644, %v3018
          %v3035 = vsub.f32 %v2868, %v3019
          %v3036 = vsub.f32 %v2870, %v3020
          %v3037 = vsub.f32 %v2648, %v3017
          %v3038 = vsub.f32 %v2650, %v3018
          %v3039 = vsub.f32 %v2874, %v3019
          %v3040 = vsub.f32 %v2876, %v3020
          %v3041 = vsub.f32 %v2652, %v3017
          %v3042 = vsub.f32 %v2654, %v3018
          %v3043 = vsub.f32 %v2878, %v3019
          %v3044 = vsub.f32 %v2880, %v3020
          %v3045 = vsub.f32 %v2658, %v3017
          %v3046 = vsub.f32 %v2660, %v3018
          %v3047 = vsub.f32 %v2884, %v3019
          %v3048 = vsub.f32 %v2886, %v3020
          %v3049 = vsub.f32 %v2662, %v3017
          %v3050 = vsub.f32 %v2664, %v3018
          %v3051 = vsub.f32 %v2888, %v3019
          %v3052 = vsub.f32 %v2890, %v3020
          %v3053 = vsub.f32 %v2668, %v3017
          %v3054 = vsub.f32 %v2670, %v3018
          %v3055 = vsub.f32 %v2894, %v3019
          %v3056 = vsub.f32 %v2896, %v3020
          %v3057 = vsub.f32 %v2672, %v3017
          %v3058 = vsub.f32 %v2674, %v3018
          %v3059 = vsub.f32 %v2898, %v3019
          %v3060 = vsub.f32 %v2900, %v3020
          %v3061 = vsub.f32 %v2678, %v3017
          %v3062 = vsub.f32 %v2680, %v3018
          %v3063 = vsub.f32 %v2904, %v3019
          %v3064 = vsub.f32 %v2906, %v3020
          %v3065 = vsub.f32 %v2682, %v3017
          %v3066 = vsub.f32 %v2684, %v3018
          %v3067 = vsub.f32 %v2908, %v3019
          %v3068 = vsub.f32 %v2910, %v3020
          %v3069 = vsub.f32 %v2688, %v3017
          %v3070 = vsub.f32 %v2690, %v3018
          %v3071 = vsub.f32 %v2914, %v3019
          %v3072 = vsub.f32 %v2916, %v3020
          %v3073 = vsub.f32 %v2692, %v3017
          %v3074 = vsub.f32 %v2694, %v3018
          %v3075 = vsub.f32 %v2918, %v3019
          %v3076 = vsub.f32 %v2920, %v3020
          %v3077 = vsub.f32 %v2698, %v3017
          %v3078 = vsub.f32 %v2700, %v3018
          %v3079 = vsub.f32 %v2924, %v3019
          %v3080 = vsub.f32 %v2926, %v3020
          %v3081 = vsub.f32 %v2702, %v3017
          %v3082 = vsub.f32 %v2704, %v3018
          %v3083 = vsub.f32 %v2928, %v3019
          %v3084 = vsub.f32 %v2930, %v3020
          %v3085 = vmul.f32 %v3021, %v3021
          %v3086 = vmul.f32 %v3022, %v3022
          %v3087 = vmul.f32 %v3023, %v3023
          %v3088 = vmul.f32 %v3024, %v3024
          %v3089 = vmul.f32 %v3025, %v3025
          %v3090 = vmul.f32 %v3026, %v3026
          %v3091 = vmul.f32 %v3027, %v3027
          %v3092 = vmul.f32 %v3028, %v3028
          %v3093 = vmul.f32 %v3029, %v3029
          %v3094 = vmul.f32 %v3030, %v3030
          %v3095 = vmul.f32 %v3031, %v3031
          %v3096 = vmul.f32 %v3032, %v3032
          %v3097 = vmul.f32 %v3033, %v3033
          %v3098 = vmul.f32 %v3034, %v3034
          %v3099 = vmul.f32 %v3035, %v3035
          %v3100 = vmul.f32 %v3036, %v3036
          %v3101 = vmul.f32 %v3037, %v3037
          %v3102 = vmul.f32 %v3038, %v3038
          %v3103 = vmul.f32 %v3039, %v3039
          %v3104 = vmul.f32 %v3040, %v3040
          %v3105 = vmul.f32 %v3041, %v3041
          %v3106 = vmul.f32 %v3042, %v3042
          %v3107 = vmul.f32 %v3043, %v3043
          %v3108 = vmul.f32 %v3044, %v3044
          %v3109 = vmul.f32 %v3045, %v3045
          %v3110 = vmul.f32 %v3046, %v3046
          %v3111 = vmul.f32 %v3047, %v3047
          %v3112 = vmul.f32 %v3048, %v3048
          %v3113 = vmul.f32 %v3049, %v3049
          %v3114 = vmul.f32 %v3050, %v3050
          %v3115 = vmul.f32 %v3051, %v3051
          %v3116 = vmul.f32 %v3052, %v3052
          %v3117 = vmul.f32 %v3053, %v3053
          %v3118 = vmul.f32 %v3054, %v3054
          %v3119 = vmul.f32 %v3055, %v3055
          %v3120 = vmul.f32 %v3056, %v3056
          %v3121 = vmul.f32 %v3057, %v3057
          %v3122 = vmul.f32 %v3058, %v3058
          %v3123 = vmul.f32 %v3059, %v3059
          %v3124 = vmul.f32 %v3060, %v3060
          %v3125 = vmul.f32 %v3061, %v3061
          %v3126 = vmul.f32 %v3062, %v3062
          %v3127 = vmul.f32 %v3063, %v3063
          %v3128 = vmul.f32 %v3064, %v3064
          %v3129 = vmul.f32 %v3065, %v3065
          %v3130 = vmul.f32 %v3066, %v3066
          %v3131 = vmul.f32 %v3067, %v3067
          %v3132 = vmul.f32 %v3068, %v3068
          %v3133 = vmul.f32 %v3069, %v3069
          %v3134 = vmul.f32 %v3070, %v3070
          %v3135 = vmul.f32 %v3071, %v3071
          %v3136 = vmul.f32 %v3072, %v3072
          %v3137 = vmul.f32 %v3073, %v3073
          %v3138 = vmul.f32 %v3074, %v3074
          %v3139 = vmul.f32 %v3075, %v3075
          %v3140 = vmul.f32 %v3076, %v3076
          %v3141 = vmul.f32 %v3077, %v3077
          %v3142 = vmul.f32 %v3078, %v3078
          %v3143 = vmul.f32 %v3079, %v3079
          %v3144 = vmul.f32 %v3080, %v3080
          %v3145 = vmul.f32 %v3081, %v3081
          %v3146 = vmul.f32 %v3082, %v3082
          %v3147 = vmul.f32 %v3083, %v3083
          %v3148 = vmul.f32 %v3084, %v3084
          %v3149 = vadd.f32 %v3085, %v3089
          %v3150 = vadd.f32 %v3149, %v3093
          %v3151 = vadd.f32 %v3150, %v3097
          %v3152 = vadd.f32 %v3151, %v3101
          %v3153 = vadd.f32 %v3152, %v3105
          %v3154 = vadd.f32 %v3153, %v3109
          %v3155 = vadd.f32 %v3154, %v3113
          %v3156 = vadd.f32 %v3155, %v3117
          %v3157 = vadd.f32 %v3156, %v3121
          %v3158 = vadd.f32 %v3157, %v3125
          %v3159 = vadd.f32 %v3158, %v3129
          %v3160 = vadd.f32 %v3159, %v3133
          %v3161 = vadd.f32 %v3160, %v3137
          %v3162 = vadd.f32 %v3161, %v3141
          %v3163 = vadd.f32 %v3162, %v3145
          %v3164 = vrot.slane %v3163, 4
          %v3165 = vadd.f32 %v3163, %v3164
          %v3166 = vrot.slane %v3165, 2
          %v3167 = vadd.f32 %v3165, %v3166
          %v3168 = vrot.slane %v3167, 1
          %v3169 = vadd.f32 %v3167, %v3168
          %v3170 = vadd.f32 %v3086, %v3090
          %v3171 = vadd.f32 %v3170, %v3094
          %v3172 = vadd.f32 %v3171, %v3098
          %v3173 = vadd.f32 %v3172, %v3102
          %v3174 = vadd.f32 %v3173, %v3106
          %v3175 = vadd.f32 %v3174, %v3110
          %v3176 = vadd.f32 %v3175, %v3114
          %v3177 = vadd.f32 %v3176, %v3118
          %v3178 = vadd.f32 %v3177, %v3122
          %v3179 = vadd.f32 %v3178, %v3126
          %v3180 = vadd.f32 %v3179, %v3130
          %v3181 = vadd.f32 %v3180, %v3134
          %v3182 = vadd.f32 %v3181, %v3138
          %v3183 = vadd.f32 %v3182, %v3142
          %v3184 = vadd.f32 %v3183, %v3146
          %v3185 = vrot.slane %v3184, 4
          %v3186 = vadd.f32 %v3184, %v3185
          %v3187 = vrot.slane %v3186, 2
          %v3188 = vadd.f32 %v3186, %v3187
          %v3189 = vrot.slane %v3188, 1
          %v3190 = vadd.f32 %v3188, %v3189
          %v3191 = vadd.f32 %v3087, %v3091
          %v3192 = vadd.f32 %v3191, %v3095
          %v3193 = vadd.f32 %v3192, %v3099
          %v3194 = vadd.f32 %v3193, %v3103
          %v3195 = vadd.f32 %v3194, %v3107
          %v3196 = vadd.f32 %v3195, %v3111
          %v3197 = vadd.f32 %v3196, %v3115
          %v3198 = vadd.f32 %v3197, %v3119
          %v3199 = vadd.f32 %v3198, %v3123
          %v3200 = vadd.f32 %v3199, %v3127
          %v3201 = vadd.f32 %v3200, %v3131
          %v3202 = vadd.f32 %v3201, %v3135
          %v3203 = vadd.f32 %v3202, %v3139
          %v3204 = vadd.f32 %v3203, %v3143
          %v3205 = vadd.f32 %v3204, %v3147
          %v3206 = vrot.slane %v3205, 4
          %v3207 = vadd.f32 %v3205, %v3206
          %v3208 = vrot.slane %v3207, 2
          %v3209 = vadd.f32 %v3207, %v3208
          %v3210 = vrot.slane %v3209, 1
          %v3211 = vadd.f32 %v3209, %v3210
          %v3212 = vadd.f32 %v3088, %v3092
          %v3213 = vadd.f32 %v3212, %v3096
          %v3214 = vadd.f32 %v3213, %v3100
          %v3215 = vadd.f32 %v3214, %v3104
          %v3216 = vadd.f32 %v3215, %v3108
          %v3217 = vadd.f32 %v3216, %v3112
          %v3218 = vadd.f32 %v3217, %v3116
          %v3219 = vadd.f32 %v3218, %v3120
          %v3220 = vadd.f32 %v3219, %v3124
          %v3221 = vadd.f32 %v3220, %v3128
          %v3222 = vadd.f32 %v3221, %v3132
          %v3223 = vadd.f32 %v3222, %v3136
          %v3224 = vadd.f32 %v3223, %v3140
          %v3225 = vadd.f32 %v3224, %v3144
          %v3226 = vadd.f32 %v3225, %v3148
          %v3227 = vrot.slane %v3226, 4
          %v3228 = vadd.f32 %v3226, %v3227
          %v3229 = vrot.slane %v3228, 2
          %v3230 = vadd.f32 %v3228, %v3229
          %v3231 = vrot.slane %v3230, 1
          %v3232 = vadd.f32 %v3230, %v3231
          %v3233 = vmul.f32 %v3169, %v3016
          %v3234 = vmul.f32 %v3190, %v3016
          %v3235 = vmul.f32 %v3211, %v3016
          %v3236 = vmul.f32 %v3232, %v3016
          %v3237 = vadd.f32 %v3233, 1e-05
          %v3238 = vadd.f32 %v3234, 1e-05
          %v3239 = vadd.f32 %v3235, 1e-05
          %v3240 = vadd.f32 %v3236, 1e-05
          %v3241 = vrsqrt.pop %v3237
          %v3242 = vrsqrt.pop %v3238
          %v3243 = vrsqrt.pop %v3239
          %v3244 = vrsqrt.pop %v3240
          %v3245 = vmul.f32 %v3021, %v3241
          %v3246 = vmul.f32 %v3022, %v3242
          %v3247 = vmul.f32 %v3023, %v3243
          %v3248 = vmul.f32 %v3024, %v3244
          %v3249 = vmul.f32 %v3025, %v3241
          %v3250 = vmul.f32 %v3026, %v3242
          %v3251 = vmul.f32 %v3027, %v3243
          %v3252 = vmul.f32 %v3028, %v3244
          %v3253 = vmul.f32 %v3029, %v3241
          %v3254 = vmul.f32 %v3030, %v3242
          %v3255 = vmul.f32 %v3031, %v3243
          %v3256 = vmul.f32 %v3032, %v3244
          %v3257 = vmul.f32 %v3033, %v3241
          %v3258 = vmul.f32 %v3034, %v3242
          %v3259 = vmul.f32 %v3035, %v3243
          %v3260 = vmul.f32 %v3036, %v3244
          %v3261 = vmul.f32 %v3037, %v3241
          %v3262 = vmul.f32 %v3038, %v3242
          %v3263 = vmul.f32 %v3039, %v3243
          %v3264 = vmul.f32 %v3040, %v3244
          %v3265 = vmul.f32 %v3041, %v3241
          %v3266 = vmul.f32 %v3042, %v3242
          %v3267 = vmul.f32 %v3043, %v3243
          %v3268 = vmul.f32 %v3044, %v3244
          %v3269 = vmul.f32 %v3045, %v3241
          %v3270 = vmul.f32 %v3046, %v3242
          %v3271 = vmul.f32 %v3047, %v3243
          %v3272 = vmul.f32 %v3048, %v3244
          %v3273 = vmul.f32 %v3049, %v3241
          %v3274 = vmul.f32 %v3050, %v3242
          %v3275 = vmul.f32 %v3051, %v3243
          %v3276 = vmul.f32 %v3052, %v3244
          %v3277 = vmul.f32 %v3053, %v3241
          %v3278 = vmul.f32 %v3054, %v3242
          %v3279 = vmul.f32 %v3055, %v3243
          %v3280 = vmul.f32 %v3056, %v3244
          %v3281 = vmul.f32 %v3057, %v3241
          %v3282 = vmul.f32 %v3058, %v3242
          %v3283 = vmul.f32 %v3059, %v3243
          %v3284 = vmul.f32 %v3060, %v3244
          %v3285 = vmul.f32 %v3061, %v3241
          %v3286 = vmul.f32 %v3062, %v3242
          %v3287 = vmul.f32 %v3063, %v3243
          %v3288 = vmul.f32 %v3064, %v3244
          %v3289 = vmul.f32 %v3065, %v3241
          %v3290 = vmul.f32 %v3066, %v3242
          %v3291 = vmul.f32 %v3067, %v3243
          %v3292 = vmul.f32 %v3068, %v3244
          %v3293 = vmul.f32 %v3069, %v3241
          %v3294 = vmul.f32 %v3070, %v3242
          %v3295 = vmul.f32 %v3071, %v3243
          %v3296 = vmul.f32 %v3072, %v3244
          %v3297 = vmul.f32 %v3073, %v3241
          %v3298 = vmul.f32 %v3074, %v3242
          %v3299 = vmul.f32 %v3075, %v3243
          %v3300 = vmul.f32 %v3076, %v3244
          %v3301 = vmul.f32 %v3077, %v3241
          %v3302 = vmul.f32 %v3078, %v3242
          %v3303 = vmul.f32 %v3079, %v3243
          %v3304 = vmul.f32 %v3080, %v3244
          %v3305 = vmul.f32 %v3081, %v3241
          %v3306 = vmul.f32 %v3082, %v3242
          %v3307 = vmul.f32 %v3083, %v3243
          %v3308 = vmul.f32 %v3084, %v3244
          %v3309 = vld [vmem:[%s5] sm:$0xf]
          %v3311 = vlaneseq
          %v3312 = vshrl.u32 %v3311, 7
          %v3313 = vsub.s32 0, %v3312
          %v3314 = vrot.slane %v3309, %v3313
          %v3315 = vlaneseq
          %v3316 = vshrl.u32 %v3315, 7
          %v3317 = vsub.s32 1, %v3316
          %v3318 = vrot.slane %v3309, %v3317
          %v3319 = vlaneseq
          %v3320 = vshrl.u32 %v3319, 7
          %v3321 = vsub.s32 2, %v3320
          %v3322 = vrot.slane %v3309, %v3321
          %v3323 = vlaneseq
          %v3324 = vshrl.u32 %v3323, 7
          %v3325 = vsub.s32 3, %v3324
          %v3326 = vrot.slane %v3309, %v3325
          %v3331 = vmul.f32 %v3245, %v3314
          %v3332 = vmul.f32 %v3246, %v3318
          %v3333 = vmul.f32 %v3247, %v3322
          %v3334 = vmul.f32 %v3248, %v3326
          %v3335 = vmul.f32 %v3249, %v3314
          %v3336 = vmul.f32 %v3250, %v3318
          %v3337 = vmul.f32 %v3251, %v3322
          %v3338 = vmul.f32 %v3252, %v3326
          %v3339 = vmul.f32 %v3253, %v3314
          %v3340 = vmul.f32 %v3254, %v3318
          %v3341 = vmul.f32 %v3255, %v3322
          %v3342 = vmul.f32 %v3256, %v3326
          %v3343 = vmul.f32 %v3257, %v3314
          %v3344 = vmul.f32 %v3258, %v3318
          %v3345 = vmul.f32 %v3259, %v3322
          %v3346 = vmul.f32 %v3260, %v3326
          %v3347 = vmul.f32 %v3261, %v3314
          %v3348 = vmul.f32 %v3262, %v3318
          %v3349 = vmul.f32 %v3263, %v3322
          %v3350 = vmul.f32 %v3264, %v3326
          %v3351 = vmul.f32 %v3265, %v3314
          %v3352 = vmul.f32 %v3266, %v3318
          %v3353 = vmul.f32 %v3267, %v3322
          %v3354 = vmul.f32 %v3268, %v3326
          %v3355 = vmul.f32 %v3269, %v3314
          %v3356 = vmul.f32 %v3270, %v3318
          %v3357 = vmul.f32 %v3271, %v3322
          %v3358 = vmul.f32 %v3272, %v3326
          %v3359 = vmul.f32 %v3273, %v3314
          %v3360 = vmul.f32 %v3274, %v3318
          %v3361 = vmul.f32 %v3275, %v3322
          %v3362 = vmul.f32 %v3276, %v3326
          %v3363 = vmul.f32 %v3277, %v3314
          %v3364 = vmul.f32 %v3278, %v3318
          %v3365 = vmul.f32 %v3279, %v3322
          %v3366 = vmul.f32 %v3280, %v3326
          %v3367 = vmul.f32 %v3281, %v3314
          %v3368 = vmul.f32 %v3282, %v3318
          %v3369 = vmul.f32 %v3283, %v3322
          %v3370 = vmul.f32 %v3284, %v3326
          %v3371 = vmul.f32 %v3285, %v3314
          %v3372 = vmul.f32 %v3286, %v3318
          %v3373 = vmul.f32 %v3287, %v3322
          %v3374 = vmul.f32 %v3288, %v3326
          %v3375 = vmul.f32 %v3289, %v3314
          %v3376 = vmul.f32 %v3290, %v3318
          %v3377 = vmul.f32 %v3291, %v3322
          %v3378 = vmul.f32 %v3292, %v3326
          %v3379 = vmul.f32 %v3293, %v3314
          %v3380 = vmul.f32 %v3294, %v3318
          %v3381 = vmul.f32 %v3295, %v3322
          %v3382 = vmul.f32 %v3296, %v3326
          %v3383 = vmul.f32 %v3297, %v3314
          %v3384 = vmul.f32 %v3298, %v3318
          %v3385 = vmul.f32 %v3299, %v3322
          %v3386 = vmul.f32 %v3300, %v3326
          %v3387 = vmul.f32 %v3301, %v3314
          %v3388 = vmul.f32 %v3302, %v3318
          %v3389 = vmul.f32 %v3303, %v3322
          %v3390 = vmul.f32 %v3304, %v3326
          %v3391 = vmul.f32 %v3305, %v3314
          %v3392 = vmul.f32 %v3306, %v3318
          %v3393 = vmul.f32 %v3307, %v3322
          %v3394 = vmul.f32 %v3308, %v3326
          %v3395 = vld [vmem:[%s6] sm:$0xf]
          %v3397 = vlaneseq
          %v3398 = vshrl.u32 %v3397, 7
          %v3399 = vsub.s32 0, %v3398
          %v3400 = vrot.slane %v3395, %v3399
          %v3401 = vlaneseq
          %v3402 = vshrl.u32 %v3401, 7
          %v3403 = vsub.s32 1, %v3402
          %v3404 = vrot.slane %v3395, %v3403
          %v3405 = vlaneseq
          %v3406 = vshrl.u32 %v3405, 7
          %v3407 = vsub.s32 2, %v3406
          %v3408 = vrot.slane %v3395, %v3407
          %v3409 = vlaneseq
          %v3410 = vshrl.u32 %v3409, 7
          %v3411 = vsub.s32 3, %v3410
          %v3412 = vrot.slane %v3395, %v3411
          %v3417 = vadd.f32 %v3331, %v3400
          %v3418 = vadd.f32 %v3332, %v3404
          %v3419 = vadd.f32 %v3333, %v3408
          %v3420 = vadd.f32 %v3334, %v3412
          %v3421 = vadd.f32 %v3335, %v3400
          %v3422 = vadd.f32 %v3336, %v3404
          %v3423 = vadd.f32 %v3337, %v3408
          %v3424 = vadd.f32 %v3338, %v3412
          %v3425 = vadd.f32 %v3339, %v3400
          %v3426 = vadd.f32 %v3340, %v3404
          %v3427 = vadd.f32 %v3341, %v3408
          %v3428 = vadd.f32 %v3342, %v3412
          %v3429 = vadd.f32 %v3343, %v3400
          %v3430 = vadd.f32 %v3344, %v3404
          %v3431 = vadd.f32 %v3345, %v3408
          %v3432 = vadd.f32 %v3346, %v3412
          %v3433 = vadd.f32 %v3347, %v3400
          %v3434 = vadd.f32 %v3348, %v3404
          %v3435 = vadd.f32 %v3349, %v3408
          %v3436 = vadd.f32 %v3350, %v3412
          %v3437 = vadd.f32 %v3351, %v3400
          %v3438 = vadd.f32 %v3352, %v3404
          %v3439 = vadd.f32 %v3353, %v3408
          %v3440 = vadd.f32 %v3354, %v3412
          %v3441 = vadd.f32 %v3355, %v3400
          %v3442 = vadd.f32 %v3356, %v3404
          %v3443 = vadd.f32 %v3357, %v3408
          %v3444 = vadd.f32 %v3358, %v3412
          %v3445 = vadd.f32 %v3359, %v3400
          %v3446 = vadd.f32 %v3360, %v3404
          %v3447 = vadd.f32 %v3361, %v3408
          %v3448 = vadd.f32 %v3362, %v3412
          %v3449 = vadd.f32 %v3363, %v3400
          %v3450 = vadd.f32 %v3364, %v3404
          %v3451 = vadd.f32 %v3365, %v3408
          %v3452 = vadd.f32 %v3366, %v3412
          %v3453 = vadd.f32 %v3367, %v3400
          %v3454 = vadd.f32 %v3368, %v3404
          %v3455 = vadd.f32 %v3369, %v3408
          %v3456 = vadd.f32 %v3370, %v3412
          %v3457 = vadd.f32 %v3371, %v3400
          %v3458 = vadd.f32 %v3372, %v3404
          %v3459 = vadd.f32 %v3373, %v3408
          %v3460 = vadd.f32 %v3374, %v3412
          %v3461 = vadd.f32 %v3375, %v3400
          %v3462 = vadd.f32 %v3376, %v3404
          %v3463 = vadd.f32 %v3377, %v3408
          %v3464 = vadd.f32 %v3378, %v3412
          %v3465 = vadd.f32 %v3379, %v3400
          %v3466 = vadd.f32 %v3380, %v3404
          %v3467 = vadd.f32 %v3381, %v3408
          %v3468 = vadd.f32 %v3382, %v3412
          %v3469 = vadd.f32 %v3383, %v3400
          %v3470 = vadd.f32 %v3384, %v3404
          %v3471 = vadd.f32 %v3385, %v3408
          %v3472 = vadd.f32 %v3386, %v3412
          %v3473 = vadd.f32 %v3387, %v3400
          %v3474 = vadd.f32 %v3388, %v3404
          %v3475 = vadd.f32 %v3389, %v3408
          %v3476 = vadd.f32 %v3390, %v3412
          %v3477 = vadd.f32 %v3391, %v3400
          %v3478 = vadd.f32 %v3392, %v3404
          %v3479 = vadd.f32 %v3393, %v3408
          %v3480 = vadd.f32 %v3394, %v3412
          %v3481 = vmul.f32 %v3417, 0.2
          %v3482 = vmul.f32 %v3418, 0.2
          %v3483 = vmul.f32 %v3419, 0.2
          %v3484 = vmul.f32 %v3420, 0.2
          %v3485 = vmul.f32 %v3421, 0.2
          %v3486 = vmul.f32 %v3422, 0.2
          %v3487 = vmul.f32 %v3423, 0.2
          %v3488 = vmul.f32 %v3424, 0.2
          %v3489 = vmul.f32 %v3425, 0.2
          %v3490 = vmul.f32 %v3426, 0.2
          %v3491 = vmul.f32 %v3427, 0.2
          %v3492 = vmul.f32 %v3428, 0.2
          %v3493 = vmul.f32 %v3429, 0.2
          %v3494 = vmul.f32 %v3430, 0.2
          %v3495 = vmul.f32 %v3431, 0.2
          %v3496 = vmul.f32 %v3432, 0.2
          %v3497 = vmul.f32 %v3433, 0.2
          %v3498 = vmul.f32 %v3434, 0.2
          %v3499 = vmul.f32 %v3435, 0.2
          %v3500 = vmul.f32 %v3436, 0.2
          %v3501 = vmul.f32 %v3437, 0.2
          %v3502 = vmul.f32 %v3438, 0.2
          %v3503 = vmul.f32 %v3439, 0.2
          %v3504 = vmul.f32 %v3440, 0.2
          %v3505 = vmul.f32 %v3441, 0.2
          %v3506 = vmul.f32 %v3442, 0.2
          %v3507 = vmul.f32 %v3443, 0.2
          %v3508 = vmul.f32 %v3444, 0.2
          %v3509 = vmul.f32 %v3445, 0.2
          %v3510 = vmul.f32 %v3446, 0.2
          %v3511 = vmul.f32 %v3447, 0.2
          %v3512 = vmul.f32 %v3448, 0.2
          %v3513 = vmul.f32 %v3449, 0.2
          %v3514 = vmul.f32 %v3450, 0.2
          %v3515 = vmul.f32 %v3451, 0.2
          %v3516 = vmul.f32 %v3452, 0.2
          %v3517 = vmul.f32 %v3453, 0.2
          %v3518 = vmul.f32 %v3454, 0.2
          %v3519 = vmul.f32 %v3455, 0.2
          %v3520 = vmul.f32 %v3456, 0.2
          %v3521 = vmul.f32 %v3457, 0.2
          %v3522 = vmul.f32 %v3458, 0.2
          %v3523 = vmul.f32 %v3459, 0.2
          %v3524 = vmul.f32 %v3460, 0.2
          %v3525 = vmul.f32 %v3461, 0.2
          %v3526 = vmul.f32 %v3462, 0.2
          %v3527 = vmul.f32 %v3463, 0.2
          %v3528 = vmul.f32 %v3464, 0.2
          %v3529 = vmul.f32 %v3465, 0.2
          %v3530 = vmul.f32 %v3466, 0.2
          %v3531 = vmul.f32 %v3467, 0.2
          %v3532 = vmul.f32 %v3468, 0.2
          %v3533 = vmul.f32 %v3469, 0.2
          %v3534 = vmul.f32 %v3470, 0.2
          %v3535 = vmul.f32 %v3471, 0.2
          %v3536 = vmul.f32 %v3472, 0.2
          %v3537 = vmul.f32 %v3473, 0.2
          %v3538 = vmul.f32 %v3474, 0.2
          %v3539 = vmul.f32 %v3475, 0.2
          %v3540 = vmul.f32 %v3476, 0.2
          %v3541 = vmul.f32 %v3477, 0.2
          %v3542 = vmul.f32 %v3478, 0.2
          %v3543 = vmul.f32 %v3479, 0.2
          %v3544 = vmul.f32 %v3480, 0.2
          %v3545 = vmax.f32 %v3417, %v3481
          %v3546 = vmax.f32 %v3418, %v3482
          %v3547 = vmax.f32 %v3419, %v3483
          %v3548 = vmax.f32 %v3420, %v3484
          %v3549 = vmax.f32 %v3421, %v3485
          %v3550 = vmax.f32 %v3422, %v3486
          %v3551 = vmax.f32 %v3423, %v3487
          %v3552 = vmax.f32 %v3424, %v3488
          %v3553 = vmax.f32 %v3425, %v3489
          %v3554 = vmax.f32 %v3426, %v3490
          %v3555 = vmax.f32 %v3427, %v3491
          %v3556 = vmax.f32 %v3428, %v3492
          %v3557 = vmax.f32 %v3429, %v3493
          %v3558 = vmax.f32 %v3430, %v3494
          %v3559 = vmax.f32 %v3431, %v3495
          %v3560 = vmax.f32 %v3432, %v3496
          %v3561 = vmax.f32 %v3433, %v3497
          %v3562 = vmax.f32 %v3434, %v3498
          %v3563 = vmax.f32 %v3435, %v3499
          %v3564 = vmax.f32 %v3436, %v3500
          %v3565 = vmax.f32 %v3437, %v3501
          %v3566 = vmax.f32 %v3438, %v3502
          %v3567 = vmax.f32 %v3439, %v3503
          %v3568 = vmax.f32 %v3440, %v3504
          %v3569 = vmax.f32 %v3441, %v3505
          %v3570 = vmax.f32 %v3442, %v3506
          %v3571 = vmax.f32 %v3443, %v3507
          %v3572 = vmax.f32 %v3444, %v3508
          %v3573 = vmax.f32 %v3445, %v3509
          %v3574 = vmax.f32 %v3446, %v3510
          %v3575 = vmax.f32 %v3447, %v3511
          %v3576 = vmax.f32 %v3448, %v3512
          %v3577 = vmax.f32 %v3449, %v3513
          %v3578 = vmax.f32 %v3450, %v3514
          %v3579 = vmax.f32 %v3451, %v3515
          %v3580 = vmax.f32 %v3452, %v3516
          %v3581 = vmax.f32 %v3453, %v3517
          %v3582 = vmax.f32 %v3454, %v3518
          %v3583 = vmax.f32 %v3455, %v3519
          %v3584 = vmax.f32 %v3456, %v3520
          %v3585 = vmax.f32 %v3457, %v3521
          %v3586 = vmax.f32 %v3458, %v3522
          %v3587 = vmax.f32 %v3459, %v3523
          %v3588 = vmax.f32 %v3460, %v3524
          %v3589 = vmax.f32 %v3461, %v3525
          %v3590 = vmax.f32 %v3462, %v3526
          %v3591 = vmax.f32 %v3463, %v3527
          %v3592 = vmax.f32 %v3464, %v3528
          %v3593 = vmax.f32 %v3465, %v3529
          %v3594 = vmax.f32 %v3466, %v3530
          %v3595 = vmax.f32 %v3467, %v3531
          %v3596 = vmax.f32 %v3468, %v3532
          %v3597 = vmax.f32 %v3469, %v3533
          %v3598 = vmax.f32 %v3470, %v3534
          %v3599 = vmax.f32 %v3471, %v3535
          %v3600 = vmax.f32 %v3472, %v3536
          %v3601 = vmax.f32 %v3473, %v3537
          %v3602 = vmax.f32 %v3474, %v3538
          %v3603 = vmax.f32 %v3475, %v3539
          %v3604 = vmax.f32 %v3476, %v3540
          %v3605 = vmax.f32 %v3477, %v3541
          %v3606 = vmax.f32 %v3478, %v3542
          %v3607 = vmax.f32 %v3479, %v3543
          %v3608 = vmax.f32 %v3480, %v3544
          %v3609 = vpack.c.bf16 %v3549, %v3545
          %v3610 = vpack.c.bf16 %v3550, %v3546
          %v3611 = vpack.c.bf16 %v3551, %v3547
          %v3612 = vpack.c.bf16 %v3552, %v3548
          %v3613 = vpack.c.bf16 %v3557, %v3553
          %v3614 = vpack.c.bf16 %v3558, %v3554
          %v3615 = vpack.c.bf16 %v3559, %v3555
          %v3616 = vpack.c.bf16 %v3560, %v3556
          %v3617 = vpack.c.bf16 %v3565, %v3561
          %v3618 = vpack.c.bf16 %v3566, %v3562
          %v3619 = vpack.c.bf16 %v3567, %v3563
          %v3620 = vpack.c.bf16 %v3568, %v3564
          %v3621 = vpack.c.bf16 %v3573, %v3569
          %v3622 = vpack.c.bf16 %v3574, %v3570
          %v3623 = vpack.c.bf16 %v3575, %v3571
          %v3624 = vpack.c.bf16 %v3576, %v3572
          %v3625 = vpack.c.bf16 %v3581, %v3577
          %v3626 = vpack.c.bf16 %v3582, %v3578
          %v3627 = vpack.c.bf16 %v3583, %v3579
          %v3628 = vpack.c.bf16 %v3584, %v3580
          %v3629 = vpack.c.bf16 %v3589, %v3585
          %v3630 = vpack.c.bf16 %v3590, %v3586
          %v3631 = vpack.c.bf16 %v3591, %v3587
          %v3632 = vpack.c.bf16 %v3592, %v3588
          %v3633 = vpack.c.bf16 %v3597, %v3593
          %v3634 = vpack.c.bf16 %v3598, %v3594
          %v3635 = vpack.c.bf16 %v3599, %v3595
          %v3636 = vpack.c.bf16 %v3600, %v3596
          %v3637 = vpack.c.bf16 %v3605, %v3601
          %v3638 = vpack.c.bf16 %v3606, %v3602
          %v3639 = vpack.c.bf16 %v3607, %v3603
          %v3640 = vpack.c.bf16 %v3608, %v3604
          %v3641 = vld [vmem:[#allocation7] sm:$0xf]
          %v3642 = vld [vmem:[#allocation7 + $0x4] sm:$0xf]
          %v3643 = vld [vmem:[#allocation7 + $0x8] sm:$0xf]
          %v3644 = vld [vmem:[#allocation7 + $0xc] sm:$0xf]
          %v3645 = vld [vmem:[#allocation7 + $0x10] sm:$0xf]
          %v3646 = vld [vmem:[#allocation7 + $0x14] sm:$0xf]
          %v3647 = vld [vmem:[#allocation7 + $0x18] sm:$0xf]
          %v3648 = vld [vmem:[#allocation7 + $0x1c] sm:$0xf]
          %v3649 = vld [vmem:[#allocation7 + $0x20] sm:$0xf]
          %v3650 = vld [vmem:[#allocation7 + $0x24] sm:$0xf]
          %v3651 = vld [vmem:[#allocation7 + $0x28] sm:$0xf]
          %v3652 = vld [vmem:[#allocation7 + $0x2c] sm:$0xf]
          %v3653 = vld [vmem:[#allocation7 + $0x30] sm:$0xf]
          %v3654 = vld [vmem:[#allocation7 + $0x34] sm:$0xf]
          %v3655 = vld [vmem:[#allocation7 + $0x38] sm:$0xf]
          %v3656 = vld [vmem:[#allocation7 + $0x3c] sm:$0xf]
          %v3657 = vld [vmem:[#allocation7 + $0x40] sm:$0xf]
          %v3658 = vld [vmem:[#allocation7 + $0x44] sm:$0xf]
          %v3659 = vld [vmem:[#allocation7 + $0x48] sm:$0xf]
          %v3660 = vld [vmem:[#allocation7 + $0x4c] sm:$0xf]
          %v3661 = vld [vmem:[#allocation7 + $0x50] sm:$0xf]
          %v3662 = vld [vmem:[#allocation7 + $0x54] sm:$0xf]
          %v3663 = vld [vmem:[#allocation7 + $0x58] sm:$0xf]
          %v3664 = vld [vmem:[#allocation7 + $0x5c] sm:$0xf]
          %v3665 = vld [vmem:[#allocation7 + $0x60] sm:$0xf]
          %v3666 = vld [vmem:[#allocation7 + $0x64] sm:$0xf]
          %v3667 = vld [vmem:[#allocation7 + $0x68] sm:$0xf]
          %v3668 = vld [vmem:[#allocation7 + $0x6c] sm:$0xf]
          %v3669 = vld [vmem:[#allocation7 + $0x70] sm:$0xf]
          %v3670 = vld [vmem:[#allocation7 + $0x74] sm:$0xf]
          %v3671 = vld [vmem:[#allocation7 + $0x78] sm:$0xf]
          %v3672 = vld [vmem:[#allocation7 + $0x7c] sm:$0xf]
          %v3673 = vld [vmem:[#allocation7 + $0x80] sm:$0xf]
          %v3674 = vld [vmem:[#allocation7 + $0x84] sm:$0xf]
          %v3675 = vld [vmem:[#allocation7 + $0x88] sm:$0xf]
          %v3676 = vld [vmem:[#allocation7 + $0x8c] sm:$0xf]
          %v3677 = vld [vmem:[#allocation7 + $0x90] sm:$0xf]
          %v3678 = vld [vmem:[#allocation7 + $0x94] sm:$0xf]
          %v3679 = vld [vmem:[#allocation7 + $0x98] sm:$0xf]
          %v3680 = vld [vmem:[#allocation7 + $0x9c] sm:$0xf]
          %v3681 = vld [vmem:[#allocation7 + $0xa0] sm:$0xf]
          %v3682 = vld [vmem:[#allocation7 + $0xa4] sm:$0xf]
          %v3683 = vld [vmem:[#allocation7 + $0xa8] sm:$0xf]
          %v3684 = vld [vmem:[#allocation7 + $0xac] sm:$0xf]
          %v3685 = vld [vmem:[#allocation7 + $0xb0] sm:$0xf]
          %v3686 = vld [vmem:[#allocation7 + $0xb4] sm:$0xf]
          %v3687 = vld [vmem:[#allocation7 + $0xb8] sm:$0xf]
          %v3688 = vld [vmem:[#allocation7 + $0xbc] sm:$0xf]
          %v3689 = vld [vmem:[#allocation7 + $0xc0] sm:$0xf]
          %v3690 = vld [vmem:[#allocation7 + $0xc4] sm:$0xf]
          %v3691 = vld [vmem:[#allocation7 + $0xc8] sm:$0xf]
          %v3692 = vld [vmem:[#allocation7 + $0xcc] sm:$0xf]
          %v3693 = vld [vmem:[#allocation7 + $0xd0] sm:$0xf]
          %v3694 = vld [vmem:[#allocation7 + $0xd4] sm:$0xf]
          %v3695 = vld [vmem:[#allocation7 + $0xd8] sm:$0xf]
          %v3696 = vld [vmem:[#allocation7 + $0xdc] sm:$0xf]
          %v3697 = vld [vmem:[#allocation7 + $0xe0] sm:$0xf]
          %v3698 = vld [vmem:[#allocation7 + $0xe4] sm:$0xf]
          %v3699 = vld [vmem:[#allocation7 + $0xe8] sm:$0xf]
          %v3700 = vld [vmem:[#allocation7 + $0xec] sm:$0xf]
          %v3701 = vld [vmem:[#allocation7 + $0xf0] sm:$0xf]
          %v3702 = vld [vmem:[#allocation7 + $0xf4] sm:$0xf]
          %v3703 = vld [vmem:[#allocation7 + $0xf8] sm:$0xf]
          %v3704 = vld [vmem:[#allocation7 + $0xfc] sm:$0xf]
          %v3705 = vld [vmem:[%s8] sm:$0x1]
          %v3707 = vlaneseq
          %v3708 = vshrl.u32 %v3707, 7
          %v3709 = vsub.s32 0, %v3708
          %v3710 = vrot.slane %v3705, %v3709
          %v3776 = vunpack.c.l.b16 %v3641
          %v3777 = vunpack.c.l.b16 %v3642
          %v3778 = vunpack.c.l.b16 %v3643
          %v3779 = vunpack.c.l.b16 %v3644
          %v3780 = vunpack.c.l.b16 %v3645
          %v3781 = vunpack.c.l.b16 %v3646
          %v3782 = vunpack.c.l.b16 %v3647
          %v3783 = vunpack.c.l.b16 %v3648
          %v3784 = vunpack.c.l.b16 %v3649
          %v3785 = vunpack.c.l.b16 %v3650
          %v3786 = vunpack.c.l.b16 %v3651
          %v3787 = vunpack.c.l.b16 %v3652
          %v3788 = vunpack.c.l.b16 %v3653
          %v3789 = vunpack.c.l.b16 %v3654
          %v3790 = vunpack.c.l.b16 %v3655
          %v3791 = vunpack.c.l.b16 %v3656
          %v3792 = vunpack.c.l.b16 %v3657
          %v3793 = vunpack.c.l.b16 %v3658
          %v3794 = vunpack.c.l.b16 %v3659
          %v3795 = vunpack.c.l.b16 %v3660
          %v3796 = vunpack.c.l.b16 %v3661
          %v3797 = vunpack.c.l.b16 %v3662
          %v3798 = vunpack.c.l.b16 %v3663
          %v3799 = vunpack.c.l.b16 %v3664
          %v3800 = vunpack.c.l.b16 %v3665
          %v3801 = vunpack.c.l.b16 %v3666
          %v3802 = vunpack.c.l.b16 %v3667
          %v3803 = vunpack.c.l.b16 %v3668
          %v3804 = vunpack.c.l.b16 %v3669
          %v3805 = vunpack.c.l.b16 %v3670
          %v3806 = vunpack.c.l.b16 %v3671
          %v3807 = vunpack.c.l.b16 %v3672
          %v3808 = vunpack.c.l.b16 %v3673
          %v3809 = vunpack.c.l.b16 %v3674
          %v3810 = vunpack.c.l.b16 %v3675
          %v3811 = vunpack.c.l.b16 %v3676
          %v3812 = vunpack.c.l.b16 %v3677
          %v3813 = vunpack.c.l.b16 %v3678
          %v3814 = vunpack.c.l.b16 %v3679
          %v3815 = vunpack.c.l.b16 %v3680
          %v3816 = vunpack.c.l.b16 %v3681
          %v3817 = vunpack.c.l.b16 %v3682
          %v3818 = vunpack.c.l.b16 %v3683
          %v3819 = vunpack.c.l.b16 %v3684
          %v3820 = vunpack.c.l.b16 %v3685
          %v3821 = vunpack.c.l.b16 %v3686
          %v3822 = vunpack.c.l.b16 %v3687
          %v3823 = vunpack.c.l.b16 %v3688
          %v3824 = vunpack.c.l.b16 %v3689
          %v3825 = vunpack.c.l.b16 %v3690
          %v3826 = vunpack.c.l.b16 %v3691
          %v3827 = vunpack.c.l.b16 %v3692
          %v3828 = vunpack.c.l.b16 %v3693
          %v3829 = vunpack.c.l.b16 %v3694
          %v3830 = vunpack.c.l.b16 %v3695
          %v3831 = vunpack.c.l.b16 %v3696
          %v3832 = vunpack.c.l.b16 %v3697
          %v3833 = vunpack.c.l.b16 %v3698
          %v3834 = vunpack.c.l.b16 %v3699
          %v3835 = vunpack.c.l.b16 %v3700
          %v3836 = vunpack.c.l.b16 %v3701
          %v3837 = vunpack.c.l.b16 %v3702
          %v3838 = vunpack.c.l.b16 %v3703
          %v3839 = vunpack.c.l.b16 %v3704
          %v3840 = vpack.c.b16 %v3777, %v3776
          %v3841 = vpack.c.b16 %v3779, %v3778
          %v3842 = vpack.c.b16 %v3781, %v3780
          %v3843 = vpack.c.b16 %v3783, %v3782
          %v3844 = vpack.c.b16 %v3785, %v3784
          %v3845 = vpack.c.b16 %v3787, %v3786
          %v3846 = vpack.c.b16 %v3789, %v3788
          %v3847 = vpack.c.b16 %v3791, %v3790
          %v3848 = vpack.c.b16 %v3793, %v3792
          %v3849 = vpack.c.b16 %v3795, %v3794
          %v3850 = vpack.c.b16 %v3797, %v3796
          %v3851 = vpack.c.b16 %v3799, %v3798
          %v3852 = vpack.c.b16 %v3801, %v3800
          %v3853 = vpack.c.b16 %v3803, %v3802
          %v3854 = vpack.c.b16 %v3805, %v3804
          %v3855 = vpack.c.b16 %v3807, %v3806
          %v3856 = vpack.c.b16 %v3809, %v3808
          %v3857 = vpack.c.b16 %v3811, %v3810
          %v3858 = vpack.c.b16 %v3813, %v3812
          %v3859 = vpack.c.b16 %v3815, %v3814
          %v3860 = vpack.c.b16 %v3817, %v3816
          %v3861 = vpack.c.b16 %v3819, %v3818
          %v3862 = vpack.c.b16 %v3821, %v3820
          %v3863 = vpack.c.b16 %v3823, %v3822
          %v3864 = vpack.c.b16 %v3825, %v3824
          %v3865 = vpack.c.b16 %v3827, %v3826
          %v3866 = vpack.c.b16 %v3829, %v3828
          %v3867 = vpack.c.b16 %v3831, %v3830
          %v3868 = vpack.c.b16 %v3833, %v3832
          %v3869 = vpack.c.b16 %v3835, %v3834
          %v3870 = vpack.c.b16 %v3837, %v3836
          %v3871 = vpack.c.b16 %v3839, %v3838
          %3904 = vmatprep.subr.bf16.mxu0 0
          %3905 = vmatpush1.bf16.msra.mxu0 %v3840
          %3906 = vmatprep.subr.bf16.mxu0 0
          %3907 = vmatpush1.bf16.msra.mxu0 %v3841
          %3908 = vmatprep.subr.bf16.mxu0 0
          %3909 = vmatpush1.bf16.msra.mxu0 %v3842
          %3910 = vmatprep.subr.bf16.mxu0 0
          %3911 = vmatpush1.bf16.msra.mxu0 %v3843
          %3912 = vmatprep.subr.bf16.mxu0 0
          %3913 = vmatpush1.bf16.msra.mxu0 %v3844
          %3914 = vmatprep.subr.bf16.mxu0 0
          %3915 = vmatpush1.bf16.msra.mxu0 %v3845
          %3916 = vmatprep.subr.bf16.mxu0 0
          %3917 = vmatpush1.bf16.msra.mxu0 %v3846
          %3918 = vmatprep.subr.bf16.mxu0 0
          %3919 = vmatpush1.bf16.msra.mxu0 %v3847
          %3920 = vmatprep.subr.bf16.mxu0 0
          %3921 = vmatpush1.bf16.msra.mxu0 %v3848
          %3922 = vmatprep.subr.bf16.mxu0 0
          %3923 = vmatpush1.bf16.msra.mxu0 %v3849
          %3924 = vmatprep.subr.bf16.mxu0 0
          %3925 = vmatpush1.bf16.msra.mxu0 %v3850
          %3926 = vmatprep.subr.bf16.mxu0 0
          %3927 = vmatpush1.bf16.msra.mxu0 %v3851
          %3928 = vmatprep.subr.bf16.mxu0 0
          %3929 = vmatpush1.bf16.msra.mxu0 %v3852
          %3930 = vmatprep.subr.bf16.mxu0 0
          %3931 = vmatpush1.bf16.msra.mxu0 %v3853
          %3932 = vmatprep.subr.bf16.mxu0 0
          %3933 = vmatpush1.bf16.msra.mxu0 %v3854
          %3934 = vmatprep.subr.bf16.mxu0 0
          %3935 = vmatpush1.bf16.msra.mxu0 %v3855
          %3936 = vmatprep.mubr.bf16.mxu0 %v3610
          %3937 = vmatmul.mubr.bf16.gmra.mrb[0].mxu0 %v3609
          %v3938 = vpop.f32.mrb[0].mxu0
          %v3939 = vadd.f32 %v3710, %v3938
          %v3940 = vpop.f32.mrb[0].mxu0
          %v3941 = vpop.f32.mrb[0].mxu0
          %v3942 = vadd.f32 %v3710, %v3941
          %v3943 = vpop.f32.mrb[0].mxu0
          %3944 = vmatprep.mubr.bf16.mxu0 %v3614
          %3945 = vmatmul.mubr.bf16.gmra.mrb[0].mxu0 %v3613
          %v3946 = vpop.f32.mrb[0].mxu0
          %v3947 = vadd.f32 %v3710, %v3946
          %v3948 = vpop.f32.mrb[0].mxu0
          %v3949 = vpop.f32.mrb[0].mxu0
          %v3950 = vadd.f32 %v3710, %v3949
          %v3951 = vpop.f32.mrb[0].mxu0
          %3952 = vmatprep.mubr.bf16.mxu0 %v3618
          %3953 = vmatmul.mubr.bf16.gmra.mrb[0].mxu0 %v3617
          %v3954 = vpop.f32.mrb[0].mxu0
          %v3955 = vadd.f32 %v3710, %v3954
          %v3956 = vpop.f32.mrb[0].mxu0
          %v3957 = vpop.f32.mrb[0].mxu0
          %v3958 = vadd.f32 %v3710, %v3957
          %v3959 = vpop.f32.mrb[0].mxu0
          %3960 = vmatprep.mubr.bf16.mxu0 %v3622
          %3961 = vmatmul.mubr.bf16.gmra.mrb[0].mxu0 %v3621
          %v3962 = vpop.f32.mrb[0].mxu0
          %v3963 = vadd.f32 %v3710, %v3962
          %v3964 = vpop.f32.mrb[0].mxu0
          %v3965 = vpop.f32.mrb[0].mxu0
          %v3966 = vadd.f32 %v3710, %v3965
          %v3967 = vpop.f32.mrb[0].mxu0
          %3968 = vmatprep.mubr.bf16.mxu0 %v3626
          %3969 = vmatmul.mubr.bf16.gmra.mrb[0].mxu0 %v3625
          %v3970 = vpop.f32.mrb[0].mxu0
          %v3971 = vadd.f32 %v3710, %v3970
          %v3972 = vpop.f32.mrb[0].mxu0
          %v3973 = vpop.f32.mrb[0].mxu0
          %v3974 = vadd.f32 %v3710, %v3973
          %v3975 = vpop.f32.mrb[0].mxu0
          %3976 = vmatprep.mubr.bf16.mxu0 %v3630
          %3977 = vmatmul.mubr.bf16.gmra.mrb[0].mxu0 %v3629
          %v3978 = vpop.f32.mrb[0].mxu0
          %v3979 = vadd.f32 %v3710, %v3978
          %v3980 = vpop.f32.mrb[0].mxu0
          %v3981 = vpop.f32.mrb[0].mxu0
          %v3982 = vadd.f32 %v3710, %v3981
          %v3983 = vpop.f32.mrb[0].mxu0
          %3984 = vmatprep.mubr.bf16.mxu0 %v3634
          %3985 = vmatmul.mubr.bf16.gmra.mrb[0].mxu0 %v3633
          %v3986 = vpop.f32.mrb[0].mxu0
          %v3987 = vadd.f32 %v3710, %v3986
          %v3988 = vpop.f32.mrb[0].mxu0
          %v3989 = vpop.f32.mrb[0].mxu0
          %v3990 = vadd.f32 %v3710, %v3989
          %v3991 = vpop.f32.mrb[0].mxu0
          %3992 = vmatprep.mubr.bf16.mxu0 %v3638
          %3993 = vmatmul.mubr.bf16.gmra.mrb[0].mxu0 %v3637
          %v3994 = vpop.f32.mrb[0].mxu0
          %v3995 = vadd.f32 %v3710, %v3994
          %v3996 = vpop.f32.mrb[0].mxu0
          %v3997 = vpop.f32.mrb[0].mxu0
          %v3998 = vadd.f32 %v3710, %v3997
          %v3999 = vpop.f32.mrb[0].mxu0
          %4000 = vdwg.mxu0
          %4001 = vmatprep.subr.bf16.mxu0 0
          %4002 = vmatpush1.bf16.msra.mxu0 %v3856
          %4003 = vmatprep.subr.bf16.mxu0 0
          %4004 = vmatpush1.bf16.msra.mxu0 %v3857
          %4005 = vmatprep.subr.bf16.mxu0 0
          %4006 = vmatpush1.bf16.msra.mxu0 %v3858
          %4007 = vmatprep.subr.bf16.mxu0 0
          %4008 = vmatpush1.bf16.msra.mxu0 %v3859
          %4009 = vmatprep.subr.bf16.mxu0 0
          %4010 = vmatpush1.bf16.msra.mxu0 %v3860
          %4011 = vmatprep.subr.bf16.mxu0 0
          %4012 = vmatpush1.bf16.msra.mxu0 %v3861
          %4013 = vmatprep.subr.bf16.mxu0 0
          %4014 = vmatpush1.bf16.msra.mxu0 %v3862
          %4015 = vmatprep.subr.bf16.mxu0 0
          %4016 = vmatpush1.bf16.msra.mxu0 %v3863
          %4017 = vmatprep.subr.bf16.mxu0 0
          %4018 = vmatpush1.bf16.msra.mxu0 %v3864
          %4019 = vmatprep.subr.bf16.mxu0 0
          %4020 = vmatpush1.bf16.msra.mxu0 %v3865
          %4021 = vmatprep.subr.bf16.mxu0 0
          %4022 = vmatpush1.bf16.msra.mxu0 %v3866
          %4023 = vmatprep.subr.bf16.mxu0 0
          %4024 = vmatpush1.bf16.msra.mxu0 %v3867
          %4025 = vmatprep.subr.bf16.mxu0 0
          %4026 = vmatpush1.bf16.msra.mxu0 %v3868
          %4027 = vmatprep.subr.bf16.mxu0 0
          %4028 = vmatpush1.bf16.msra.mxu0 %v3869
          %4029 = vmatprep.subr.bf16.mxu0 0
          %4030 = vmatpush1.bf16.msra.mxu0 %v3870
          %4031 = vmatprep.subr.bf16.mxu0 0
          %4032 = vmatpush1.bf16.msra.mxu0 %v3871
          %4033 = vmatprep.mubr.bf16.mxu0 %v3612
          %4034 = vmatmul.mubr.bf16.gmra.mrb[0].mxu0 %v3611
          %v4035 = vpop.f32.mrb[0].mxu0
          %v4036 = vadd.f32 %v3939, %v4035
          %v4037 = vpop.f32.mrb[0].mxu0
          %v4038 = vpop.f32.mrb[0].mxu0
          %v4039 = vadd.f32 %v3942, %v4038
          %v4040 = vpop.f32.mrb[0].mxu0
          %4041 = vmatprep.mubr.bf16.mxu0 %v3616
          %4042 = vmatmul.mubr.bf16.gmra.mrb[0].mxu0 %v3615
          %v4043 = vpop.f32.mrb[0].mxu0
          %v4044 = vadd.f32 %v3947, %v4043
          %v4045 = vpop.f32.mrb[0].mxu0
          %v4046 = vpop.f32.mrb[0].mxu0
          %v4047 = vadd.f32 %v3950, %v4046
          %v4048 = vpop.f32.mrb[0].mxu0
          %4049 = vmatprep.mubr.bf16.mxu0 %v3620
          %4050 = vmatmul.mubr.bf16.gmra.mrb[0].mxu0 %v3619
          %v4051 = vpop.f32.mrb[0].mxu0
          %v4052 = vadd.f32 %v3955, %v4051
          %v4053 = vpop.f32.mrb[0].mxu0
          %v4054 = vpop.f32.mrb[0].mxu0
          %v4055 = vadd.f32 %v3958, %v4054
          %v4056 = vpop.f32.mrb[0].mxu0
          %4057 = vmatprep.mubr.bf16.mxu0 %v3624
          %4058 = vmatmul.mubr.bf16.gmra.mrb[0].mxu0 %v3623
          %v4059 = vpop.f32.mrb[0].mxu0
          %v4060 = vadd.f32 %v3963, %v4059
          %v4061 = vpop.f32.mrb[0].mxu0
          %v4062 = vpop.f32.mrb[0].mxu0
          %v4063 = vadd.f32 %v3966, %v4062
          %v4064 = vpop.f32.mrb[0].mxu0
          %4065 = vmatprep.mubr.bf16.mxu0 %v3628
          %4066 = vmatmul.mubr.bf16.gmra.mrb[0].mxu0 %v3627
          %v4067 = vpop.f32.mrb[0].mxu0
          %v4068 = vadd.f32 %v3971, %v4067
          %v4069 = vpop.f32.mrb[0].mxu0
          %v4070 = vpop.f32.mrb[0].mxu0
          %v4071 = vadd.f32 %v3974, %v4070
          %v4072 = vpop.f32.mrb[0].mxu0
          %4073 = vmatprep.mubr.bf16.mxu0 %v3632
          %4074 = vmatmul.mubr.bf16.gmra.mrb[0].mxu0 %v3631
          %v4075 = vpop.f32.mrb[0].mxu0
          %v4076 = vadd.f32 %v3979, %v4075
          %v4077 = vpop.f32.mrb[0].mxu0
          %v4078 = vpop.f32.mrb[0].mxu0
          %v4079 = vadd.f32 %v3982, %v4078
          %v4080 = vpop.f32.mrb[0].mxu0
          %4081 = vmatprep.mubr.bf16.mxu0 %v3636
          %4082 = vmatmul.mubr.bf16.gmra.mrb[0].mxu0 %v3635
          %v4083 = vpop.f32.mrb[0].mxu0
          %v4084 = vadd.f32 %v3987, %v4083
          %v4085 = vpop.f32.mrb[0].mxu0
          %v4086 = vpop.f32.mrb[0].mxu0
          %v4087 = vadd.f32 %v3990, %v4086
          %v4088 = vpop.f32.mrb[0].mxu0
          %4089 = vmatprep.mubr.bf16.mxu0 %v3640
          %4090 = vmatmul.mubr.bf16.gmra.mrb[0].mxu0 %v3639
          %v4091 = vpop.f32.mrb[0].mxu0
          %v4092 = vadd.f32 %v3995, %v4091
          %v4093 = vpop.f32.mrb[0].mxu0
          %v4094 = vpop.f32.mrb[0].mxu0
          %v4095 = vadd.f32 %v3998, %v4094
          %v4096 = vpop.f32.mrb[0].mxu0
          %4097 = vdwg.mxu0
          %v4098 = vlaneseq
          %v4099 = vand.u32 %v4098, 127
          %vm4100 = vcmp.ge.s32.totalorder %v4099, 16
          %vm4101 = vcmp.lt.s32.totalorder %v4099, 32
          %vm4102 = vmand %vm4100, %vm4101
          %v4103 = vmul.f32 %v4036, 1.442695
          %v4104 = vpow.pop %v4103
          %v4105 = vmul.f32 %v4039, 1.442695
          %v4106 = vpow.pop %v4105
          %v4107 = vmul.f32 %v4044, 1.442695
          %v4108 = vpow.pop %v4107
          %v4109 = vmul.f32 %v4047, 1.442695
          %v4110 = vpow.pop %v4109
          %v4111 = vmul.f32 %v4052, 1.442695
          %v4112 = vpow.pop %v4111
          %v4113 = vmul.f32 %v4055, 1.442695
          %v4114 = vpow.pop %v4113
          %v4115 = vmul.f32 %v4060, 1.442695
          %v4116 = vpow.pop %v4115
          %v4117 = vmul.f32 %v4063, 1.442695
          %v4118 = vpow.pop %v4117
          %v4119 = vmul.f32 %v4068, 1.442695
          %v4120 = vpow.pop %v4119
          %v4121 = vmul.f32 %v4071, 1.442695
          %v4122 = vpow.pop %v4121
          %v4123 = vmul.f32 %v4076, 1.442695
          %v4124 = vpow.pop %v4123
          %v4125 = vmul.f32 %v4079, 1.442695
          %v4126 = vpow.pop %v4125
          %v4127 = vmul.f32 %v4084, 1.442695
          %v4128 = vpow.pop %v4127
          %v4129 = vmul.f32 %v4087, 1.442695
          %v4130 = vpow.pop %v4129
          %v4131 = vmul.f32 %v4092, 1.442695
          %v4132 = vpow.pop %v4131
          %v4133 = vmul.f32 %v4095, 1.442695
          %v4134 = vpow.pop %v4133
          %v4135 = vsel %vm4102, %v4104, %v4036
          %v4136 = vsel %vm4102, %v4106, %v4039
          %v4137 = vsel %vm4102, %v4108, %v4044
          %v4138 = vsel %vm4102, %v4110, %v4047
          %v4139 = vsel %vm4102, %v4112, %v4052
          %v4140 = vsel %vm4102, %v4114, %v4055
          %v4141 = vsel %vm4102, %v4116, %v4060
          %v4142 = vsel %vm4102, %v4118, %v4063
          %v4143 = vsel %vm4102, %v4120, %v4068
          %v4144 = vsel %vm4102, %v4122, %v4071
          %v4145 = vsel %vm4102, %v4124, %v4076
          %v4146 = vsel %vm4102, %v4126, %v4079
          %v4147 = vsel %vm4102, %v4128, %v4084
          %v4148 = vsel %vm4102, %v4130, %v4087
          %v4149 = vsel %vm4102, %v4132, %v4092
          %v4150 = vsel %vm4102, %v4134, %v4095
          %4151 = vst [vmem:[#allocation9] sm:$0xff] %v4135
          %4152 = vst [vmem:[#allocation9 + $0x8] sm:$0xff] %v4136
          %4153 = vst [vmem:[#allocation9 + $0x10] sm:$0xff] %v4137
          %4154 = vst [vmem:[#allocation9 + $0x18] sm:$0xff] %v4138
          %4155 = vst [vmem:[#allocation9 + $0x20] sm:$0xff] %v4139
          %4156 = vst [vmem:[#allocation9 + $0x28] sm:$0xff] %v4140
          %4157 = vst [vmem:[#allocation9 + $0x30] sm:$0xff] %v4141
          %4158 = vst [vmem:[#allocation9 + $0x38] sm:$0xff] %v4142
          %4159 = vst [vmem:[#allocation9 + $0x40] sm:$0xff] %v4143
          %4160 = vst [vmem:[#allocation9 + $0x48] sm:$0xff] %v4144
          %4161 = vst [vmem:[#allocation9 + $0x50] sm:$0xff] %v4145
          %4162 = vst [vmem:[#allocation9 + $0x58] sm:$0xff] %v4146
          %4163 = vst [vmem:[#allocation9 + $0x60] sm:$0xff] %v4147
          %4164 = vst [vmem:[#allocation9 + $0x68] sm:$0xff] %v4148
          %4165 = vst [vmem:[#allocation9 + $0x70] sm:$0xff] %v4149
          %4166 = vst [vmem:[#allocation9 + $0x78] sm:$0xff] %v4150
        $region95: #{encoder_forward.1} parent=74 // pred_fallthru
          _
        // Predicated region
        $region96: #{encoder_forward.1} parent=74 // pred_check
          %p4167 = pneg %p235
        $region97: #{encoder_forward.1} parent=74 // pred_check_branch
          %4169 = sbr.rel (%p4167) target = $region99
        $region98: #{encoder_forward.1} parent=74 // pred_region
          %s4171 = ssub.s32 2048, 2048
          %4172 = vsyncadd [#allocation6], %s4171
          %s4173 = sshll.u32 [#allocation9], 4
          %s4174 = int_to_ptr.vmem [resolvable:$true] %s4173
          %4179 = dma.vmem_to_hbm [thread:$0]  %s4174, 2048, %s9, [#allocation6], 128, 128, 8
        $region99: #{encoder_forward.1} parent=74 // pred_fallthru
          _
        // Predicated region
        $region100: #{encoder_forward.1} parent=74 // pred_check
          %p4180 = pneg %p235
        $region101: #{encoder_forward.1} parent=74 // pred_check_branch
          %4182 = sbr.rel (%p4180) target = $region103
        $region102: #{encoder_forward.1} parent=74 // pred_region
          %4183 = dma.done [#allocation6], 2048
        $region103: #{encoder_forward.1} parent=74 // pred_fallthru
          _
      $region75: #{encoder_forward.1} parent=5 // pred_fallthru
        _
      %p4184 = scmp.le.s32.totalorder 2, %s18
      // Predicated region
      $region104: #{encoder_forward.1} parent=5 // pred_check
        %p4185 = pneg %p4184
      $region105: #{encoder_forward.1} parent=5 // pred_check_branch
        %4187 = sbr.rel (%p4185) target = $region107
      $region106: #{encoder_forward.1} parent=5 // pred_region
        %s4188 = ssub.s32 %s18, 2
      $region107: #{encoder_forward.1} parent=5 // pred_fallthru
        _
    $region6: #{encoder_forward.1} parent=1 // loop_footer
      %s22 = sadd.s32 1, %s18
    $region7: #{encoder_forward.1} parent=1 // loop_footer_branch
      %17 = sbr.rel target = $region3
    $region8: #{encoder_forward.1} parent=1 // loop_exit
      _
    %4189 = vsyncpa [#allocation5], 1
    %s4190 = scalar_lea.sflag [#allocation5], 1
    %4191 = vsyncpa %s4190, 1
    %4192 = vsyncpa [#allocation8], 1
    %4193 = vsyncpa [#allocation6], 1
    %s4194 = scalar_lea.sflag [#allocation6], 1
    %4195 = vsyncpa %s4194, 1

</llo_original>
